<compile_context>
chip_gen: v7x
topology: tpu7x:2x2x1
jax: 0.10.0
libtpu: 0.0.40
codegen_flags: <defaults>
</compile_context>

<pallas_src>
from functools import partial

import jax
import jax.numpy as jnp
from jax.experimental import pallas as pl
from jax.experimental.pallas import tpu as pltpu


def _basic_block_kernel(x_ref, ml_ref, mr_ref,
                        w1_ref, s1_ref, b1_ref, w2_ref, s2_ref, b2_ref,
                        out_ref, xpf_ref, midpf_ref,
                        *, cc, nn, img_w, hw, pad):
    """Fused BasicBlockMtl forward for the whole batch.

    x_ref   : (C, N, HW)          VMEM  input planes, flattened spatial on lanes
    ml_ref  : (N, HW)             VMEM  0/1 mask, 0 where column == 0     (dw=-1)
    mr_ref  : (N, HW)             VMEM  0/1 mask, 0 where column == W-1   (dw=+1)
    w*_ref  : (9*C*C,)            SMEM  conv taps, idx = k*C*C + ci*C + co, k=kh*3+kw
    s*/b*   : (C,)                SMEM  folded BN scale / bias
    out_ref : (C, N, HW)          VMEM
    xpf_ref, midpf_ref : (C, N, HW + 2*pad) VMEM scratch (flat-padded planes)
    """
    mask_l = ml_ref[...]
    mask_r = mr_ref[...]

    # Zero the scratch halos once -> implicit zero padding for both convs.
    zeros = jnp.zeros(xpf_ref.shape, jnp.float32)
    xpf_ref[...] = zeros
    midpf_ref[...] = zeros
    xpf_ref[:, :, pad:pad + hw] = x_ref[...]

    def conv3x3(src_ref, w_ref):
        # One independent f32 accumulator per output channel (ILP on the VPU).
        accs = [jnp.zeros((nn, hw), jnp.float32) for _ in range(cc)]
        for dh in (-1, 0, 1):
            for dw in (-1, 0, 1):
                k = (dh + 1) * 3 + (dw + 1)          # PyTorch tap (kh, kw)
                base = pad + dh * img_w + dw          # constant flat lane shift
                for ci in range(cc):
                    v = src_ref[ci, :, base:base + hw]       # (N, HW)
                    if dw == -1:
                        v = v * mask_l        # kill wrap from previous row end
                    elif dw == 1:
                        v = v * mask_r        # kill wrap from next row start
                    for co in range(cc):
                        wt = w_ref[k * cc * cc + ci * cc + co]   # SMEM scalar
                        accs[co] = accs[co] + wt * v
        return accs

    # conv1 -> bn1 -> relu, written into the second padded scratch (interior).
    acc1 = conv3x3(xpf_ref, w1_ref)
    for co in range(cc):
        mid = jnp.maximum(acc1[co] * s1_ref[co] + b1_ref[co], 0.0)
        midpf_ref[co, :, pad:pad + hw] = mid

    # conv2 -> bn2 -> + residual -> relu -> output.
    acc2 = conv3x3(midpf_ref, w2_ref)
    for co in range(cc):
        res = xpf_ref[co, :, pad:pad + hw]
        o = acc2[co] * s2_ref[co] + b2_ref[co] + res
        out_ref[co] = jnp.maximum(o, 0.0)


@jax.jit
def basic_block_mtl_forward(x_nchw, params):
    """BasicBlockMtl.forward (stride=1, downsample=None). Input/output NCHW."""
    w1, s1, b1, w2, s2, b2 = params
    n, c, h, w = x_nchw.shape
    hw = h * w
    pad = ((w + 1 + 127) // 128) * 128     # lane-aligned flat halo >= W+1
    lpad = hw + 2 * pad

    # NCHW -> (C, N, H*W): tiny transpose; flattened spatial on the lane axis.
    x = jnp.transpose(x_nchw, (1, 0, 2, 3)).reshape(c, n, hw).astype(jnp.float32)

    # 0/1 masks cancelling row-wraparound of the flattened +-1 column taps
    # (constants; XLA folds them).
    col = jnp.arange(hw, dtype=jnp.int32) % w
    mask_l = jnp.broadcast_to((col > 0).astype(jnp.float32)[None, :], (n, hw))
    mask_r = jnp.broadcast_to((col < w - 1).astype(jnp.float32)[None, :], (n, hw))

    kernel = partial(_basic_block_kernel, cc=c, nn=n, img_w=w, hw=hw, pad=pad)
    smem = pl.BlockSpec(memory_space=pltpu.MemorySpace.SMEM)

    out = pl.pallas_call(
        kernel,
        out_shape=jax.ShapeDtypeStruct((c, n, hw), jnp.float32),
        grid_spec=pltpu.PrefetchScalarGridSpec(
            num_scalar_prefetch=0,
            grid=(1,),
            in_specs=[
                pl.BlockSpec((c, n, hw), lambda i: (0, 0, 0)),   # x
                pl.BlockSpec((n, hw), lambda i: (0, 0)),         # mask_l
                pl.BlockSpec((n, hw), lambda i: (0, 0)),         # mask_r
                smem, smem, smem,                                # w1, s1, b1
                smem, smem, smem,                                # w2, s2, b2
            ],
            out_specs=pl.BlockSpec((c, n, hw), lambda i: (0, 0, 0)),
            scratch_shapes=[
                pltpu.VMEM((c, n, lpad), jnp.float32),   # padded x planes
                pltpu.VMEM((c, n, lpad), jnp.float32),   # padded mid planes
            ],
        ),
        compiler_params=pltpu.CompilerParams(
            dimension_semantics=("arbitrary",)),
    )(x, mask_l, mask_r,
      w1.reshape(-1), s1.reshape(-1), b1.reshape(-1),
      w2.reshape(-1), s2.reshape(-1), b2.reshape(-1))

    return jnp.transpose(out.reshape(c, n, h, w), (1, 0, 2, 3))


# ----------------------------- parameter setup ------------------------------

def _make_conv_mtl_weight(key, cin, cout):
    """Conv2dMtl: base OIHW weight elementwise-scaled by mtl_weight (Cout,Cin,1,1)."""
    k1, k2 = jax.random.split(key)
    wgt = 0.1 * jax.random.normal(k1, (cout, cin, 3, 3), jnp.float32)
    mtl_w = 1.0 + 0.1 * jax.random.normal(k2, (cout, cin, 1, 1), jnp.float32)
    eff = wgt * mtl_w                                   # (Cout, Cin, 3, 3)
    # OIHW -> (kh, kw, Cin, Cout) -> (9, Cin, Cout), tap index k = kh*3 + kw
    return jnp.transpose(eff, (2, 3, 1, 0)).reshape(9, cin, cout)


def _make_bn_fold(key, c, eps=1e-5):
    k1, k2, k3, k4 = jax.random.split(key, 4)
    gamma = 1.0 + 0.1 * jax.random.normal(k1, (c,), jnp.float32)
    beta = 0.1 * jax.random.normal(k2, (c,), jnp.float32)
    mean = 0.1 * jax.random.normal(k3, (c,), jnp.float32)
    var = jax.random.uniform(k4, (c,), jnp.float32, 0.5, 1.5)
    scale = gamma / jnp.sqrt(var + eps)
    bias = beta - mean * scale
    return scale, bias                                  # (C,), (C,)


# ------------------------------ pure-JAX reference --------------------------

def _conv3x3_ref(x_nhwc, w9):
    cin, cout = w9.shape[1], w9.shape[2]
    wgt = w9.reshape(3, 3, cin, cout)
    return jax.lax.conv_general_dilated(
        x_nhwc, wgt, window_strides=(1, 1), padding="SAME",
        dimension_numbers=("NHWC", "HWIO", "NHWC"))


def basic_block_mtl_reference(x_nchw, params):
    w1, s1, b1, w2, s2, b2 = params
    x = jnp.transpose(x_nchw, (0, 2, 3, 1)).astype(jnp.float32)
    out = _conv3x3_ref(x, w1) * s1 + b1
    out = jnp.maximum(out, 0.0)
    out = _conv3x3_ref(out, w2) * s2 + b2 + x
    out = jnp.maximum(out, 0.0)
    return jnp.transpose(out, (0, 3, 1, 2))


# ----------------------------------- main ------------------------------------

if __name__ == "__main__":
    N, C, H, W = 2, 4, 16, 16   # inplanes == planes, stride=1, downsample=None

    root = jax.random.PRNGKey(0)
    kx, kw1, kw2, kb1, kb2 = jax.random.split(root, 5)

    x = jax.random.normal(kx, (N, C, H, W), jnp.float32)   # NCHW, like PyTorch

    w1 = _make_conv_mtl_weight(kw1, C, C)
    w2 = _make_conv_mtl_weight(kw2, C, C)
    s1, b1 = _make_bn_fold(kb1, C)
    s2, b2 = _make_bn_fold(kb2, C)
    params = (w1, s1, b1, w2, s2, b2)

    out = jax.block_until_ready(basic_block_mtl_forward(x, params))
    ref = jax.block_until_ready(basic_block_mtl_reference(x, params))

    assert out.shape == (N, C, H, W), out.shape
    max_err = float(jnp.max(jnp.abs(out - ref)))
    assert jnp.allclose(out, ref, atol=1e-4, rtol=1e-4), max_err

    print("KERNEL_OK")
</pallas_src>

<mosaic_0001>
module attributes {stable_mosaic.version = 11 : i64} {
  func.func @_basic_block_kernel(%arg0: i32, %arg1: memref<4x2x256xf32, #tpu.memory_space<vmem>>, %arg2: memref<2x256xf32, #tpu.memory_space<vmem>>, %arg3: memref<2x256xf32, #tpu.memory_space<vmem>>, %arg4: memref<144xf32, #tpu.memory_space<smem>>, %arg5: memref<4xf32, #tpu.memory_space<smem>>, %arg6: memref<4xf32, #tpu.memory_space<smem>>, %arg7: memref<144xf32, #tpu.memory_space<smem>>, %arg8: memref<4xf32, #tpu.memory_space<smem>>, %arg9: memref<4xf32, #tpu.memory_space<smem>>, %arg10: memref<4x2x256xf32, #tpu.memory_space<vmem>>, %arg11: memref<4x2x512xf32, #tpu.memory_space<vmem>>, %arg12: memref<4x2x512xf32, #tpu.memory_space<vmem>>) attributes {dimension_semantics = [#tpu.dimension_semantics<arbitrary>], iteration_bounds = array<i64: 1>, scalar_prefetch = 0 : i64, scratch_operands = 2 : i64, tpu.core_type = #tpu.core_type<tc>, window_params = [{pipeline_mode = #tpu.pipeline_mode<synchronous>, transform_indices = @transform_0, window_bounds = array<i64: 4, 2, 256>}, {pipeline_mode = #tpu.pipeline_mode<synchronous>, transform_indices = @transform_1, window_bounds = array<i64: 2, 256>}, {pipeline_mode = #tpu.pipeline_mode<synchronous>, transform_indices = @transform_2, window_bounds = array<i64: 2, 256>}, {transform_indices = @transform_3, window_bounds = array<i64: 144>}, {transform_indices = @transform_4, window_bounds = array<i64: 4>}, {transform_indices = @transform_5, window_bounds = array<i64: 4>}, {transform_indices = @transform_6, window_bounds = array<i64: 144>}, {transform_indices = @transform_7, window_bounds = array<i64: 4>}, {transform_indices = @transform_8, window_bounds = array<i64: 4>}, {pipeline_mode = #tpu.pipeline_mode<synchronous>, transform_indices = @transform_9, window_bounds = array<i64: 4, 2, 256>}]} {
    %c0 = arith.constant 0 : index
    %c0_0 = arith.constant 0 : index
    %0 = vector.load %arg2[%c0, %c0_0] : memref<2x256xf32, #tpu.memory_space<vmem>>, vector<2x256xf32>
    %c0_1 = arith.constant 0 : index
    %c0_2 = arith.constant 0 : index
    %1 = vector.load %arg3[%c0_1, %c0_2] : memref<2x256xf32, #tpu.memory_space<vmem>>, vector<2x256xf32>
    %cst = arith.constant 0.000000e+00 : f32
    %2 = vector.broadcast %cst : f32 to vector<4x2x512xf32>
    %c0_3 = arith.constant 0 : index
    %c0_4 = arith.constant 0 : index
    %c0_5 = arith.constant 0 : index
    %3 = vector.load %arg11[%c0_3, %c0_4, %c0_5] : memref<4x2x512xf32, #tpu.memory_space<vmem>>, vector<4x2x512xf32>
    tpu.vector_store %arg11[%c0_3, %c0_4, %c0_5], %2 {strides = array<i32>} : memref<4x2x512xf32, #tpu.memory_space<vmem>>, vector<4x2x512xf32>,
    %c0_6 = arith.constant 0 : index
    %c0_7 = arith.constant 0 : index
    %c0_8 = arith.constant 0 : index
    %4 = vector.load %arg12[%c0_6, %c0_7, %c0_8] : memref<4x2x512xf32, #tpu.memory_space<vmem>>, vector<4x2x512xf32>
    tpu.vector_store %arg12[%c0_6, %c0_7, %c0_8], %2 {strides = array<i32>} : memref<4x2x512xf32, #tpu.memory_space<vmem>>, vector<4x2x512xf32>,
    %c0_9 = arith.constant 0 : index
    %c0_10 = arith.constant 0 : index
    %c0_11 = arith.constant 0 : index
    %5 = vector.load %arg1[%c0_9, %c0_10, %c0_11] : memref<4x2x256xf32, #tpu.memory_space<vmem>>, vector<4x2x256xf32>
    %c0_12 = arith.constant 0 : index
    %c0_13 = arith.constant 0 : index
    %c128 = arith.constant 128 : index
    %6 = vector.load %arg11[%c0_12, %c0_13, %c128] : memref<4x2x512xf32, #tpu.memory_space<vmem>>, vector<4x2x256xf32>
    tpu.vector_store %arg11[%c0_12, %c0_13, %c128], %5 {strides = array<i32>} : memref<4x2x512xf32, #tpu.memory_space<vmem>>, vector<4x2x256xf32>,
    %cst_14 = arith.constant 0.000000e+00 : f32
    %7 = vector.broadcast %cst_14 : f32 to vector<2x256xf32>
    %cst_15 = arith.constant 0.000000e+00 : f32
    %8 = vector.broadcast %cst_15 : f32 to vector<2x256xf32>
    %cst_16 = arith.constant 0.000000e+00 : f32
    %9 = vector.broadcast %cst_16 : f32 to vector<2x256xf32>
    %cst_17 = arith.constant 0.000000e+00 : f32
    %10 = vector.broadcast %cst_17 : f32 to vector<2x256xf32>
    %c0_18 = arith.constant 0 : index
    %c0_19 = arith.constant 0 : index
    %c111 = arith.constant 111 : index
    %11 = vector.load %arg11[%c0_18, %c0_19, %c111] : memref<4x2x512xf32, #tpu.memory_space<vmem>>, vector<1x2x256xf32>
    %12 = vector.shape_cast %11 : vector<1x2x256xf32> to vector<2x256xf32>
    %13 = arith.mulf %12, %0 : vector<2x256xf32>
    %c0_20 = arith.constant 0 : index
    %14 = memref.load %arg4[%c0_20] : memref<144xf32, #tpu.memory_space<smem>>
    %15 = vector.broadcast %14 : f32 to vector<2x256xf32>
    %16 = arith.mulf %15, %13 : vector<2x256xf32>
    %17 = arith.addf %7, %16 : vector<2x256xf32>
    %c1 = arith.constant 1 : index
    %18 = memref.load %arg4[%c1] : memref<144xf32, #tpu.memory_space<smem>>
    %19 = vector.broadcast %18 : f32 to vector<2x256xf32>
    %20 = arith.mulf %19, %13 : vector<2x256xf32>
    %21 = arith.addf %8, %20 : vector<2x256xf32>
    %c2 = arith.constant 2 : index
    %22 = memref.load %arg4[%c2] : memref<144xf32, #tpu.memory_space<smem>>
    %23 = vector.broadcast %22 : f32 to vector<2x256xf32>
    %24 = arith.mulf %23, %13 : vector<2x256xf32>
    %25 = arith.addf %9, %24 : vector<2x256xf32>
    %c3 = arith.constant 3 : index
    %26 = memref.load %arg4[%c3] : memref<144xf32, #tpu.memory_space<smem>>
    %27 = vector.broadcast %26 : f32 to vector<2x256xf32>
    %28 = arith.mulf %27, %13 : vector<2x256xf32>
    %29 = arith.addf %10, %28 : vector<2x256xf32>
    %c1_21 = arith.constant 1 : index
    %c0_22 = arith.constant 0 : index
    %c111_23 = arith.constant 111 : index
    %30 = vector.load %arg11[%c1_21, %c0_22, %c111_23] : memref<4x2x512xf32, #tpu.memory_space<vmem>>, vector<1x2x256xf32>
    %31 = vector.shape_cast %30 : vector<1x2x256xf32> to vector<2x256xf32>
    %32 = arith.mulf %31, %0 : vector<2x256xf32>
    %c4 = arith.constant 4 : index
    %33 = memref.load %arg4[%c4] : memref<144xf32, #tpu.memory_space<smem>>
    %34 = vector.broadcast %33 : f32 to vector<2x256xf32>
    %35 = arith.mulf %34, %32 : vector<2x256xf32>
    %36 = arith.addf %17, %35 : vector<2x256xf32>
    %c5 = arith.constant 5 : index
    %37 = memref.load %arg4[%c5] : memref<144xf32, #tpu.memory_space<smem>>
    %38 = vector.broadcast %37 : f32 to vector<2x256xf32>
    %39 = arith.mulf %38, %32 : vector<2x256xf32>
    %40 = arith.addf %21, %39 : vector<2x256xf32>
    %c6 = arith.constant 6 : index
    %41 = memref.load %arg4[%c6] : memref<144xf32, #tpu.memory_space<smem>>
    %42 = vector.broadcast %41 : f32 to vector<2x256xf32>
    %43 = arith.mulf %42, %32 : vector<2x256xf32>
    %44 = arith.addf %25, %43 : vector<2x256xf32>
    %c7 = arith.constant 7 : index
    %45 = memref.load %arg4[%c7] : memref<144xf32, #tpu.memory_space<smem>>
    %46 = vector.broadcast %45 : f32 to vector<2x256xf32>
    %47 = arith.mulf %46, %32 : vector<2x256xf32>
    %48 = arith.addf %29, %47 : vector<2x256xf32>
    %c2_24 = arith.constant 2 : index
    %c0_25 = arith.constant 0 : index
    %c111_26 = arith.constant 111 : index
    %49 = vector.load %arg11[%c2_24, %c0_25, %c111_26] : memref<4x2x512xf32, #tpu.memory_space<vmem>>, vector<1x2x256xf32>
    %50 = vector.shape_cast %49 : vector<1x2x256xf32> to vector<2x256xf32>
    %51 = arith.mulf %50, %0 : vector<2x256xf32>
    %c8 = arith.constant 8 : index
    %52 = memref.load %arg4[%c8] : memref<144xf32, #tpu.memory_space<smem>>
    %53 = vector.broadcast %52 : f32 to vector<2x256xf32>
    %54 = arith.mulf %53, %51 : vector<2x256xf32>
    %55 = arith.addf %36, %54 : vector<2x256xf32>
    %c9 = arith.constant 9 : index
    %56 = memref.load %arg4[%c9] : memref<144xf32, #tpu.memory_space<smem>>
    %57 = vector.broadcast %56 : f32 to vector<2x256xf32>
    %58 = arith.mulf %57, %51 : vector<2x256xf32>
    %59 = arith.addf %40, %58 : vector<2x256xf32>
    %c10 = arith.constant 10 : index
    %60 = memref.load %arg4[%c10] : memref<144xf32, #tpu.memory_space<smem>>
    %61 = vector.broadcast %60 : f32 to vector<2x256xf32>
    %62 = arith.mulf %61, %51 : vector<2x256xf32>
    %63 = arith.addf %44, %62 : vector<2x256xf32>
    %c11 = arith.constant 11 : index
    %64 = memref.load %arg4[%c11] : memref<144xf32, #tpu.memory_space<smem>>
    %65 = vector.broadcast %64 : f32 to vector<2x256xf32>
    %66 = arith.mulf %65, %51 : vector<2x256xf32>
    %67 = arith.addf %48, %66 : vector<2x256xf32>
    %c3_27 = arith.constant 3 : index
    %c0_28 = arith.constant 0 : index
    %c111_29 = arith.constant 111 : index
    %68 = vector.load %arg11[%c3_27, %c0_28, %c111_29] : memref<4x2x512xf32, #tpu.memory_space<vmem>>, vector<1x2x256xf32>
    %69 = vector.shape_cast %68 : vector<1x2x256xf32> to vector<2x256xf32>
    %70 = arith.mulf %69, %0 : vector<2x256xf32>
    %c12 = arith.constant 12 : index
    %71 = memref.load %arg4[%c12] : memref<144xf32, #tpu.memory_space<smem>>
    %72 = vector.broadcast %71 : f32 to vector<2x256xf32>
    %73 = arith.mulf %72, %70 : vector<2x256xf32>
    %74 = arith.addf %55, %73 : vector<2x256xf32>
    %c13 = arith.constant 13 : index
    %75 = memref.load %arg4[%c13] : memref<144xf32, #tpu.memory_space<smem>>
    %76 = vector.broadcast %75 : f32 to vector<2x256xf32>
    %77 = arith.mulf %76, %70 : vector<2x256xf32>
    %78 = arith.addf %59, %77 : vector<2x256xf32>
    %c14 = arith.constant 14 : index
    %79 = memref.load %arg4[%c14] : memref<144xf32, #tpu.memory_space<smem>>
    %80 = vector.broadcast %79 : f32 to vector<2x256xf32>
    %81 = arith.mulf %80, %70 : vector<2x256xf32>
    %82 = arith.addf %63, %81 : vector<2x256xf32>
    %c15 = arith.constant 15 : index
    %83 = memref.load %arg4[%c15] : memref<144xf32, #tpu.memory_space<smem>>
    %84 = vector.broadcast %83 : f32 to vector<2x256xf32>
    %85 = arith.mulf %84, %70 : vector<2x256xf32>
    %86 = arith.addf %67, %85 : vector<2x256xf32>
    %c0_30 = arith.constant 0 : index
    %c0_31 = arith.constant 0 : index
    %c112 = arith.constant 112 : index
    %87 = vector.load %arg11[%c0_30, %c0_31, %c112] : memref<4x2x512xf32, #tpu.memory_space<vmem>>, vector<1x2x256xf32>
    %88 = vector.shape_cast %87 : vector<1x2x256xf32> to vector<2x256xf32>
    %c16 = arith.constant 16 : index
    %89 = memref.load %arg4[%c16] : memref<144xf32, #tpu.memory_space<smem>>
    %90 = vector.broadcast %89 : f32 to vector<2x256xf32>
    %91 = arith.mulf %90, %88 : vector<2x256xf32>
    %92 = arith.addf %74, %91 : vector<2x256xf32>
    %c17 = arith.constant 17 : index
    %93 = memref.load %arg4[%c17] : memref<144xf32, #tpu.memory_space<smem>>
    %94 = vector.broadcast %93 : f32 to vector<2x256xf32>
    %95 = arith.mulf %94, %88 : vector<2x256xf32>
    %96 = arith.addf %78, %95 : vector<2x256xf32>
    %c18 = arith.constant 18 : index
    %97 = memref.load %arg4[%c18] : memref<144xf32, #tpu.memory_space<smem>>
    %98 = vector.broadcast %97 : f32 to vector<2x256xf32>
    %99 = arith.mulf %98, %88 : vector<2x256xf32>
    %100 = arith.addf %82, %99 : vector<2x256xf32>
    %c19 = arith.constant 19 : index
    %101 = memref.load %arg4[%c19] : memref<144xf32, #tpu.memory_space<smem>>
    %102 = vector.broadcast %101 : f32 to vector<2x256xf32>
    %103 = arith.mulf %102, %88 : vector<2x256xf32>
    %104 = arith.addf %86, %103 : vector<2x256xf32>
    %c1_32 = arith.constant 1 : index
    %c0_33 = arith.constant 0 : index
    %c112_34 = arith.constant 112 : index
    %105 = vector.load %arg11[%c1_32, %c0_33, %c112_34] : memref<4x2x512xf32, #tpu.memory_space<vmem>>, vector<1x2x256xf32>
    %106 = vector.shape_cast %105 : vector<1x2x256xf32> to vector<2x256xf32>
    %c20 = arith.constant 20 : index
    %107 = memref.load %arg4[%c20] : memref<144xf32, #tpu.memory_space<smem>>
    %108 = vector.broadcast %107 : f32 to vector<2x256xf32>
    %109 = arith.mulf %108, %106 : vector<2x256xf32>
    %110 = arith.addf %92, %109 : vector<2x256xf32>
    %c21 = arith.constant 21 : index
    %111 = memref.load %arg4[%c21] : memref<144xf32, #tpu.memory_space<smem>>
    %112 = vector.broadcast %111 : f32 to vector<2x256xf32>
    %113 = arith.mulf %112, %106 : vector<2x256xf32>
    %114 = arith.addf %96, %113 : vector<2x256xf32>
    %c22 = arith.constant 22 : index
    %115 = memref.load %arg4[%c22] : memref<144xf32, #tpu.memory_space<smem>>
    %116 = vector.broadcast %115 : f32 to vector<2x256xf32>
    %117 = arith.mulf %116, %106 : vector<2x256xf32>
    %118 = arith.addf %100, %117 : vector<2x256xf32>
    %c23 = arith.constant 23 : index
    %119 = memref.load %arg4[%c23] : memref<144xf32, #tpu.memory_space<smem>>
    %120 = vector.broadcast %119 : f32 to vector<2x256xf32>
    %121 = arith.mulf %120, %106 : vector<2x256xf32>
    %122 = arith.addf %104, %121 : vector<2x256xf32>
    %c2_35 = arith.constant 2 : index
    %c0_36 = arith.constant 0 : index
    %c112_37 = arith.constant 112 : index
    %123 = vector.load %arg11[%c2_35, %c0_36, %c112_37] : memref<4x2x512xf32, #tpu.memory_space<vmem>>, vector<1x2x256xf32>
    %124 = vector.shape_cast %123 : vector<1x2x256xf32> to vector<2x256xf32>
    %c24 = arith.constant 24 : index
    %125 = memref.load %arg4[%c24] : memref<144xf32, #tpu.memory_space<smem>>
    %126 = vector.broadcast %125 : f32 to vector<2x256xf32>
    %127 = arith.mulf %126, %124 : vector<2x256xf32>
    %128 = arith.addf %110, %127 : vector<2x256xf32>
    %c25 = arith.constant 25 : index
    %129 = memref.load %arg4[%c25] : memref<144xf32, #tpu.memory_space<smem>>
    %130 = vector.broadcast %129 : f32 to vector<2x256xf32>
    %131 = arith.mulf %130, %124 : vector<2x256xf32>
    %132 = arith.addf %114, %131 : vector<2x256xf32>
    %c26 = arith.constant 26 : index
    %133 = memref.load %arg4[%c26] : memref<144xf32, #tpu.memory_space<smem>>
    %134 = vector.broadcast %133 : f32 to vector<2x256xf32>
    %135 = arith.mulf %134, %124 : vector<2x256xf32>
    %136 = arith.addf %118, %135 : vector<2x256xf32>
    %c27 = arith.constant 27 : index
    %137 = memref.load %arg4[%c27] : memref<144xf32, #tpu.memory_space<smem>>
    %138 = vector.broadcast %137 : f32 to vector<2x256xf32>
    %139 = arith.mulf %138, %124 : vector<2x256xf32>
    %140 = arith.addf %122, %139 : vector<2x256xf32>
    %c3_38 = arith.constant 3 : index
    %c0_39 = arith.constant 0 : index
    %c112_40 = arith.constant 112 : index
    %141 = vector.load %arg11[%c3_38, %c0_39, %c112_40] : memref<4x2x512xf32, #tpu.memory_space<vmem>>, vector<1x2x256xf32>
    %142 = vector.shape_cast %141 : vector<1x2x256xf32> to vector<2x256xf32>
    %c28 = arith.constant 28 : index
    %143 = memref.load %arg4[%c28] : memref<144xf32, #tpu.memory_space<smem>>
    %144 = vector.broadcast %143 : f32 to vector<2x256xf32>
    %145 = arith.mulf %144, %142 : vector<2x256xf32>
    %146 = arith.addf %128, %145 : vector<2x256xf32>
    %c29 = arith.constant 29 : index
    %147 = memref.load %arg4[%c29] : memref<144xf32, #tpu.memory_space<smem>>
    %148 = vector.broadcast %147 : f32 to vector<2x256xf32>
    %149 = arith.mulf %148, %142 : vector<2x256xf32>
    %150 = arith.addf %132, %149 : vector<2x256xf32>
    %c30 = arith.constant 30 : index
    %151 = memref.load %arg4[%c30] : memref<144xf32, #tpu.memory_space<smem>>
    %152 = vector.broadcast %151 : f32 to vector<2x256xf32>
    %153 = arith.mulf %152, %142 : vector<2x256xf32>
    %154 = arith.addf %136, %153 : vector<2x256xf32>
    %c31 = arith.constant 31 : index
    %155 = memref.load %arg4[%c31] : memref<144xf32, #tpu.memory_space<smem>>
    %156 = vector.broadcast %155 : f32 to vector<2x256xf32>
    %157 = arith.mulf %156, %142 : vector<2x256xf32>
    %158 = arith.addf %140, %157 : vector<2x256xf32>
    %c0_41 = arith.constant 0 : index
    %c0_42 = arith.constant 0 : index
    %c113 = arith.constant 113 : index
    %159 = vector.load %arg11[%c0_41, %c0_42, %c113] : memref<4x2x512xf32, #tpu.memory_space<vmem>>, vector<1x2x256xf32>
    %160 = vector.shape_cast %159 : vector<1x2x256xf32> to vector<2x256xf32>
    %161 = arith.mulf %160, %1 : vector<2x256xf32>
    %c32 = arith.constant 32 : index
    %162 = memref.load %arg4[%c32] : memref<144xf32, #tpu.memory_space<smem>>
    %163 = vector.broadcast %162 : f32 to vector<2x256xf32>
    %164 = arith.mulf %163, %161 : vector<2x256xf32>
    %165 = arith.addf %146, %164 : vector<2x256xf32>
    %c33 = arith.constant 33 : index
    %166 = memref.load %arg4[%c33] : memref<144xf32, #tpu.memory_space<smem>>
    %167 = vector.broadcast %166 : f32 to vector<2x256xf32>
    %168 = arith.mulf %167, %161 : vector<2x256xf32>
    %169 = arith.addf %150, %168 : vector<2x256xf32>
    %c34 = arith.constant 34 : index
    %170 = memref.load %arg4[%c34] : memref<144xf32, #tpu.memory_space<smem>>
    %171 = vector.broadcast %170 : f32 to vector<2x256xf32>
    %172 = arith.mulf %171, %161 : vector<2x256xf32>
    %173 = arith.addf %154, %172 : vector<2x256xf32>
    %c35 = arith.constant 35 : index
    %174 = memref.load %arg4[%c35] : memref<144xf32, #tpu.memory_space<smem>>
    %175 = vector.broadcast %174 : f32 to vector<2x256xf32>
    %176 = arith.mulf %175, %161 : vector<2x256xf32>
    %177 = arith.addf %158, %176 : vector<2x256xf32>
    %c1_43 = arith.constant 1 : index
    %c0_44 = arith.constant 0 : index
    %c113_45 = arith.constant 113 : index
    %178 = vector.load %arg11[%c1_43, %c0_44, %c113_45] : memref<4x2x512xf32, #tpu.memory_space<vmem>>, vector<1x2x256xf32>
    %179 = vector.shape_cast %178 : vector<1x2x256xf32> to vector<2x256xf32>
    %180 = arith.mulf %179, %1 : vector<2x256xf32>
    %c36 = arith.constant 36 : index
    %181 = memref.load %arg4[%c36] : memref<144xf32, #tpu.memory_space<smem>>
    %182 = vector.broadcast %181 : f32 to vector<2x256xf32>
    %183 = arith.mulf %182, %180 : vector<2x256xf32>
    %184 = arith.addf %165, %183 : vector<2x256xf32>
    %c37 = arith.constant 37 : index
    %185 = memref.load %arg4[%c37] : memref<144xf32, #tpu.memory_space<smem>>
    %186 = vector.broadcast %185 : f32 to vector<2x256xf32>
    %187 = arith.mulf %186, %180 : vector<2x256xf32>
    %188 = arith.addf %169, %187 : vector<2x256xf32>
    %c38 = arith.constant 38 : index
    %189 = memref.load %arg4[%c38] : memref<144xf32, #tpu.memory_space<smem>>
    %190 = vector.broadcast %189 : f32 to vector<2x256xf32>
    %191 = arith.mulf %190, %180 : vector<2x256xf32>
    %192 = arith.addf %173, %191 : vector<2x256xf32>
    %c39 = arith.constant 39 : index
    %193 = memref.load %arg4[%c39] : memref<144xf32, #tpu.memory_space<smem>>
    %194 = vector.broadcast %193 : f32 to vector<2x256xf32>
    %195 = arith.mulf %194, %180 : vector<2x256xf32>
    %196 = arith.addf %177, %195 : vector<2x256xf32>
    %c2_46 = arith.constant 2 : index
    %c0_47 = arith.constant 0 : index
    %c113_48 = arith.constant 113 : index
    %197 = vector.load %arg11[%c2_46, %c0_47, %c113_48] : memref<4x2x512xf32, #tpu.memory_space<vmem>>, vector<1x2x256xf32>
    %198 = vector.shape_cast %197 : vector<1x2x256xf32> to vector<2x256xf32>
    %199 = arith.mulf %198, %1 : vector<2x256xf32>
    %c40 = arith.constant 40 : index
    %200 = memref.load %arg4[%c40] : memref<144xf32, #tpu.memory_space<smem>>
    %201 = vector.broadcast %200 : f32 to vector<2x256xf32>
    %202 = arith.mulf %201, %199 : vector<2x256xf32>
    %203 = arith.addf %184, %202 : vector<2x256xf32>
    %c41 = arith.constant 41 : index
    %204 = memref.load %arg4[%c41] : memref<144xf32, #tpu.memory_space<smem>>
    %205 = vector.broadcast %204 : f32 to vector<2x256xf32>
    %206 = arith.mulf %205, %199 : vector<2x256xf32>
    %207 = arith.addf %188, %206 : vector<2x256xf32>
    %c42 = arith.constant 42 : index
    %208 = memref.load %arg4[%c42] : memref<144xf32, #tpu.memory_space<smem>>
    %209 = vector.broadcast %208 : f32 to vector<2x256xf32>
    %210 = arith.mulf %209, %199 : vector<2x256xf32>
    %211 = arith.addf %192, %210 : vector<2x256xf32>
    %c43 = arith.constant 43 : index
    %212 = memref.load %arg4[%c43] : memref<144xf32, #tpu.memory_space<smem>>
    %213 = vector.broadcast %212 : f32 to vector<2x256xf32>
    %214 = arith.mulf %213, %199 : vector<2x256xf32>
    %215 = arith.addf %196, %214 : vector<2x256xf32>
    %c3_49 = arith.constant 3 : index
    %c0_50 = arith.constant 0 : index
    %c113_51 = arith.constant 113 : index
    %216 = vector.load %arg11[%c3_49, %c0_50, %c113_51] : memref<4x2x512xf32, #tpu.memory_space<vmem>>, vector<1x2x256xf32>
    %217 = vector.shape_cast %216 : vector<1x2x256xf32> to vector<2x256xf32>
    %218 = arith.mulf %217, %1 : vector<2x256xf32>
    %c44 = arith.constant 44 : index
    %219 = memref.load %arg4[%c44] : memref<144xf32, #tpu.memory_space<smem>>
    %220 = vector.broadcast %219 : f32 to vector<2x256xf32>
    %221 = arith.mulf %220, %218 : vector<2x256xf32>
    %222 = arith.addf %203, %221 : vector<2x256xf32>
    %c45 = arith.constant 45 : index
    %223 = memref.load %arg4[%c45] : memref<144xf32, #tpu.memory_space<smem>>
    %224 = vector.broadcast %223 : f32 to vector<2x256xf32>
    %225 = arith.mulf %224, %218 : vector<2x256xf32>
    %226 = arith.addf %207, %225 : vector<2x256xf32>
    %c46 = arith.constant 46 : index
    %227 = memref.load %arg4[%c46] : memref<144xf32, #tpu.memory_space<smem>>
    %228 = vector.broadcast %227 : f32 to vector<2x256xf32>
    %229 = arith.mulf %228, %218 : vector<2x256xf32>
    %230 = arith.addf %211, %229 : vector<2x256xf32>
    %c47 = arith.constant 47 : index
    %231 = memref.load %arg4[%c47] : memref<144xf32, #tpu.memory_space<smem>>
    %232 = vector.broadcast %231 : f32 to vector<2x256xf32>
    %233 = arith.mulf %232, %218 : vector<2x256xf32>
    %234 = arith.addf %215, %233 : vector<2x256xf32>
    %c0_52 = arith.constant 0 : index
    %c0_53 = arith.constant 0 : index
    %c127 = arith.constant 127 : index
    %235 = vector.load %arg11[%c0_52, %c0_53, %c127] : memref<4x2x512xf32, #tpu.memory_space<vmem>>, vector<1x2x256xf32>
    %236 = vector.shape_cast %235 : vector<1x2x256xf32> to vector<2x256xf32>
    %237 = arith.mulf %236, %0 : vector<2x256xf32>
    %c48 = arith.constant 48 : index
    %238 = memref.load %arg4[%c48] : memref<144xf32, #tpu.memory_space<smem>>
    %239 = vector.broadcast %238 : f32 to vector<2x256xf32>
    %240 = arith.mulf %239, %237 : vector<2x256xf32>
    %241 = arith.addf %222, %240 : vector<2x256xf32>
    %c49 = arith.constant 49 : index
    %242 = memref.load %arg4[%c49] : memref<144xf32, #tpu.memory_space<smem>>
    %243 = vector.broadcast %242 : f32 to vector<2x256xf32>
    %244 = arith.mulf %243, %237 : vector<2x256xf32>
    %245 = arith.addf %226, %244 : vector<2x256xf32>
    %c50 = arith.constant 50 : index
    %246 = memref.load %arg4[%c50] : memref<144xf32, #tpu.memory_space<smem>>
    %247 = vector.broadcast %246 : f32 to vector<2x256xf32>
    %248 = arith.mulf %247, %237 : vector<2x256xf32>
    %249 = arith.addf %230, %248 : vector<2x256xf32>
    %c51 = arith.constant 51 : index
    %250 = memref.load %arg4[%c51] : memref<144xf32, #tpu.memory_space<smem>>
    %251 = vector.broadcast %250 : f32 to vector<2x256xf32>
    %252 = arith.mulf %251, %237 : vector<2x256xf32>
    %253 = arith.addf %234, %252 : vector<2x256xf32>
    %c1_54 = arith.constant 1 : index
    %c0_55 = arith.constant 0 : index
    %c127_56 = arith.constant 127 : index
    %254 = vector.load %arg11[%c1_54, %c0_55, %c127_56] : memref<4x2x512xf32, #tpu.memory_space<vmem>>, vector<1x2x256xf32>
    %255 = vector.shape_cast %254 : vector<1x2x256xf32> to vector<2x256xf32>
    %256 = arith.mulf %255, %0 : vector<2x256xf32>
    %c52 = arith.constant 52 : index
    %257 = memref.load %arg4[%c52] : memref<144xf32, #tpu.memory_space<smem>>
    %258 = vector.broadcast %257 : f32 to vector<2x256xf32>
    %259 = arith.mulf %258, %256 : vector<2x256xf32>
    %260 = arith.addf %241, %259 : vector<2x256xf32>
    %c53 = arith.constant 53 : index
    %261 = memref.load %arg4[%c53] : memref<144xf32, #tpu.memory_space<smem>>
    %262 = vector.broadcast %261 : f32 to vector<2x256xf32>
    %263 = arith.mulf %262, %256 : vector<2x256xf32>
    %264 = arith.addf %245, %263 : vector<2x256xf32>
    %c54 = arith.constant 54 : index
    %265 = memref.load %arg4[%c54] : memref<144xf32, #tpu.memory_space<smem>>
    %266 = vector.broadcast %265 : f32 to vector<2x256xf32>
    %267 = arith.mulf %266, %256 : vector<2x256xf32>
    %268 = arith.addf %249, %267 : vector<2x256xf32>
    %c55 = arith.constant 55 : index
    %269 = memref.load %arg4[%c55] : memref<144xf32, #tpu.memory_space<smem>>
    %270 = vector.broadcast %269 : f32 to vector<2x256xf32>
    %271 = arith.mulf %270, %256 : vector<2x256xf32>
    %272 = arith.addf %253, %271 : vector<2x256xf32>
    %c2_57 = arith.constant 2 : index
    %c0_58 = arith.constant 0 : index
    %c127_59 = arith.constant 127 : index
    %273 = vector.load %arg11[%c2_57, %c0_58, %c127_59] : memref<4x2x512xf32, #tpu.memory_space<vmem>>, vector<1x2x256xf32>
    %274 = vector.shape_cast %273 : vector<1x2x256xf32> to vector<2x256xf32>
    %275 = arith.mulf %274, %0 : vector<2x256xf32>
    %c56 = arith.constant 56 : index
    %276 = memref.load %arg4[%c56] : memref<144xf32, #tpu.memory_space<smem>>
    %277 = vector.broadcast %276 : f32 to vector<2x256xf32>
    %278 = arith.mulf %277, %275 : vector<2x256xf32>
    %279 = arith.addf %260, %278 : vector<2x256xf32>
    %c57 = arith.constant 57 : index
    %280 = memref.load %arg4[%c57] : memref<144xf32, #tpu.memory_space<smem>>
    %281 = vector.broadcast %280 : f32 to vector<2x256xf32>
    %282 = arith.mulf %281, %275 : vector<2x256xf32>
    %283 = arith.addf %264, %282 : vector<2x256xf32>
    %c58 = arith.constant 58 : index
    %284 = memref.load %arg4[%c58] : memref<144xf32, #tpu.memory_space<smem>>
    %285 = vector.broadcast %284 : f32 to vector<2x256xf32>
    %286 = arith.mulf %285, %275 : vector<2x256xf32>
    %287 = arith.addf %268, %286 : vector<2x256xf32>
    %c59 = arith.constant 59 : index
    %288 = memref.load %arg4[%c59] : memref<144xf32, #tpu.memory_space<smem>>
    %289 = vector.broadcast %288 : f32 to vector<2x256xf32>
    %290 = arith.mulf %289, %275 : vector<2x256xf32>
    %291 = arith.addf %272, %290 : vector<2x256xf32>
    %c3_60 = arith.constant 3 : index
    %c0_61 = arith.constant 0 : index
    %c127_62 = arith.constant 127 : index
    %292 = vector.load %arg11[%c3_60, %c0_61, %c127_62] : memref<4x2x512xf32, #tpu.memory_space<vmem>>, vector<1x2x256xf32>
    %293 = vector.shape_cast %292 : vector<1x2x256xf32> to vector<2x256xf32>
    %294 = arith.mulf %293, %0 : vector<2x256xf32>
    %c60 = arith.constant 60 : index
    %295 = memref.load %arg4[%c60] : memref<144xf32, #tpu.memory_space<smem>>
    %296 = vector.broadcast %295 : f32 to vector<2x256xf32>
    %297 = arith.mulf %296, %294 : vector<2x256xf32>
    %298 = arith.addf %279, %297 : vector<2x256xf32>
    %c61 = arith.constant 61 : index
    %299 = memref.load %arg4[%c61] : memref<144xf32, #tpu.memory_space<smem>>
    %300 = vector.broadcast %299 : f32 to vector<2x256xf32>
    %301 = arith.mulf %300, %294 : vector<2x256xf32>
    %302 = arith.addf %283, %301 : vector<2x256xf32>
    %c62 = arith.constant 62 : index
    %303 = memref.load %arg4[%c62] : memref<144xf32, #tpu.memory_space<smem>>
    %304 = vector.broadcast %303 : f32 to vector<2x256xf32>
    %305 = arith.mulf %304, %294 : vector<2x256xf32>
    %306 = arith.addf %287, %305 : vector<2x256xf32>
    %c63 = arith.constant 63 : index
    %307 = memref.load %arg4[%c63] : memref<144xf32, #tpu.memory_space<smem>>
    %308 = vector.broadcast %307 : f32 to vector<2x256xf32>
    %309 = arith.mulf %308, %294 : vector<2x256xf32>
    %310 = arith.addf %291, %309 : vector<2x256xf32>
    %c0_63 = arith.constant 0 : index
    %c0_64 = arith.constant 0 : index
    %c128_65 = arith.constant 128 : index
    %311 = vector.load %arg11[%c0_63, %c0_64, %c128_65] : memref<4x2x512xf32, #tpu.memory_space<vmem>>, vector<1x2x256xf32>
    %312 = vector.shape_cast %311 : vector<1x2x256xf32> to vector<2x256xf32>
    %c64 = arith.constant 64 : index
    %313 = memref.load %arg4[%c64] : memref<144xf32, #tpu.memory_space<smem>>
    %314 = vector.broadcast %313 : f32 to vector<2x256xf32>
    %315 = arith.mulf %314, %312 : vector<2x256xf32>
    %316 = arith.addf %298, %315 : vector<2x256xf32>
    %c65 = arith.constant 65 : index
    %317 = memref.load %arg4[%c65] : memref<144xf32, #tpu.memory_space<smem>>
    %318 = vector.broadcast %317 : f32 to vector<2x256xf32>
    %319 = arith.mulf %318, %312 : vector<2x256xf32>
    %320 = arith.addf %302, %319 : vector<2x256xf32>
    %c66 = arith.constant 66 : index
    %321 = memref.load %arg4[%c66] : memref<144xf32, #tpu.memory_space<smem>>
    %322 = vector.broadcast %321 : f32 to vector<2x256xf32>
    %323 = arith.mulf %322, %312 : vector<2x256xf32>
    %324 = arith.addf %306, %323 : vector<2x256xf32>
    %c67 = arith.constant 67 : index
    %325 = memref.load %arg4[%c67] : memref<144xf32, #tpu.memory_space<smem>>
    %326 = vector.broadcast %325 : f32 to vector<2x256xf32>
    %327 = arith.mulf %326, %312 : vector<2x256xf32>
    %328 = arith.addf %310, %327 : vector<2x256xf32>
    %c1_66 = arith.constant 1 : index
    %c0_67 = arith.constant 0 : index
    %c128_68 = arith.constant 128 : index
    %329 = vector.load %arg11[%c1_66, %c0_67, %c128_68] : memref<4x2x512xf32, #tpu.memory_space<vmem>>, vector<1x2x256xf32>
    %330 = vector.shape_cast %329 : vector<1x2x256xf32> to vector<2x256xf32>
    %c68 = arith.constant 68 : index
    %331 = memref.load %arg4[%c68] : memref<144xf32, #tpu.memory_space<smem>>
    %332 = vector.broadcast %331 : f32 to vector<2x256xf32>
    %333 = arith.mulf %332, %330 : vector<2x256xf32>
    %334 = arith.addf %316, %333 : vector<2x256xf32>
    %c69 = arith.constant 69 : index
    %335 = memref.load %arg4[%c69] : memref<144xf32, #tpu.memory_space<smem>>
    %336 = vector.broadcast %335 : f32 to vector<2x256xf32>
    %337 = arith.mulf %336, %330 : vector<2x256xf32>
    %338 = arith.addf %320, %337 : vector<2x256xf32>
    %c70 = arith.constant 70 : index
    %339 = memref.load %arg4[%c70] : memref<144xf32, #tpu.memory_space<smem>>
    %340 = vector.broadcast %339 : f32 to vector<2x256xf32>
    %341 = arith.mulf %340, %330 : vector<2x256xf32>
    %342 = arith.addf %324, %341 : vector<2x256xf32>
    %c71 = arith.constant 71 : index
    %343 = memref.load %arg4[%c71] : memref<144xf32, #tpu.memory_space<smem>>
    %344 = vector.broadcast %343 : f32 to vector<2x256xf32>
    %345 = arith.mulf %344, %330 : vector<2x256xf32>
    %346 = arith.addf %328, %345 : vector<2x256xf32>
    %c2_69 = arith.constant 2 : index
    %c0_70 = arith.constant 0 : index
    %c128_71 = arith.constant 128 : index
    %347 = vector.load %arg11[%c2_69, %c0_70, %c128_71] : memref<4x2x512xf32, #tpu.memory_space<vmem>>, vector<1x2x256xf32>
    %348 = vector.shape_cast %347 : vector<1x2x256xf32> to vector<2x256xf32>
    %c72 = arith.constant 72 : index
    %349 = memref.load %arg4[%c72] : memref<144xf32, #tpu.memory_space<smem>>
    %350 = vector.broadcast %349 : f32 to vector<2x256xf32>
    %351 = arith.mulf %350, %348 : vector<2x256xf32>
    %352 = arith.addf %334, %351 : vector<2x256xf32>
    %c73 = arith.constant 73 : index
    %353 = memref.load %arg4[%c73] : memref<144xf32, #tpu.memory_space<smem>>
    %354 = vector.broadcast %353 : f32 to vector<2x256xf32>
    %355 = arith.mulf %354, %348 : vector<2x256xf32>
    %356 = arith.addf %338, %355 : vector<2x256xf32>
    %c74 = arith.constant 74 : index
    %357 = memref.load %arg4[%c74] : memref<144xf32, #tpu.memory_space<smem>>
    %358 = vector.broadcast %357 : f32 to vector<2x256xf32>
    %359 = arith.mulf %358, %348 : vector<2x256xf32>
    %360 = arith.addf %342, %359 : vector<2x256xf32>
    %c75 = arith.constant 75 : index
    %361 = memref.load %arg4[%c75] : memref<144xf32, #tpu.memory_space<smem>>
    %362 = vector.broadcast %361 : f32 to vector<2x256xf32>
    %363 = arith.mulf %362, %348 : vector<2x256xf32>
    %364 = arith.addf %346, %363 : vector<2x256xf32>
    %c3_72 = arith.constant 3 : index
    %c0_73 = arith.constant 0 : index
    %c128_74 = arith.constant 128 : index
    %365 = vector.load %arg11[%c3_72, %c0_73, %c128_74] : memref<4x2x512xf32, #tpu.memory_space<vmem>>, vector<1x2x256xf32>
    %366 = vector.shape_cast %365 : vector<1x2x256xf32> to vector<2x256xf32>
    %c76 = arith.constant 76 : index
    %367 = memref.load %arg4[%c76] : memref<144xf32, #tpu.memory_space<smem>>
    %368 = vector.broadcast %367 : f32 to vector<2x256xf32>
    %369 = arith.mulf %368, %366 : vector<2x256xf32>
    %370 = arith.addf %352, %369 : vector<2x256xf32>
    %c77 = arith.constant 77 : index
    %371 = memref.load %arg4[%c77] : memref<144xf32, #tpu.memory_space<smem>>
    %372 = vector.broadcast %371 : f32 to vector<2x256xf32>
    %373 = arith.mulf %372, %366 : vector<2x256xf32>
    %374 = arith.addf %356, %373 : vector<2x256xf32>
    %c78 = arith.constant 78 : index
    %375 = memref.load %arg4[%c78] : memref<144xf32, #tpu.memory_space<smem>>
    %376 = vector.broadcast %375 : f32 to vector<2x256xf32>
    %377 = arith.mulf %376, %366 : vector<2x256xf32>
    %378 = arith.addf %360, %377 : vector<2x256xf32>
    %c79 = arith.constant 79 : index
    %379 = memref.load %arg4[%c79] : memref<144xf32, #tpu.memory_space<smem>>
    %380 = vector.broadcast %379 : f32 to vector<2x256xf32>
    %381 = arith.mulf %380, %366 : vector<2x256xf32>
    %382 = arith.addf %364, %381 : vector<2x256xf32>
    %c0_75 = arith.constant 0 : index
    %c0_76 = arith.constant 0 : index
    %c129 = arith.constant 129 : index
    %383 = vector.load %arg11[%c0_75, %c0_76, %c129] : memref<4x2x512xf32, #tpu.memory_space<vmem>>, vector<1x2x256xf32>
    %384 = vector.shape_cast %383 : vector<1x2x256xf32> to vector<2x256xf32>
    %385 = arith.mulf %384, %1 : vector<2x256xf32>
    %c80 = arith.constant 80 : index
    %386 = memref.load %arg4[%c80] : memref<144xf32, #tpu.memory_space<smem>>
    %387 = vector.broadcast %386 : f32 to vector<2x256xf32>
    %388 = arith.mulf %387, %385 : vector<2x256xf32>
    %389 = arith.addf %370, %388 : vector<2x256xf32>
    %c81 = arith.constant 81 : index
    %390 = memref.load %arg4[%c81] : memref<144xf32, #tpu.memory_space<smem>>
    %391 = vector.broadcast %390 : f32 to vector<2x256xf32>
    %392 = arith.mulf %391, %385 : vector<2x256xf32>
    %393 = arith.addf %374, %392 : vector<2x256xf32>
    %c82 = arith.constant 82 : index
    %394 = memref.load %arg4[%c82] : memref<144xf32, #tpu.memory_space<smem>>
    %395 = vector.broadcast %394 : f32 to vector<2x256xf32>
    %396 = arith.mulf %395, %385 : vector<2x256xf32>
    %397 = arith.addf %378, %396 : vector<2x256xf32>
    %c83 = arith.constant 83 : index
    %398 = memref.load %arg4[%c83] : memref<144xf32, #tpu.memory_space<smem>>
    %399 = vector.broadcast %398 : f32 to vector<2x256xf32>
    %400 = arith.mulf %399, %385 : vector<2x256xf32>
    %401 = arith.addf %382, %400 : vector<2x256xf32>
    %c1_77 = arith.constant 1 : index
    %c0_78 = arith.constant 0 : index
    %c129_79 = arith.constant 129 : index
    %402 = vector.load %arg11[%c1_77, %c0_78, %c129_79] : memref<4x2x512xf32, #tpu.memory_space<vmem>>, vector<1x2x256xf32>
    %403 = vector.shape_cast %402 : vector<1x2x256xf32> to vector<2x256xf32>
    %404 = arith.mulf %403, %1 : vector<2x256xf32>
    %c84 = arith.constant 84 : index
    %405 = memref.load %arg4[%c84] : memref<144xf32, #tpu.memory_space<smem>>
    %406 = vector.broadcast %405 : f32 to vector<2x256xf32>
    %407 = arith.mulf %406, %404 : vector<2x256xf32>
    %408 = arith.addf %389, %407 : vector<2x256xf32>
    %c85 = arith.constant 85 : index
    %409 = memref.load %arg4[%c85] : memref<144xf32, #tpu.memory_space<smem>>
    %410 = vector.broadcast %409 : f32 to vector<2x256xf32>
    %411 = arith.mulf %410, %404 : vector<2x256xf32>
    %412 = arith.addf %393, %411 : vector<2x256xf32>
    %c86 = arith.constant 86 : index
    %413 = memref.load %arg4[%c86] : memref<144xf32, #tpu.memory_space<smem>>
    %414 = vector.broadcast %413 : f32 to vector<2x256xf32>
    %415 = arith.mulf %414, %404 : vector<2x256xf32>
    %416 = arith.addf %397, %415 : vector<2x256xf32>
    %c87 = arith.constant 87 : index
    %417 = memref.load %arg4[%c87] : memref<144xf32, #tpu.memory_space<smem>>
    %418 = vector.broadcast %417 : f32 to vector<2x256xf32>
    %419 = arith.mulf %418, %404 : vector<2x256xf32>
    %420 = arith.addf %401, %419 : vector<2x256xf32>
    %c2_80 = arith.constant 2 : index
    %c0_81 = arith.constant 0 : index
    %c129_82 = arith.constant 129 : index
    %421 = vector.load %arg11[%c2_80, %c0_81, %c129_82] : memref<4x2x512xf32, #tpu.memory_space<vmem>>, vector<1x2x256xf32>
    %422 = vector.shape_cast %421 : vector<1x2x256xf32> to vector<2x256xf32>
    %423 = arith.mulf %422, %1 : vector<2x256xf32>
    %c88 = arith.constant 88 : index
    %424 = memref.load %arg4[%c88] : memref<144xf32, #tpu.memory_space<smem>>
    %425 = vector.broadcast %424 : f32 to vector<2x256xf32>
    %426 = arith.mulf %425, %423 : vector<2x256xf32>
    %427 = arith.addf %408, %426 : vector<2x256xf32>
    %c89 = arith.constant 89 : index
    %428 = memref.load %arg4[%c89] : memref<144xf32, #tpu.memory_space<smem>>
    %429 = vector.broadcast %428 : f32 to vector<2x256xf32>
    %430 = arith.mulf %429, %423 : vector<2x256xf32>
    %431 = arith.addf %412, %430 : vector<2x256xf32>
    %c90 = arith.constant 90 : index
    %432 = memref.load %arg4[%c90] : memref<144xf32, #tpu.memory_space<smem>>
    %433 = vector.broadcast %432 : f32 to vector<2x256xf32>
    %434 = arith.mulf %433, %423 : vector<2x256xf32>
    %435 = arith.addf %416, %434 : vector<2x256xf32>
    %c91 = arith.constant 91 : index
    %436 = memref.load %arg4[%c91] : memref<144xf32, #tpu.memory_space<smem>>
    %437 = vector.broadcast %436 : f32 to vector<2x256xf32>
    %438 = arith.mulf %437, %423 : vector<2x256xf32>
    %439 = arith.addf %420, %438 : vector<2x256xf32>
    %c3_83 = arith.constant 3 : index
    %c0_84 = arith.constant 0 : index
    %c129_85 = arith.constant 129 : index
    %440 = vector.load %arg11[%c3_83, %c0_84, %c129_85] : memref<4x2x512xf32, #tpu.memory_space<vmem>>, vector<1x2x256xf32>
    %441 = vector.shape_cast %440 : vector<1x2x256xf32> to vector<2x256xf32>
    %442 = arith.mulf %441, %1 : vector<2x256xf32>
    %c92 = arith.constant 92 : index
    %443 = memref.load %arg4[%c92] : memref<144xf32, #tpu.memory_space<smem>>
    %444 = vector.broadcast %443 : f32 to vector<2x256xf32>
    %445 = arith.mulf %444, %442 : vector<2x256xf32>
    %446 = arith.addf %427, %445 : vector<2x256xf32>
    %c93 = arith.constant 93 : index
    %447 = memref.load %arg4[%c93] : memref<144xf32, #tpu.memory_space<smem>>
    %448 = vector.broadcast %447 : f32 to vector<2x256xf32>
    %449 = arith.mulf %448, %442 : vector<2x256xf32>
    %450 = arith.addf %431, %449 : vector<2x256xf32>
    %c94 = arith.constant 94 : index
    %451 = memref.load %arg4[%c94] : memref<144xf32, #tpu.memory_space<smem>>
    %452 = vector.broadcast %451 : f32 to vector<2x256xf32>
    %453 = arith.mulf %452, %442 : vector<2x256xf32>
    %454 = arith.addf %435, %453 : vector<2x256xf32>
    %c95 = arith.constant 95 : index
    %455 = memref.load %arg4[%c95] : memref<144xf32, #tpu.memory_space<smem>>
    %456 = vector.broadcast %455 : f32 to vector<2x256xf32>
    %457 = arith.mulf %456, %442 : vector<2x256xf32>
    %458 = arith.addf %439, %457 : vector<2x256xf32>
    %c0_86 = arith.constant 0 : index
    %c0_87 = arith.constant 0 : index
    %c143 = arith.constant 143 : index
    %459 = vector.load %arg11[%c0_86, %c0_87, %c143] : memref<4x2x512xf32, #tpu.memory_space<vmem>>, vector<1x2x256xf32>
    %460 = vector.shape_cast %459 : vector<1x2x256xf32> to vector<2x256xf32>
    %461 = arith.mulf %460, %0 : vector<2x256xf32>
    %c96 = arith.constant 96 : index
    %462 = memref.load %arg4[%c96] : memref<144xf32, #tpu.memory_space<smem>>
    %463 = vector.broadcast %462 : f32 to vector<2x256xf32>
    %464 = arith.mulf %463, %461 : vector<2x256xf32>
    %465 = arith.addf %446, %464 : vector<2x256xf32>
    %c97 = arith.constant 97 : index
    %466 = memref.load %arg4[%c97] : memref<144xf32, #tpu.memory_space<smem>>
    %467 = vector.broadcast %466 : f32 to vector<2x256xf32>
    %468 = arith.mulf %467, %461 : vector<2x256xf32>
    %469 = arith.addf %450, %468 : vector<2x256xf32>
    %c98 = arith.constant 98 : index
    %470 = memref.load %arg4[%c98] : memref<144xf32, #tpu.memory_space<smem>>
    %471 = vector.broadcast %470 : f32 to vector<2x256xf32>
    %472 = arith.mulf %471, %461 : vector<2x256xf32>
    %473 = arith.addf %454, %472 : vector<2x256xf32>
    %c99 = arith.constant 99 : index
    %474 = memref.load %arg4[%c99] : memref<144xf32, #tpu.memory_space<smem>>
    %475 = vector.broadcast %474 : f32 to vector<2x256xf32>
    %476 = arith.mulf %475, %461 : vector<2x256xf32>
    %477 = arith.addf %458, %476 : vector<2x256xf32>
    %c1_88 = arith.constant 1 : index
    %c0_89 = arith.constant 0 : index
    %c143_90 = arith.constant 143 : index
    %478 = vector.load %arg11[%c1_88, %c0_89, %c143_90] : memref<4x2x512xf32, #tpu.memory_space<vmem>>, vector<1x2x256xf32>
    %479 = vector.shape_cast %478 : vector<1x2x256xf32> to vector<2x256xf32>
    %480 = arith.mulf %479, %0 : vector<2x256xf32>
    %c100 = arith.constant 100 : index
    %481 = memref.load %arg4[%c100] : memref<144xf32, #tpu.memory_space<smem>>
    %482 = vector.broadcast %481 : f32 to vector<2x256xf32>
    %483 = arith.mulf %482, %480 : vector<2x256xf32>
    %484 = arith.addf %465, %483 : vector<2x256xf32>
    %c101 = arith.constant 101 : index
    %485 = memref.load %arg4[%c101] : memref<144xf32, #tpu.memory_space<smem>>
    %486 = vector.broadcast %485 : f32 to vector<2x256xf32>
    %487 = arith.mulf %486, %480 : vector<2x256xf32>
    %488 = arith.addf %469, %487 : vector<2x256xf32>
    %c102 = arith.constant 102 : index
    %489 = memref.load %arg4[%c102] : memref<144xf32, #tpu.memory_space<smem>>
    %490 = vector.broadcast %489 : f32 to vector<2x256xf32>
    %491 = arith.mulf %490, %480 : vector<2x256xf32>
    %492 = arith.addf %473, %491 : vector<2x256xf32>
    %c103 = arith.constant 103 : index
    %493 = memref.load %arg4[%c103] : memref<144xf32, #tpu.memory_space<smem>>
    %494 = vector.broadcast %493 : f32 to vector<2x256xf32>
    %495 = arith.mulf %494, %480 : vector<2x256xf32>
    %496 = arith.addf %477, %495 : vector<2x256xf32>
    %c2_91 = arith.constant 2 : index
    %c0_92 = arith.constant 0 : index
    %c143_93 = arith.constant 143 : index
    %497 = vector.load %arg11[%c2_91, %c0_92, %c143_93] : memref<4x2x512xf32, #tpu.memory_space<vmem>>, vector<1x2x256xf32>
    %498 = vector.shape_cast %497 : vector<1x2x256xf32> to vector<2x256xf32>
    %499 = arith.mulf %498, %0 : vector<2x256xf32>
    %c104 = arith.constant 104 : index
    %500 = memref.load %arg4[%c104] : memref<144xf32, #tpu.memory_space<smem>>
    %501 = vector.broadcast %500 : f32 to vector<2x256xf32>
    %502 = arith.mulf %501, %499 : vector<2x256xf32>
    %503 = arith.addf %484, %502 : vector<2x256xf32>
    %c105 = arith.constant 105 : index
    %504 = memref.load %arg4[%c105] : memref<144xf32, #tpu.memory_space<smem>>
    %505 = vector.broadcast %504 : f32 to vector<2x256xf32>
    %506 = arith.mulf %505, %499 : vector<2x256xf32>
    %507 = arith.addf %488, %506 : vector<2x256xf32>
    %c106 = arith.constant 106 : index
    %508 = memref.load %arg4[%c106] : memref<144xf32, #tpu.memory_space<smem>>
    %509 = vector.broadcast %508 : f32 to vector<2x256xf32>
    %510 = arith.mulf %509, %499 : vector<2x256xf32>
    %511 = arith.addf %492, %510 : vector<2x256xf32>
    %c107 = arith.constant 107 : index
    %512 = memref.load %arg4[%c107] : memref<144xf32, #tpu.memory_space<smem>>
    %513 = vector.broadcast %512 : f32 to vector<2x256xf32>
    %514 = arith.mulf %513, %499 : vector<2x256xf32>
    %515 = arith.addf %496, %514 : vector<2x256xf32>
    %c3_94 = arith.constant 3 : index
    %c0_95 = arith.constant 0 : index
    %c143_96 = arith.constant 143 : index
    %516 = vector.load %arg11[%c3_94, %c0_95, %c143_96] : memref<4x2x512xf32, #tpu.memory_space<vmem>>, vector<1x2x256xf32>
    %517 = vector.shape_cast %516 : vector<1x2x256xf32> to vector<2x256xf32>
    %518 = arith.mulf %517, %0 : vector<2x256xf32>
    %c108 = arith.constant 108 : index
    %519 = memref.load %arg4[%c108] : memref<144xf32, #tpu.memory_space<smem>>
    %520 = vector.broadcast %519 : f32 to vector<2x256xf32>
    %521 = arith.mulf %520, %518 : vector<2x256xf32>
    %522 = arith.addf %503, %521 : vector<2x256xf32>
    %c109 = arith.constant 109 : index
    %523 = memref.load %arg4[%c109] : memref<144xf32, #tpu.memory_space<smem>>
    %524 = vector.broadcast %523 : f32 to vector<2x256xf32>
    %525 = arith.mulf %524, %518 : vector<2x256xf32>
    %526 = arith.addf %507, %525 : vector<2x256xf32>
    %c110 = arith.constant 110 : index
    %527 = memref.load %arg4[%c110] : memref<144xf32, #tpu.memory_space<smem>>
    %528 = vector.broadcast %527 : f32 to vector<2x256xf32>
    %529 = arith.mulf %528, %518 : vector<2x256xf32>
    %530 = arith.addf %511, %529 : vector<2x256xf32>
    %c111_97 = arith.constant 111 : index
    %531 = memref.load %arg4[%c111_97] : memref<144xf32, #tpu.memory_space<smem>>
    %532 = vector.broadcast %531 : f32 to vector<2x256xf32>
    %533 = arith.mulf %532, %518 : vector<2x256xf32>
    %534 = arith.addf %515, %533 : vector<2x256xf32>
    %c0_98 = arith.constant 0 : index
    %c0_99 = arith.constant 0 : index
    %c144 = arith.constant 144 : index
    %535 = vector.load %arg11[%c0_98, %c0_99, %c144] : memref<4x2x512xf32, #tpu.memory_space<vmem>>, vector<1x2x256xf32>
    %536 = vector.shape_cast %535 : vector<1x2x256xf32> to vector<2x256xf32>
    %c112_100 = arith.constant 112 : index
    %537 = memref.load %arg4[%c112_100] : memref<144xf32, #tpu.memory_space<smem>>
    %538 = vector.broadcast %537 : f32 to vector<2x256xf32>
    %539 = arith.mulf %538, %536 : vector<2x256xf32>
    %540 = arith.addf %522, %539 : vector<2x256xf32>
    %c113_101 = arith.constant 113 : index
    %541 = memref.load %arg4[%c113_101] : memref<144xf32, #tpu.memory_space<smem>>
    %542 = vector.broadcast %541 : f32 to vector<2x256xf32>
    %543 = arith.mulf %542, %536 : vector<2x256xf32>
    %544 = arith.addf %526, %543 : vector<2x256xf32>
    %c114 = arith.constant 114 : index
    %545 = memref.load %arg4[%c114] : memref<144xf32, #tpu.memory_space<smem>>
    %546 = vector.broadcast %545 : f32 to vector<2x256xf32>
    %547 = arith.mulf %546, %536 : vector<2x256xf32>
    %548 = arith.addf %530, %547 : vector<2x256xf32>
    %c115 = arith.constant 115 : index
    %549 = memref.load %arg4[%c115] : memref<144xf32, #tpu.memory_space<smem>>
    %550 = vector.broadcast %549 : f32 to vector<2x256xf32>
    %551 = arith.mulf %550, %536 : vector<2x256xf32>
    %552 = arith.addf %534, %551 : vector<2x256xf32>
    %c1_102 = arith.constant 1 : index
    %c0_103 = arith.constant 0 : index
    %c144_104 = arith.constant 144 : index
    %553 = vector.load %arg11[%c1_102, %c0_103, %c144_104] : memref<4x2x512xf32, #tpu.memory_space<vmem>>, vector<1x2x256xf32>
    %554 = vector.shape_cast %553 : vector<1x2x256xf32> to vector<2x256xf32>
    %c116 = arith.constant 116 : index
    %555 = memref.load %arg4[%c116] : memref<144xf32, #tpu.memory_space<smem>>
    %556 = vector.broadcast %555 : f32 to vector<2x256xf32>
    %557 = arith.mulf %556, %554 : vector<2x256xf32>
    %558 = arith.addf %540, %557 : vector<2x256xf32>
    %c117 = arith.constant 117 : index
    %559 = memref.load %arg4[%c117] : memref<144xf32, #tpu.memory_space<smem>>
    %560 = vector.broadcast %559 : f32 to vector<2x256xf32>
    %561 = arith.mulf %560, %554 : vector<2x256xf32>
    %562 = arith.addf %544, %561 : vector<2x256xf32>
    %c118 = arith.constant 118 : index
    %563 = memref.load %arg4[%c118] : memref<144xf32, #tpu.memory_space<smem>>
    %564 = vector.broadcast %563 : f32 to vector<2x256xf32>
    %565 = arith.mulf %564, %554 : vector<2x256xf32>
    %566 = arith.addf %548, %565 : vector<2x256xf32>
    %c119 = arith.constant 119 : index
    %567 = memref.load %arg4[%c119] : memref<144xf32, #tpu.memory_space<smem>>
    %568 = vector.broadcast %567 : f32 to vector<2x256xf32>
    %569 = arith.mulf %568, %554 : vector<2x256xf32>
    %570 = arith.addf %552, %569 : vector<2x256xf32>
    %c2_105 = arith.constant 2 : index
    %c0_106 = arith.constant 0 : index
    %c144_107 = arith.constant 144 : index
    %571 = vector.load %arg11[%c2_105, %c0_106, %c144_107] : memref<4x2x512xf32, #tpu.memory_space<vmem>>, vector<1x2x256xf32>
    %572 = vector.shape_cast %571 : vector<1x2x256xf32> to vector<2x256xf32>
    %c120 = arith.constant 120 : index
    %573 = memref.load %arg4[%c120] : memref<144xf32, #tpu.memory_space<smem>>
    %574 = vector.broadcast %573 : f32 to vector<2x256xf32>
    %575 = arith.mulf %574, %572 : vector<2x256xf32>
    %576 = arith.addf %558, %575 : vector<2x256xf32>
    %c121 = arith.constant 121 : index
    %577 = memref.load %arg4[%c121] : memref<144xf32, #tpu.memory_space<smem>>
    %578 = vector.broadcast %577 : f32 to vector<2x256xf32>
    %579 = arith.mulf %578, %572 : vector<2x256xf32>
    %580 = arith.addf %562, %579 : vector<2x256xf32>
    %c122 = arith.constant 122 : index
    %581 = memref.load %arg4[%c122] : memref<144xf32, #tpu.memory_space<smem>>
    %582 = vector.broadcast %581 : f32 to vector<2x256xf32>
    %583 = arith.mulf %582, %572 : vector<2x256xf32>
    %584 = arith.addf %566, %583 : vector<2x256xf32>
    %c123 = arith.constant 123 : index
    %585 = memref.load %arg4[%c123] : memref<144xf32, #tpu.memory_space<smem>>
    %586 = vector.broadcast %585 : f32 to vector<2x256xf32>
    %587 = arith.mulf %586, %572 : vector<2x256xf32>
    %588 = arith.addf %570, %587 : vector<2x256xf32>
    %c3_108 = arith.constant 3 : index
    %c0_109 = arith.constant 0 : index
    %c144_110 = arith.constant 144 : index
    %589 = vector.load %arg11[%c3_108, %c0_109, %c144_110] : memref<4x2x512xf32, #tpu.memory_space<vmem>>, vector<1x2x256xf32>
    %590 = vector.shape_cast %589 : vector<1x2x256xf32> to vector<2x256xf32>
    %c124 = arith.constant 124 : index
    %591 = memref.load %arg4[%c124] : memref<144xf32, #tpu.memory_space<smem>>
    %592 = vector.broadcast %591 : f32 to vector<2x256xf32>
    %593 = arith.mulf %592, %590 : vector<2x256xf32>
    %594 = arith.addf %576, %593 : vector<2x256xf32>
    %c125 = arith.constant 125 : index
    %595 = memref.load %arg4[%c125] : memref<144xf32, #tpu.memory_space<smem>>
    %596 = vector.broadcast %595 : f32 to vector<2x256xf32>
    %597 = arith.mulf %596, %590 : vector<2x256xf32>
    %598 = arith.addf %580, %597 : vector<2x256xf32>
    %c126 = arith.constant 126 : index
    %599 = memref.load %arg4[%c126] : memref<144xf32, #tpu.memory_space<smem>>
    %600 = vector.broadcast %599 : f32 to vector<2x256xf32>
    %601 = arith.mulf %600, %590 : vector<2x256xf32>
    %602 = arith.addf %584, %601 : vector<2x256xf32>
    %c127_111 = arith.constant 127 : index
    %603 = memref.load %arg4[%c127_111] : memref<144xf32, #tpu.memory_space<smem>>
    %604 = vector.broadcast %603 : f32 to vector<2x256xf32>
    %605 = arith.mulf %604, %590 : vector<2x256xf32>
    %606 = arith.addf %588, %605 : vector<2x256xf32>
    %c0_112 = arith.constant 0 : index
    %c0_113 = arith.constant 0 : index
    %c145 = arith.constant 145 : index
    %607 = vector.load %arg11[%c0_112, %c0_113, %c145] : memref<4x2x512xf32, #tpu.memory_space<vmem>>, vector<1x2x256xf32>
    %608 = vector.shape_cast %607 : vector<1x2x256xf32> to vector<2x256xf32>
    %609 = arith.mulf %608, %1 : vector<2x256xf32>
    %c128_114 = arith.constant 128 : index
    %610 = memref.load %arg4[%c128_114] : memref<144xf32, #tpu.memory_space<smem>>
    %611 = vector.broadcast %610 : f32 to vector<2x256xf32>
    %612 = arith.mulf %611, %609 : vector<2x256xf32>
    %613 = arith.addf %594, %612 : vector<2x256xf32>
    %c129_115 = arith.constant 129 : index
    %614 = memref.load %arg4[%c129_115] : memref<144xf32, #tpu.memory_space<smem>>
    %615 = vector.broadcast %614 : f32 to vector<2x256xf32>
    %616 = arith.mulf %615, %609 : vector<2x256xf32>
    %617 = arith.addf %598, %616 : vector<2x256xf32>
    %c130 = arith.constant 130 : index
    %618 = memref.load %arg4[%c130] : memref<144xf32, #tpu.memory_space<smem>>
    %619 = vector.broadcast %618 : f32 to vector<2x256xf32>
    %620 = arith.mulf %619, %609 : vector<2x256xf32>
    %621 = arith.addf %602, %620 : vector<2x256xf32>
    %c131 = arith.constant 131 : index
    %622 = memref.load %arg4[%c131] : memref<144xf32, #tpu.memory_space<smem>>
    %623 = vector.broadcast %622 : f32 to vector<2x256xf32>
    %624 = arith.mulf %623, %609 : vector<2x256xf32>
    %625 = arith.addf %606, %624 : vector<2x256xf32>
    %c1_116 = arith.constant 1 : index
    %c0_117 = arith.constant 0 : index
    %c145_118 = arith.constant 145 : index
    %626 = vector.load %arg11[%c1_116, %c0_117, %c145_118] : memref<4x2x512xf32, #tpu.memory_space<vmem>>, vector<1x2x256xf32>
    %627 = vector.shape_cast %626 : vector<1x2x256xf32> to vector<2x256xf32>
    %628 = arith.mulf %627, %1 : vector<2x256xf32>
    %c132 = arith.constant 132 : index
    %629 = memref.load %arg4[%c132] : memref<144xf32, #tpu.memory_space<smem>>
    %630 = vector.broadcast %629 : f32 to vector<2x256xf32>
    %631 = arith.mulf %630, %628 : vector<2x256xf32>
    %632 = arith.addf %613, %631 : vector<2x256xf32>
    %c133 = arith.constant 133 : index
    %633 = memref.load %arg4[%c133] : memref<144xf32, #tpu.memory_space<smem>>
    %634 = vector.broadcast %633 : f32 to vector<2x256xf32>
    %635 = arith.mulf %634, %628 : vector<2x256xf32>
    %636 = arith.addf %617, %635 : vector<2x256xf32>
    %c134 = arith.constant 134 : index
    %637 = memref.load %arg4[%c134] : memref<144xf32, #tpu.memory_space<smem>>
    %638 = vector.broadcast %637 : f32 to vector<2x256xf32>
    %639 = arith.mulf %638, %628 : vector<2x256xf32>
    %640 = arith.addf %621, %639 : vector<2x256xf32>
    %c135 = arith.constant 135 : index
    %641 = memref.load %arg4[%c135] : memref<144xf32, #tpu.memory_space<smem>>
    %642 = vector.broadcast %641 : f32 to vector<2x256xf32>
    %643 = arith.mulf %642, %628 : vector<2x256xf32>
    %644 = arith.addf %625, %643 : vector<2x256xf32>
    %c2_119 = arith.constant 2 : index
    %c0_120 = arith.constant 0 : index
    %c145_121 = arith.constant 145 : index
    %645 = vector.load %arg11[%c2_119, %c0_120, %c145_121] : memref<4x2x512xf32, #tpu.memory_space<vmem>>, vector<1x2x256xf32>
    %646 = vector.shape_cast %645 : vector<1x2x256xf32> to vector<2x256xf32>
    %647 = arith.mulf %646, %1 : vector<2x256xf32>
    %c136 = arith.constant 136 : index
    %648 = memref.load %arg4[%c136] : memref<144xf32, #tpu.memory_space<smem>>
    %649 = vector.broadcast %648 : f32 to vector<2x256xf32>
    %650 = arith.mulf %649, %647 : vector<2x256xf32>
    %651 = arith.addf %632, %650 : vector<2x256xf32>
    %c137 = arith.constant 137 : index
    %652 = memref.load %arg4[%c137] : memref<144xf32, #tpu.memory_space<smem>>
    %653 = vector.broadcast %652 : f32 to vector<2x256xf32>
    %654 = arith.mulf %653, %647 : vector<2x256xf32>
    %655 = arith.addf %636, %654 : vector<2x256xf32>
    %c138 = arith.constant 138 : index
    %656 = memref.load %arg4[%c138] : memref<144xf32, #tpu.memory_space<smem>>
    %657 = vector.broadcast %656 : f32 to vector<2x256xf32>
    %658 = arith.mulf %657, %647 : vector<2x256xf32>
    %659 = arith.addf %640, %658 : vector<2x256xf32>
    %c139 = arith.constant 139 : index
    %660 = memref.load %arg4[%c139] : memref<144xf32, #tpu.memory_space<smem>>
    %661 = vector.broadcast %660 : f32 to vector<2x256xf32>
    %662 = arith.mulf %661, %647 : vector<2x256xf32>
    %663 = arith.addf %644, %662 : vector<2x256xf32>
    %c3_122 = arith.constant 3 : index
    %c0_123 = arith.constant 0 : index
    %c145_124 = arith.constant 145 : index
    %664 = vector.load %arg11[%c3_122, %c0_123, %c145_124] : memref<4x2x512xf32, #tpu.memory_space<vmem>>, vector<1x2x256xf32>
    %665 = vector.shape_cast %664 : vector<1x2x256xf32> to vector<2x256xf32>
    %666 = arith.mulf %665, %1 : vector<2x256xf32>
    %c140 = arith.constant 140 : index
    %667 = memref.load %arg4[%c140] : memref<144xf32, #tpu.memory_space<smem>>
    %668 = vector.broadcast %667 : f32 to vector<2x256xf32>
    %669 = arith.mulf %668, %666 : vector<2x256xf32>
    %670 = arith.addf %651, %669 : vector<2x256xf32>
    %c141 = arith.constant 141 : index
    %671 = memref.load %arg4[%c141] : memref<144xf32, #tpu.memory_space<smem>>
    %672 = vector.broadcast %671 : f32 to vector<2x256xf32>
    %673 = arith.mulf %672, %666 : vector<2x256xf32>
    %674 = arith.addf %655, %673 : vector<2x256xf32>
    %c142 = arith.constant 142 : index
    %675 = memref.load %arg4[%c142] : memref<144xf32, #tpu.memory_space<smem>>
    %676 = vector.broadcast %675 : f32 to vector<2x256xf32>
    %677 = arith.mulf %676, %666 : vector<2x256xf32>
    %678 = arith.addf %659, %677 : vector<2x256xf32>
    %c143_125 = arith.constant 143 : index
    %679 = memref.load %arg4[%c143_125] : memref<144xf32, #tpu.memory_space<smem>>
    %680 = vector.broadcast %679 : f32 to vector<2x256xf32>
    %681 = arith.mulf %680, %666 : vector<2x256xf32>
    %682 = arith.addf %663, %681 : vector<2x256xf32>
    %c0_126 = arith.constant 0 : index
    %683 = memref.load %arg5[%c0_126] : memref<4xf32, #tpu.memory_space<smem>>
    %684 = vector.broadcast %683 : f32 to vector<2x256xf32>
    %685 = arith.mulf %670, %684 : vector<2x256xf32>
    %c0_127 = arith.constant 0 : index
    %686 = memref.load %arg6[%c0_127] : memref<4xf32, #tpu.memory_space<smem>>
    %687 = vector.broadcast %686 : f32 to vector<2x256xf32>
    %688 = arith.addf %685, %687 : vector<2x256xf32>
    %cst_128 = arith.constant 0.000000e+00 : f32
    %689 = vector.broadcast %cst_128 : f32 to vector<2x256xf32>
    %690 = arith.maximumf %688, %689 : vector<2x256xf32>
    %c0_129 = arith.constant 0 : index
    %c0_130 = arith.constant 0 : index
    %c128_131 = arith.constant 128 : index
    %691 = vector.load %arg12[%c0_129, %c0_130, %c128_131] : memref<4x2x512xf32, #tpu.memory_space<vmem>>, vector<1x2x256xf32>
    %692 = vector.shape_cast %691 : vector<1x2x256xf32> to vector<2x256xf32>
    %693 = vector.shape_cast %690 : vector<2x256xf32> to vector<1x2x256xf32>
    tpu.vector_store %arg12[%c0_129, %c0_130, %c128_131], %693 {strides = array<i32>} : memref<4x2x512xf32, #tpu.memory_space<vmem>>, vector<1x2x256xf32>,
    %c1_132 = arith.constant 1 : index
    %694 = memref.load %arg5[%c1_132] : memref<4xf32, #tpu.memory_space<smem>>
    %695 = vector.broadcast %694 : f32 to vector<2x256xf32>
    %696 = arith.mulf %674, %695 : vector<2x256xf32>
    %c1_133 = arith.constant 1 : index
    %697 = memref.load %arg6[%c1_133] : memref<4xf32, #tpu.memory_space<smem>>
    %698 = vector.broadcast %697 : f32 to vector<2x256xf32>
    %699 = arith.addf %696, %698 : vector<2x256xf32>
    %cst_134 = arith.constant 0.000000e+00 : f32
    %700 = vector.broadcast %cst_134 : f32 to vector<2x256xf32>
    %701 = arith.maximumf %699, %700 : vector<2x256xf32>
    %c1_135 = arith.constant 1 : index
    %c0_136 = arith.constant 0 : index
    %c128_137 = arith.constant 128 : index
    %702 = vector.load %arg12[%c1_135, %c0_136, %c128_137] : memref<4x2x512xf32, #tpu.memory_space<vmem>>, vector<1x2x256xf32>
    %703 = vector.shape_cast %702 : vector<1x2x256xf32> to vector<2x256xf32>
    %704 = vector.shape_cast %701 : vector<2x256xf32> to vector<1x2x256xf32>
    tpu.vector_store %arg12[%c1_135, %c0_136, %c128_137], %704 {strides = array<i32>} : memref<4x2x512xf32, #tpu.memory_space<vmem>>, vector<1x2x256xf32>,
    %c2_138 = arith.constant 2 : index
    %705 = memref.load %arg5[%c2_138] : memref<4xf32, #tpu.memory_space<smem>>
    %706 = vector.broadcast %705 : f32 to vector<2x256xf32>
    %707 = arith.mulf %678, %706 : vector<2x256xf32>
    %c2_139 = arith.constant 2 : index
    %708 = memref.load %arg6[%c2_139] : memref<4xf32, #tpu.memory_space<smem>>
    %709 = vector.broadcast %708 : f32 to vector<2x256xf32>
    %710 = arith.addf %707, %709 : vector<2x256xf32>
    %cst_140 = arith.constant 0.000000e+00 : f32
    %711 = vector.broadcast %cst_140 : f32 to vector<2x256xf32>
    %712 = arith.maximumf %710, %711 : vector<2x256xf32>
    %c2_141 = arith.constant 2 : index
    %c0_142 = arith.constant 0 : index
    %c128_143 = arith.constant 128 : index
    %713 = vector.load %arg12[%c2_141, %c0_142, %c128_143] : memref<4x2x512xf32, #tpu.memory_space<vmem>>, vector<1x2x256xf32>
    %714 = vector.shape_cast %713 : vector<1x2x256xf32> to vector<2x256xf32>
    %715 = vector.shape_cast %712 : vector<2x256xf32> to vector<1x2x256xf32>
    tpu.vector_store %arg12[%c2_141, %c0_142, %c128_143], %715 {strides = array<i32>} : memref<4x2x512xf32, #tpu.memory_space<vmem>>, vector<1x2x256xf32>,
    %c3_144 = arith.constant 3 : index
    %716 = memref.load %arg5[%c3_144] : memref<4xf32, #tpu.memory_space<smem>>
    %717 = vector.broadcast %716 : f32 to vector<2x256xf32>
    %718 = arith.mulf %682, %717 : vector<2x256xf32>
    %c3_145 = arith.constant 3 : index
    %719 = memref.load %arg6[%c3_145] : memref<4xf32, #tpu.memory_space<smem>>
    %720 = vector.broadcast %719 : f32 to vector<2x256xf32>
    %721 = arith.addf %718, %720 : vector<2x256xf32>
    %cst_146 = arith.constant 0.000000e+00 : f32
    %722 = vector.broadcast %cst_146 : f32 to vector<2x256xf32>
    %723 = arith.maximumf %721, %722 : vector<2x256xf32>
    %c3_147 = arith.constant 3 : index
    %c0_148 = arith.constant 0 : index
    %c128_149 = arith.constant 128 : index
    %724 = vector.load %arg12[%c3_147, %c0_148, %c128_149] : memref<4x2x512xf32, #tpu.memory_space<vmem>>, vector<1x2x256xf32>
    %725 = vector.shape_cast %724 : vector<1x2x256xf32> to vector<2x256xf32>
    %726 = vector.shape_cast %723 : vector<2x256xf32> to vector<1x2x256xf32>
    tpu.vector_store %arg12[%c3_147, %c0_148, %c128_149], %726 {strides = array<i32>} : memref<4x2x512xf32, #tpu.memory_space<vmem>>, vector<1x2x256xf32>,
    %cst_150 = arith.constant 0.000000e+00 : f32
    %727 = vector.broadcast %cst_150 : f32 to vector<2x256xf32>
    %cst_151 = arith.constant 0.000000e+00 : f32
    %728 = vector.broadcast %cst_151 : f32 to vector<2x256xf32>
    %cst_152 = arith.constant 0.000000e+00 : f32
    %729 = vector.broadcast %cst_152 : f32 to vector<2x256xf32>
    %cst_153 = arith.constant 0.000000e+00 : f32
    %730 = vector.broadcast %cst_153 : f32 to vector<2x256xf32>
    %c0_154 = arith.constant 0 : index
    %c0_155 = arith.constant 0 : index
    %c111_156 = arith.constant 111 : index
    %731 = vector.load %arg12[%c0_154, %c0_155, %c111_156] : memref<4x2x512xf32, #tpu.memory_space<vmem>>, vector<1x2x256xf32>
    %732 = vector.shape_cast %731 : vector<1x2x256xf32> to vector<2x256xf32>
    %733 = arith.mulf %732, %0 : vector<2x256xf32>
    %c0_157 = arith.constant 0 : index
    %734 = memref.load %arg7[%c0_157] : memref<144xf32, #tpu.memory_space<smem>>
    %735 = vector.broadcast %734 : f32 to vector<2x256xf32>
    %736 = arith.mulf %735, %733 : vector<2x256xf32>
    %737 = arith.addf %727, %736 : vector<2x256xf32>
    %c1_158 = arith.constant 1 : index
    %738 = memref.load %arg7[%c1_158] : memref<144xf32, #tpu.memory_space<smem>>
    %739 = vector.broadcast %738 : f32 to vector<2x256xf32>
    %740 = arith.mulf %739, %733 : vector<2x256xf32>
    %741 = arith.addf %728, %740 : vector<2x256xf32>
    %c2_159 = arith.constant 2 : index
    %742 = memref.load %arg7[%c2_159] : memref<144xf32, #tpu.memory_space<smem>>
    %743 = vector.broadcast %742 : f32 to vector<2x256xf32>
    %744 = arith.mulf %743, %733 : vector<2x256xf32>
    %745 = arith.addf %729, %744 : vector<2x256xf32>
    %c3_160 = arith.constant 3 : index
    %746 = memref.load %arg7[%c3_160] : memref<144xf32, #tpu.memory_space<smem>>
    %747 = vector.broadcast %746 : f32 to vector<2x256xf32>
    %748 = arith.mulf %747, %733 : vector<2x256xf32>
    %749 = arith.addf %730, %748 : vector<2x256xf32>
    %c1_161 = arith.constant 1 : index
    %c0_162 = arith.constant 0 : index
    %c111_163 = arith.constant 111 : index
    %750 = vector.load %arg12[%c1_161, %c0_162, %c111_163] : memref<4x2x512xf32, #tpu.memory_space<vmem>>, vector<1x2x256xf32>
    %751 = vector.shape_cast %750 : vector<1x2x256xf32> to vector<2x256xf32>
    %752 = arith.mulf %751, %0 : vector<2x256xf32>
    %c4_164 = arith.constant 4 : index
    %753 = memref.load %arg7[%c4_164] : memref<144xf32, #tpu.memory_space<smem>>
    %754 = vector.broadcast %753 : f32 to vector<2x256xf32>
    %755 = arith.mulf %754, %752 : vector<2x256xf32>
    %756 = arith.addf %737, %755 : vector<2x256xf32>
    %c5_165 = arith.constant 5 : index
    %757 = memref.load %arg7[%c5_165] : memref<144xf32, #tpu.memory_space<smem>>
    %758 = vector.broadcast %757 : f32 to vector<2x256xf32>
    %759 = arith.mulf %758, %752 : vector<2x256xf32>
    %760 = arith.addf %741, %759 : vector<2x256xf32>
    %c6_166 = arith.constant 6 : index
    %761 = memref.load %arg7[%c6_166] : memref<144xf32, #tpu.memory_space<smem>>
    %762 = vector.broadcast %761 : f32 to vector<2x256xf32>
    %763 = arith.mulf %762, %752 : vector<2x256xf32>
    %764 = arith.addf %745, %763 : vector<2x256xf32>
    %c7_167 = arith.constant 7 : index
    %765 = memref.load %arg7[%c7_167] : memref<144xf32, #tpu.memory_space<smem>>
    %766 = vector.broadcast %765 : f32 to vector<2x256xf32>
    %767 = arith.mulf %766, %752 : vector<2x256xf32>
    %768 = arith.addf %749, %767 : vector<2x256xf32>
    %c2_168 = arith.constant 2 : index
    %c0_169 = arith.constant 0 : index
    %c111_170 = arith.constant 111 : index
    %769 = vector.load %arg12[%c2_168, %c0_169, %c111_170] : memref<4x2x512xf32, #tpu.memory_space<vmem>>, vector<1x2x256xf32>
    %770 = vector.shape_cast %769 : vector<1x2x256xf32> to vector<2x256xf32>
    %771 = arith.mulf %770, %0 : vector<2x256xf32>
    %c8_171 = arith.constant 8 : index
    %772 = memref.load %arg7[%c8_171] : memref<144xf32, #tpu.memory_space<smem>>
    %773 = vector.broadcast %772 : f32 to vector<2x256xf32>
    %774 = arith.mulf %773, %771 : vector<2x256xf32>
    %775 = arith.addf %756, %774 : vector<2x256xf32>
    %c9_172 = arith.constant 9 : index
    %776 = memref.load %arg7[%c9_172] : memref<144xf32, #tpu.memory_space<smem>>
    %777 = vector.broadcast %776 : f32 to vector<2x256xf32>
    %778 = arith.mulf %777, %771 : vector<2x256xf32>
    %779 = arith.addf %760, %778 : vector<2x256xf32>
    %c10_173 = arith.constant 10 : index
    %780 = memref.load %arg7[%c10_173] : memref<144xf32, #tpu.memory_space<smem>>
    %781 = vector.broadcast %780 : f32 to vector<2x256xf32>
    %782 = arith.mulf %781, %771 : vector<2x256xf32>
    %783 = arith.addf %764, %782 : vector<2x256xf32>
    %c11_174 = arith.constant 11 : index
    %784 = memref.load %arg7[%c11_174] : memref<144xf32, #tpu.memory_space<smem>>
    %785 = vector.broadcast %784 : f32 to vector<2x256xf32>
    %786 = arith.mulf %785, %771 : vector<2x256xf32>
    %787 = arith.addf %768, %786 : vector<2x256xf32>
    %c3_175 = arith.constant 3 : index
    %c0_176 = arith.constant 0 : index
    %c111_177 = arith.constant 111 : index
    %788 = vector.load %arg12[%c3_175, %c0_176, %c111_177] : memref<4x2x512xf32, #tpu.memory_space<vmem>>, vector<1x2x256xf32>
    %789 = vector.shape_cast %788 : vector<1x2x256xf32> to vector<2x256xf32>
    %790 = arith.mulf %789, %0 : vector<2x256xf32>
    %c12_178 = arith.constant 12 : index
    %791 = memref.load %arg7[%c12_178] : memref<144xf32, #tpu.memory_space<smem>>
    %792 = vector.broadcast %791 : f32 to vector<2x256xf32>
    %793 = arith.mulf %792, %790 : vector<2x256xf32>
    %794 = arith.addf %775, %793 : vector<2x256xf32>
    %c13_179 = arith.constant 13 : index
    %795 = memref.load %arg7[%c13_179] : memref<144xf32, #tpu.memory_space<smem>>
    %796 = vector.broadcast %795 : f32 to vector<2x256xf32>
    %797 = arith.mulf %796, %790 : vector<2x256xf32>
    %798 = arith.addf %779, %797 : vector<2x256xf32>
    %c14_180 = arith.constant 14 : index
    %799 = memref.load %arg7[%c14_180] : memref<144xf32, #tpu.memory_space<smem>>
    %800 = vector.broadcast %799 : f32 to vector<2x256xf32>
    %801 = arith.mulf %800, %790 : vector<2x256xf32>
    %802 = arith.addf %783, %801 : vector<2x256xf32>
    %c15_181 = arith.constant 15 : index
    %803 = memref.load %arg7[%c15_181] : memref<144xf32, #tpu.memory_space<smem>>
    %804 = vector.broadcast %803 : f32 to vector<2x256xf32>
    %805 = arith.mulf %804, %790 : vector<2x256xf32>
    %806 = arith.addf %787, %805 : vector<2x256xf32>
    %c0_182 = arith.constant 0 : index
    %c0_183 = arith.constant 0 : index
    %c112_184 = arith.constant 112 : index
    %807 = vector.load %arg12[%c0_182, %c0_183, %c112_184] : memref<4x2x512xf32, #tpu.memory_space<vmem>>, vector<1x2x256xf32>
    %808 = vector.shape_cast %807 : vector<1x2x256xf32> to vector<2x256xf32>
    %c16_185 = arith.constant 16 : index
    %809 = memref.load %arg7[%c16_185] : memref<144xf32, #tpu.memory_space<smem>>
    %810 = vector.broadcast %809 : f32 to vector<2x256xf32>
    %811 = arith.mulf %810, %808 : vector<2x256xf32>
    %812 = arith.addf %794, %811 : vector<2x256xf32>
    %c17_186 = arith.constant 17 : index
    %813 = memref.load %arg7[%c17_186] : memref<144xf32, #tpu.memory_space<smem>>
    %814 = vector.broadcast %813 : f32 to vector<2x256xf32>
    %815 = arith.mulf %814, %808 : vector<2x256xf32>
    %816 = arith.addf %798, %815 : vector<2x256xf32>
    %c18_187 = arith.constant 18 : index
    %817 = memref.load %arg7[%c18_187] : memref<144xf32, #tpu.memory_space<smem>>
    %818 = vector.broadcast %817 : f32 to vector<2x256xf32>
    %819 = arith.mulf %818, %808 : vector<2x256xf32>
    %820 = arith.addf %802, %819 : vector<2x256xf32>
    %c19_188 = arith.constant 19 : index
    %821 = memref.load %arg7[%c19_188] : memref<144xf32, #tpu.memory_space<smem>>
    %822 = vector.broadcast %821 : f32 to vector<2x256xf32>
    %823 = arith.mulf %822, %808 : vector<2x256xf32>
    %824 = arith.addf %806, %823 : vector<2x256xf32>
    %c1_189 = arith.constant 1 : index
    %c0_190 = arith.constant 0 : index
    %c112_191 = arith.constant 112 : index
    %825 = vector.load %arg12[%c1_189, %c0_190, %c112_191] : memref<4x2x512xf32, #tpu.memory_space<vmem>>, vector<1x2x256xf32>
    %826 = vector.shape_cast %825 : vector<1x2x256xf32> to vector<2x256xf32>
    %c20_192 = arith.constant 20 : index
    %827 = memref.load %arg7[%c20_192] : memref<144xf32, #tpu.memory_space<smem>>
    %828 = vector.broadcast %827 : f32 to vector<2x256xf32>
    %829 = arith.mulf %828, %826 : vector<2x256xf32>
    %830 = arith.addf %812, %829 : vector<2x256xf32>
    %c21_193 = arith.constant 21 : index
    %831 = memref.load %arg7[%c21_193] : memref<144xf32, #tpu.memory_space<smem>>
    %832 = vector.broadcast %831 : f32 to vector<2x256xf32>
    %833 = arith.mulf %832, %826 : vector<2x256xf32>
    %834 = arith.addf %816, %833 : vector<2x256xf32>
    %c22_194 = arith.constant 22 : index
    %835 = memref.load %arg7[%c22_194] : memref<144xf32, #tpu.memory_space<smem>>
    %836 = vector.broadcast %835 : f32 to vector<2x256xf32>
    %837 = arith.mulf %836, %826 : vector<2x256xf32>
    %838 = arith.addf %820, %837 : vector<2x256xf32>
    %c23_195 = arith.constant 23 : index
    %839 = memref.load %arg7[%c23_195] : memref<144xf32, #tpu.memory_space<smem>>
    %840 = vector.broadcast %839 : f32 to vector<2x256xf32>
    %841 = arith.mulf %840, %826 : vector<2x256xf32>
    %842 = arith.addf %824, %841 : vector<2x256xf32>
    %c2_196 = arith.constant 2 : index
    %c0_197 = arith.constant 0 : index
    %c112_198 = arith.constant 112 : index
    %843 = vector.load %arg12[%c2_196, %c0_197, %c112_198] : memref<4x2x512xf32, #tpu.memory_space<vmem>>, vector<1x2x256xf32>
    %844 = vector.shape_cast %843 : vector<1x2x256xf32> to vector<2x256xf32>
    %c24_199 = arith.constant 24 : index
    %845 = memref.load %arg7[%c24_199] : memref<144xf32, #tpu.memory_space<smem>>
    %846 = vector.broadcast %845 : f32 to vector<2x256xf32>
    %847 = arith.mulf %846, %844 : vector<2x256xf32>
    %848 = arith.addf %830, %847 : vector<2x256xf32>
    %c25_200 = arith.constant 25 : index
    %849 = memref.load %arg7[%c25_200] : memref<144xf32, #tpu.memory_space<smem>>
    %850 = vector.broadcast %849 : f32 to vector<2x256xf32>
    %851 = arith.mulf %850, %844 : vector<2x256xf32>
    %852 = arith.addf %834, %851 : vector<2x256xf32>
    %c26_201 = arith.constant 26 : index
    %853 = memref.load %arg7[%c26_201] : memref<144xf32, #tpu.memory_space<smem>>
    %854 = vector.broadcast %853 : f32 to vector<2x256xf32>
    %855 = arith.mulf %854, %844 : vector<2x256xf32>
    %856 = arith.addf %838, %855 : vector<2x256xf32>
    %c27_202 = arith.constant 27 : index
    %857 = memref.load %arg7[%c27_202] : memref<144xf32, #tpu.memory_space<smem>>
    %858 = vector.broadcast %857 : f32 to vector<2x256xf32>
    %859 = arith.mulf %858, %844 : vector<2x256xf32>
    %860 = arith.addf %842, %859 : vector<2x256xf32>
    %c3_203 = arith.constant 3 : index
    %c0_204 = arith.constant 0 : index
    %c112_205 = arith.constant 112 : index
    %861 = vector.load %arg12[%c3_203, %c0_204, %c112_205] : memref<4x2x512xf32, #tpu.memory_space<vmem>>, vector<1x2x256xf32>
    %862 = vector.shape_cast %861 : vector<1x2x256xf32> to vector<2x256xf32>
    %c28_206 = arith.constant 28 : index
    %863 = memref.load %arg7[%c28_206] : memref<144xf32, #tpu.memory_space<smem>>
    %864 = vector.broadcast %863 : f32 to vector<2x256xf32>
    %865 = arith.mulf %864, %862 : vector<2x256xf32>
    %866 = arith.addf %848, %865 : vector<2x256xf32>
    %c29_207 = arith.constant 29 : index
    %867 = memref.load %arg7[%c29_207] : memref<144xf32, #tpu.memory_space<smem>>
    %868 = vector.broadcast %867 : f32 to vector<2x256xf32>
    %869 = arith.mulf %868, %862 : vector<2x256xf32>
    %870 = arith.addf %852, %869 : vector<2x256xf32>
    %c30_208 = arith.constant 30 : index
    %871 = memref.load %arg7[%c30_208] : memref<144xf32, #tpu.memory_space<smem>>
    %872 = vector.broadcast %871 : f32 to vector<2x256xf32>
    %873 = arith.mulf %872, %862 : vector<2x256xf32>
    %874 = arith.addf %856, %873 : vector<2x256xf32>
    %c31_209 = arith.constant 31 : index
    %875 = memref.load %arg7[%c31_209] : memref<144xf32, #tpu.memory_space<smem>>
    %876 = vector.broadcast %875 : f32 to vector<2x256xf32>
    %877 = arith.mulf %876, %862 : vector<2x256xf32>
    %878 = arith.addf %860, %877 : vector<2x256xf32>
    %c0_210 = arith.constant 0 : index
    %c0_211 = arith.constant 0 : index
    %c113_212 = arith.constant 113 : index
    %879 = vector.load %arg12[%c0_210, %c0_211, %c113_212] : memref<4x2x512xf32, #tpu.memory_space<vmem>>, vector<1x2x256xf32>
    %880 = vector.shape_cast %879 : vector<1x2x256xf32> to vector<2x256xf32>
    %881 = arith.mulf %880, %1 : vector<2x256xf32>
    %c32_213 = arith.constant 32 : index
    %882 = memref.load %arg7[%c32_213] : memref<144xf32, #tpu.memory_space<smem>>
    %883 = vector.broadcast %882 : f32 to vector<2x256xf32>
    %884 = arith.mulf %883, %881 : vector<2x256xf32>
    %885 = arith.addf %866, %884 : vector<2x256xf32>
    %c33_214 = arith.constant 33 : index
    %886 = memref.load %arg7[%c33_214] : memref<144xf32, #tpu.memory_space<smem>>
    %887 = vector.broadcast %886 : f32 to vector<2x256xf32>
    %888 = arith.mulf %887, %881 : vector<2x256xf32>
    %889 = arith.addf %870, %888 : vector<2x256xf32>
    %c34_215 = arith.constant 34 : index
    %890 = memref.load %arg7[%c34_215] : memref<144xf32, #tpu.memory_space<smem>>
    %891 = vector.broadcast %890 : f32 to vector<2x256xf32>
    %892 = arith.mulf %891, %881 : vector<2x256xf32>
    %893 = arith.addf %874, %892 : vector<2x256xf32>
    %c35_216 = arith.constant 35 : index
    %894 = memref.load %arg7[%c35_216] : memref<144xf32, #tpu.memory_space<smem>>
    %895 = vector.broadcast %894 : f32 to vector<2x256xf32>
    %896 = arith.mulf %895, %881 : vector<2x256xf32>
    %897 = arith.addf %878, %896 : vector<2x256xf32>
    %c1_217 = arith.constant 1 : index
    %c0_218 = arith.constant 0 : index
    %c113_219 = arith.constant 113 : index
    %898 = vector.load %arg12[%c1_217, %c0_218, %c113_219] : memref<4x2x512xf32, #tpu.memory_space<vmem>>, vector<1x2x256xf32>
    %899 = vector.shape_cast %898 : vector<1x2x256xf32> to vector<2x256xf32>
    %900 = arith.mulf %899, %1 : vector<2x256xf32>
    %c36_220 = arith.constant 36 : index
    %901 = memref.load %arg7[%c36_220] : memref<144xf32, #tpu.memory_space<smem>>
    %902 = vector.broadcast %901 : f32 to vector<2x256xf32>
    %903 = arith.mulf %902, %900 : vector<2x256xf32>
    %904 = arith.addf %885, %903 : vector<2x256xf32>
    %c37_221 = arith.constant 37 : index
    %905 = memref.load %arg7[%c37_221] : memref<144xf32, #tpu.memory_space<smem>>
    %906 = vector.broadcast %905 : f32 to vector<2x256xf32>
    %907 = arith.mulf %906, %900 : vector<2x256xf32>
    %908 = arith.addf %889, %907 : vector<2x256xf32>
    %c38_222 = arith.constant 38 : index
    %909 = memref.load %arg7[%c38_222] : memref<144xf32, #tpu.memory_space<smem>>
    %910 = vector.broadcast %909 : f32 to vector<2x256xf32>
    %911 = arith.mulf %910, %900 : vector<2x256xf32>
    %912 = arith.addf %893, %911 : vector<2x256xf32>
    %c39_223 = arith.constant 39 : index
    %913 = memref.load %arg7[%c39_223] : memref<144xf32, #tpu.memory_space<smem>>
    %914 = vector.broadcast %913 : f32 to vector<2x256xf32>
    %915 = arith.mulf %914, %900 : vector<2x256xf32>
    %916 = arith.addf %897, %915 : vector<2x256xf32>
    %c2_224 = arith.constant 2 : index
    %c0_225 = arith.constant 0 : index
    %c113_226 = arith.constant 113 : index
    %917 = vector.load %arg12[%c2_224, %c0_225, %c113_226] : memref<4x2x512xf32, #tpu.memory_space<vmem>>, vector<1x2x256xf32>
    %918 = vector.shape_cast %917 : vector<1x2x256xf32> to vector<2x256xf32>
    %919 = arith.mulf %918, %1 : vector<2x256xf32>
    %c40_227 = arith.constant 40 : index
    %920 = memref.load %arg7[%c40_227] : memref<144xf32, #tpu.memory_space<smem>>
    %921 = vector.broadcast %920 : f32 to vector<2x256xf32>
    %922 = arith.mulf %921, %919 : vector<2x256xf32>
    %923 = arith.addf %904, %922 : vector<2x256xf32>
    %c41_228 = arith.constant 41 : index
    %924 = memref.load %arg7[%c41_228] : memref<144xf32, #tpu.memory_space<smem>>
    %925 = vector.broadcast %924 : f32 to vector<2x256xf32>
    %926 = arith.mulf %925, %919 : vector<2x256xf32>
    %927 = arith.addf %908, %926 : vector<2x256xf32>
    %c42_229 = arith.constant 42 : index
    %928 = memref.load %arg7[%c42_229] : memref<144xf32, #tpu.memory_space<smem>>
    %929 = vector.broadcast %928 : f32 to vector<2x256xf32>
    %930 = arith.mulf %929, %919 : vector<2x256xf32>
    %931 = arith.addf %912, %930 : vector<2x256xf32>
    %c43_230 = arith.constant 43 : index
    %932 = memref.load %arg7[%c43_230] : memref<144xf32, #tpu.memory_space<smem>>
    %933 = vector.broadcast %932 : f32 to vector<2x256xf32>
    %934 = arith.mulf %933, %919 : vector<2x256xf32>
    %935 = arith.addf %916, %934 : vector<2x256xf32>
    %c3_231 = arith.constant 3 : index
    %c0_232 = arith.constant 0 : index
    %c113_233 = arith.constant 113 : index
    %936 = vector.load %arg12[%c3_231, %c0_232, %c113_233] : memref<4x2x512xf32, #tpu.memory_space<vmem>>, vector<1x2x256xf32>
    %937 = vector.shape_cast %936 : vector<1x2x256xf32> to vector<2x256xf32>
    %938 = arith.mulf %937, %1 : vector<2x256xf32>
    %c44_234 = arith.constant 44 : index
    %939 = memref.load %arg7[%c44_234] : memref<144xf32, #tpu.memory_space<smem>>
    %940 = vector.broadcast %939 : f32 to vector<2x256xf32>
    %941 = arith.mulf %940, %938 : vector<2x256xf32>
    %942 = arith.addf %923, %941 : vector<2x256xf32>
    %c45_235 = arith.constant 45 : index
    %943 = memref.load %arg7[%c45_235] : memref<144xf32, #tpu.memory_space<smem>>
    %944 = vector.broadcast %943 : f32 to vector<2x256xf32>
    %945 = arith.mulf %944, %938 : vector<2x256xf32>
    %946 = arith.addf %927, %945 : vector<2x256xf32>
    %c46_236 = arith.constant 46 : index
    %947 = memref.load %arg7[%c46_236] : memref<144xf32, #tpu.memory_space<smem>>
    %948 = vector.broadcast %947 : f32 to vector<2x256xf32>
    %949 = arith.mulf %948, %938 : vector<2x256xf32>
    %950 = arith.addf %931, %949 : vector<2x256xf32>
    %c47_237 = arith.constant 47 : index
    %951 = memref.load %arg7[%c47_237] : memref<144xf32, #tpu.memory_space<smem>>
    %952 = vector.broadcast %951 : f32 to vector<2x256xf32>
    %953 = arith.mulf %952, %938 : vector<2x256xf32>
    %954 = arith.addf %935, %953 : vector<2x256xf32>
    %c0_238 = arith.constant 0 : index
    %c0_239 = arith.constant 0 : index
    %c127_240 = arith.constant 127 : index
    %955 = vector.load %arg12[%c0_238, %c0_239, %c127_240] : memref<4x2x512xf32, #tpu.memory_space<vmem>>, vector<1x2x256xf32>
    %956 = vector.shape_cast %955 : vector<1x2x256xf32> to vector<2x256xf32>
    %957 = arith.mulf %956, %0 : vector<2x256xf32>
    %c48_241 = arith.constant 48 : index
    %958 = memref.load %arg7[%c48_241] : memref<144xf32, #tpu.memory_space<smem>>
    %959 = vector.broadcast %958 : f32 to vector<2x256xf32>
    %960 = arith.mulf %959, %957 : vector<2x256xf32>
    %961 = arith.addf %942, %960 : vector<2x256xf32>
    %c49_242 = arith.constant 49 : index
    %962 = memref.load %arg7[%c49_242] : memref<144xf32, #tpu.memory_space<smem>>
    %963 = vector.broadcast %962 : f32 to vector<2x256xf32>
    %964 = arith.mulf %963, %957 : vector<2x256xf32>
    %965 = arith.addf %946, %964 : vector<2x256xf32>
    %c50_243 = arith.constant 50 : index
    %966 = memref.load %arg7[%c50_243] : memref<144xf32, #tpu.memory_space<smem>>
    %967 = vector.broadcast %966 : f32 to vector<2x256xf32>
    %968 = arith.mulf %967, %957 : vector<2x256xf32>
    %969 = arith.addf %950, %968 : vector<2x256xf32>
    %c51_244 = arith.constant 51 : index
    %970 = memref.load %arg7[%c51_244] : memref<144xf32, #tpu.memory_space<smem>>
    %971 = vector.broadcast %970 : f32 to vector<2x256xf32>
    %972 = arith.mulf %971, %957 : vector<2x256xf32>
    %973 = arith.addf %954, %972 : vector<2x256xf32>
    %c1_245 = arith.constant 1 : index
    %c0_246 = arith.constant 0 : index
    %c127_247 = arith.constant 127 : index
    %974 = vector.load %arg12[%c1_245, %c0_246, %c127_247] : memref<4x2x512xf32, #tpu.memory_space<vmem>>, vector<1x2x256xf32>
    %975 = vector.shape_cast %974 : vector<1x2x256xf32> to vector<2x256xf32>
    %976 = arith.mulf %975, %0 : vector<2x256xf32>
    %c52_248 = arith.constant 52 : index
    %977 = memref.load %arg7[%c52_248] : memref<144xf32, #tpu.memory_space<smem>>
    %978 = vector.broadcast %977 : f32 to vector<2x256xf32>
    %979 = arith.mulf %978, %976 : vector<2x256xf32>
    %980 = arith.addf %961, %979 : vector<2x256xf32>
    %c53_249 = arith.constant 53 : index
    %981 = memref.load %arg7[%c53_249] : memref<144xf32, #tpu.memory_space<smem>>
    %982 = vector.broadcast %981 : f32 to vector<2x256xf32>
    %983 = arith.mulf %982, %976 : vector<2x256xf32>
    %984 = arith.addf %965, %983 : vector<2x256xf32>
    %c54_250 = arith.constant 54 : index
    %985 = memref.load %arg7[%c54_250] : memref<144xf32, #tpu.memory_space<smem>>
    %986 = vector.broadcast %985 : f32 to vector<2x256xf32>
    %987 = arith.mulf %986, %976 : vector<2x256xf32>
    %988 = arith.addf %969, %987 : vector<2x256xf32>
    %c55_251 = arith.constant 55 : index
    %989 = memref.load %arg7[%c55_251] : memref<144xf32, #tpu.memory_space<smem>>
    %990 = vector.broadcast %989 : f32 to vector<2x256xf32>
    %991 = arith.mulf %990, %976 : vector<2x256xf32>
    %992 = arith.addf %973, %991 : vector<2x256xf32>
    %c2_252 = arith.constant 2 : index
    %c0_253 = arith.constant 0 : index
    %c127_254 = arith.constant 127 : index
    %993 = vector.load %arg12[%c2_252, %c0_253, %c127_254] : memref<4x2x512xf32, #tpu.memory_space<vmem>>, vector<1x2x256xf32>
    %994 = vector.shape_cast %993 : vector<1x2x256xf32> to vector<2x256xf32>
    %995 = arith.mulf %994, %0 : vector<2x256xf32>
    %c56_255 = arith.constant 56 : index
    %996 = memref.load %arg7[%c56_255] : memref<144xf32, #tpu.memory_space<smem>>
    %997 = vector.broadcast %996 : f32 to vector<2x256xf32>
    %998 = arith.mulf %997, %995 : vector<2x256xf32>
    %999 = arith.addf %980, %998 : vector<2x256xf32>
    %c57_256 = arith.constant 57 : index
    %1000 = memref.load %arg7[%c57_256] : memref<144xf32, #tpu.memory_space<smem>>
    %1001 = vector.broadcast %1000 : f32 to vector<2x256xf32>
    %1002 = arith.mulf %1001, %995 : vector<2x256xf32>
    %1003 = arith.addf %984, %1002 : vector<2x256xf32>
    %c58_257 = arith.constant 58 : index
    %1004 = memref.load %arg7[%c58_257] : memref<144xf32, #tpu.memory_space<smem>>
    %1005 = vector.broadcast %1004 : f32 to vector<2x256xf32>
    %1006 = arith.mulf %1005, %995 : vector<2x256xf32>
    %1007 = arith.addf %988, %1006 : vector<2x256xf32>
    %c59_258 = arith.constant 59 : index
    %1008 = memref.load %arg7[%c59_258] : memref<144xf32, #tpu.memory_space<smem>>
    %1009 = vector.broadcast %1008 : f32 to vector<2x256xf32>
    %1010 = arith.mulf %1009, %995 : vector<2x256xf32>
    %1011 = arith.addf %992, %1010 : vector<2x256xf32>
    %c3_259 = arith.constant 3 : index
    %c0_260 = arith.constant 0 : index
    %c127_261 = arith.constant 127 : index
    %1012 = vector.load %arg12[%c3_259, %c0_260, %c127_261] : memref<4x2x512xf32, #tpu.memory_space<vmem>>, vector<1x2x256xf32>
    %1013 = vector.shape_cast %1012 : vector<1x2x256xf32> to vector<2x256xf32>
    %1014 = arith.mulf %1013, %0 : vector<2x256xf32>
    %c60_262 = arith.constant 60 : index
    %1015 = memref.load %arg7[%c60_262] : memref<144xf32, #tpu.memory_space<smem>>
    %1016 = vector.broadcast %1015 : f32 to vector<2x256xf32>
    %1017 = arith.mulf %1016, %1014 : vector<2x256xf32>
    %1018 = arith.addf %999, %1017 : vector<2x256xf32>
    %c61_263 = arith.constant 61 : index
    %1019 = memref.load %arg7[%c61_263] : memref<144xf32, #tpu.memory_space<smem>>
    %1020 = vector.broadcast %1019 : f32 to vector<2x256xf32>
    %1021 = arith.mulf %1020, %1014 : vector<2x256xf32>
    %1022 = arith.addf %1003, %1021 : vector<2x256xf32>
    %c62_264 = arith.constant 62 : index
    %1023 = memref.load %arg7[%c62_264] : memref<144xf32, #tpu.memory_space<smem>>
    %1024 = vector.broadcast %1023 : f32 to vector<2x256xf32>
    %1025 = arith.mulf %1024, %1014 : vector<2x256xf32>
    %1026 = arith.addf %1007, %1025 : vector<2x256xf32>
    %c63_265 = arith.constant 63 : index
    %1027 = memref.load %arg7[%c63_265] : memref<144xf32, #tpu.memory_space<smem>>
    %1028 = vector.broadcast %1027 : f32 to vector<2x256xf32>
    %1029 = arith.mulf %1028, %1014 : vector<2x256xf32>
    %1030 = arith.addf %1011, %1029 : vector<2x256xf32>
    %c0_266 = arith.constant 0 : index
    %c0_267 = arith.constant 0 : index
    %c128_268 = arith.constant 128 : index
    %1031 = vector.load %arg12[%c0_266, %c0_267, %c128_268] : memref<4x2x512xf32, #tpu.memory_space<vmem>>, vector<1x2x256xf32>
    %1032 = vector.shape_cast %1031 : vector<1x2x256xf32> to vector<2x256xf32>
    %c64_269 = arith.constant 64 : index
    %1033 = memref.load %arg7[%c64_269] : memref<144xf32, #tpu.memory_space<smem>>
    %1034 = vector.broadcast %1033 : f32 to vector<2x256xf32>
    %1035 = arith.mulf %1034, %1032 : vector<2x256xf32>
    %1036 = arith.addf %1018, %1035 : vector<2x256xf32>
    %c65_270 = arith.constant 65 : index
    %1037 = memref.load %arg7[%c65_270] : memref<144xf32, #tpu.memory_space<smem>>
    %1038 = vector.broadcast %1037 : f32 to vector<2x256xf32>
    %1039 = arith.mulf %1038, %1032 : vector<2x256xf32>
    %1040 = arith.addf %1022, %1039 : vector<2x256xf32>
    %c66_271 = arith.constant 66 : index
    %1041 = memref.load %arg7[%c66_271] : memref<144xf32, #tpu.memory_space<smem>>
    %1042 = vector.broadcast %1041 : f32 to vector<2x256xf32>
    %1043 = arith.mulf %1042, %1032 : vector<2x256xf32>
    %1044 = arith.addf %1026, %1043 : vector<2x256xf32>
    %c67_272 = arith.constant 67 : index
    %1045 = memref.load %arg7[%c67_272] : memref<144xf32, #tpu.memory_space<smem>>
    %1046 = vector.broadcast %1045 : f32 to vector<2x256xf32>
    %1047 = arith.mulf %1046, %1032 : vector<2x256xf32>
    %1048 = arith.addf %1030, %1047 : vector<2x256xf32>
    %c1_273 = arith.constant 1 : index
    %c0_274 = arith.constant 0 : index
    %c128_275 = arith.constant 128 : index
    %1049 = vector.load %arg12[%c1_273, %c0_274, %c128_275] : memref<4x2x512xf32, #tpu.memory_space<vmem>>, vector<1x2x256xf32>
    %1050 = vector.shape_cast %1049 : vector<1x2x256xf32> to vector<2x256xf32>
    %c68_276 = arith.constant 68 : index
    %1051 = memref.load %arg7[%c68_276] : memref<144xf32, #tpu.memory_space<smem>>
    %1052 = vector.broadcast %1051 : f32 to vector<2x256xf32>
    %1053 = arith.mulf %1052, %1050 : vector<2x256xf32>
    %1054 = arith.addf %1036, %1053 : vector<2x256xf32>
    %c69_277 = arith.constant 69 : index
    %1055 = memref.load %arg7[%c69_277] : memref<144xf32, #tpu.memory_space<smem>>
    %1056 = vector.broadcast %1055 : f32 to vector<2x256xf32>
    %1057 = arith.mulf %1056, %1050 : vector<2x256xf32>
    %1058 = arith.addf %1040, %1057 : vector<2x256xf32>
    %c70_278 = arith.constant 70 : index
    %1059 = memref.load %arg7[%c70_278] : memref<144xf32, #tpu.memory_space<smem>>
    %1060 = vector.broadcast %1059 : f32 to vector<2x256xf32>
    %1061 = arith.mulf %1060, %1050 : vector<2x256xf32>
    %1062 = arith.addf %1044, %1061 : vector<2x256xf32>
    %c71_279 = arith.constant 71 : index
    %1063 = memref.load %arg7[%c71_279] : memref<144xf32, #tpu.memory_space<smem>>
    %1064 = vector.broadcast %1063 : f32 to vector<2x256xf32>
    %1065 = arith.mulf %1064, %1050 : vector<2x256xf32>
    %1066 = arith.addf %1048, %1065 : vector<2x256xf32>
    %c2_280 = arith.constant 2 : index
    %c0_281 = arith.constant 0 : index
    %c128_282 = arith.constant 128 : index
    %1067 = vector.load %arg12[%c2_280, %c0_281, %c128_282] : memref<4x2x512xf32, #tpu.memory_space<vmem>>, vector<1x2x256xf32>
    %1068 = vector.shape_cast %1067 : vector<1x2x256xf32> to vector<2x256xf32>
    %c72_283 = arith.constant 72 : index
    %1069 = memref.load %arg7[%c72_283] : memref<144xf32, #tpu.memory_space<smem>>
    %1070 = vector.broadcast %1069 : f32 to vector<2x256xf32>
    %1071 = arith.mulf %1070, %1068 : vector<2x256xf32>
    %1072 = arith.addf %1054, %1071 : vector<2x256xf32>
    %c73_284 = arith.constant 73 : index
    %1073 = memref.load %arg7[%c73_284] : memref<144xf32, #tpu.memory_space<smem>>
    %1074 = vector.broadcast %1073 : f32 to vector<2x256xf32>
    %1075 = arith.mulf %1074, %1068 : vector<2x256xf32>
    %1076 = arith.addf %1058, %1075 : vector<2x256xf32>
    %c74_285 = arith.constant 74 : index
    %1077 = memref.load %arg7[%c74_285] : memref<144xf32, #tpu.memory_space<smem>>
    %1078 = vector.broadcast %1077 : f32 to vector<2x256xf32>
    %1079 = arith.mulf %1078, %1068 : vector<2x256xf32>
    %1080 = arith.addf %1062, %1079 : vector<2x256xf32>
    %c75_286 = arith.constant 75 : index
    %1081 = memref.load %arg7[%c75_286] : memref<144xf32, #tpu.memory_space<smem>>
    %1082 = vector.broadcast %1081 : f32 to vector<2x256xf32>
    %1083 = arith.mulf %1082, %1068 : vector<2x256xf32>
    %1084 = arith.addf %1066, %1083 : vector<2x256xf32>
    %c3_287 = arith.constant 3 : index
    %c0_288 = arith.constant 0 : index
    %c128_289 = arith.constant 128 : index
    %1085 = vector.load %arg12[%c3_287, %c0_288, %c128_289] : memref<4x2x512xf32, #tpu.memory_space<vmem>>, vector<1x2x256xf32>
    %1086 = vector.shape_cast %1085 : vector<1x2x256xf32> to vector<2x256xf32>
    %c76_290 = arith.constant 76 : index
    %1087 = memref.load %arg7[%c76_290] : memref<144xf32, #tpu.memory_space<smem>>
    %1088 = vector.broadcast %1087 : f32 to vector<2x256xf32>
    %1089 = arith.mulf %1088, %1086 : vector<2x256xf32>
    %1090 = arith.addf %1072, %1089 : vector<2x256xf32>
    %c77_291 = arith.constant 77 : index
    %1091 = memref.load %arg7[%c77_291] : memref<144xf32, #tpu.memory_space<smem>>
    %1092 = vector.broadcast %1091 : f32 to vector<2x256xf32>
    %1093 = arith.mulf %1092, %1086 : vector<2x256xf32>
    %1094 = arith.addf %1076, %1093 : vector<2x256xf32>
    %c78_292 = arith.constant 78 : index
    %1095 = memref.load %arg7[%c78_292] : memref<144xf32, #tpu.memory_space<smem>>
    %1096 = vector.broadcast %1095 : f32 to vector<2x256xf32>
    %1097 = arith.mulf %1096, %1086 : vector<2x256xf32>
    %1098 = arith.addf %1080, %1097 : vector<2x256xf32>
    %c79_293 = arith.constant 79 : index
    %1099 = memref.load %arg7[%c79_293] : memref<144xf32, #tpu.memory_space<smem>>
    %1100 = vector.broadcast %1099 : f32 to vector<2x256xf32>
    %1101 = arith.mulf %1100, %1086 : vector<2x256xf32>
    %1102 = arith.addf %1084, %1101 : vector<2x256xf32>
    %c0_294 = arith.constant 0 : index
    %c0_295 = arith.constant 0 : index
    %c129_296 = arith.constant 129 : index
    %1103 = vector.load %arg12[%c0_294, %c0_295, %c129_296] : memref<4x2x512xf32, #tpu.memory_space<vmem>>, vector<1x2x256xf32>
    %1104 = vector.shape_cast %1103 : vector<1x2x256xf32> to vector<2x256xf32>
    %1105 = arith.mulf %1104, %1 : vector<2x256xf32>
    %c80_297 = arith.constant 80 : index
    %1106 = memref.load %arg7[%c80_297] : memref<144xf32, #tpu.memory_space<smem>>
    %1107 = vector.broadcast %1106 : f32 to vector<2x256xf32>
    %1108 = arith.mulf %1107, %1105 : vector<2x256xf32>
    %1109 = arith.addf %1090, %1108 : vector<2x256xf32>
    %c81_298 = arith.constant 81 : index
    %1110 = memref.load %arg7[%c81_298] : memref<144xf32, #tpu.memory_space<smem>>
    %1111 = vector.broadcast %1110 : f32 to vector<2x256xf32>
    %1112 = arith.mulf %1111, %1105 : vector<2x256xf32>
    %1113 = arith.addf %1094, %1112 : vector<2x256xf32>
    %c82_299 = arith.constant 82 : index
    %1114 = memref.load %arg7[%c82_299] : memref<144xf32, #tpu.memory_space<smem>>
    %1115 = vector.broadcast %1114 : f32 to vector<2x256xf32>
    %1116 = arith.mulf %1115, %1105 : vector<2x256xf32>
    %1117 = arith.addf %1098, %1116 : vector<2x256xf32>
    %c83_300 = arith.constant 83 : index
    %1118 = memref.load %arg7[%c83_300] : memref<144xf32, #tpu.memory_space<smem>>
    %1119 = vector.broadcast %1118 : f32 to vector<2x256xf32>
    %1120 = arith.mulf %1119, %1105 : vector<2x256xf32>
    %1121 = arith.addf %1102, %1120 : vector<2x256xf32>
    %c1_301 = arith.constant 1 : index
    %c0_302 = arith.constant 0 : index
    %c129_303 = arith.constant 129 : index
    %1122 = vector.load %arg12[%c1_301, %c0_302, %c129_303] : memref<4x2x512xf32, #tpu.memory_space<vmem>>, vector<1x2x256xf32>
    %1123 = vector.shape_cast %1122 : vector<1x2x256xf32> to vector<2x256xf32>
    %1124 = arith.mulf %1123, %1 : vector<2x256xf32>
    %c84_304 = arith.constant 84 : index
    %1125 = memref.load %arg7[%c84_304] : memref<144xf32, #tpu.memory_space<smem>>
    %1126 = vector.broadcast %1125 : f32 to vector<2x256xf32>
    %1127 = arith.mulf %1126, %1124 : vector<2x256xf32>
    %1128 = arith.addf %1109, %1127 : vector<2x256xf32>
    %c85_305 = arith.constant 85 : index
    %1129 = memref.load %arg7[%c85_305] : memref<144xf32, #tpu.memory_space<smem>>
    %1130 = vector.broadcast %1129 : f32 to vector<2x256xf32>
    %1131 = arith.mulf %1130, %1124 : vector<2x256xf32>
    %1132 = arith.addf %1113, %1131 : vector<2x256xf32>
    %c86_306 = arith.constant 86 : index
    %1133 = memref.load %arg7[%c86_306] : memref<144xf32, #tpu.memory_space<smem>>
    %1134 = vector.broadcast %1133 : f32 to vector<2x256xf32>
    %1135 = arith.mulf %1134, %1124 : vector<2x256xf32>
    %1136 = arith.addf %1117, %1135 : vector<2x256xf32>
    %c87_307 = arith.constant 87 : index
    %1137 = memref.load %arg7[%c87_307] : memref<144xf32, #tpu.memory_space<smem>>
    %1138 = vector.broadcast %1137 : f32 to vector<2x256xf32>
    %1139 = arith.mulf %1138, %1124 : vector<2x256xf32>
    %1140 = arith.addf %1121, %1139 : vector<2x256xf32>
    %c2_308 = arith.constant 2 : index
    %c0_309 = arith.constant 0 : index
    %c129_310 = arith.constant 129 : index
    %1141 = vector.load %arg12[%c2_308, %c0_309, %c129_310] : memref<4x2x512xf32, #tpu.memory_space<vmem>>, vector<1x2x256xf32>
    %1142 = vector.shape_cast %1141 : vector<1x2x256xf32> to vector<2x256xf32>
    %1143 = arith.mulf %1142, %1 : vector<2x256xf32>
    %c88_311 = arith.constant 88 : index
    %1144 = memref.load %arg7[%c88_311] : memref<144xf32, #tpu.memory_space<smem>>
    %1145 = vector.broadcast %1144 : f32 to vector<2x256xf32>
    %1146 = arith.mulf %1145, %1143 : vector<2x256xf32>
    %1147 = arith.addf %1128, %1146 : vector<2x256xf32>
    %c89_312 = arith.constant 89 : index
    %1148 = memref.load %arg7[%c89_312] : memref<144xf32, #tpu.memory_space<smem>>
    %1149 = vector.broadcast %1148 : f32 to vector<2x256xf32>
    %1150 = arith.mulf %1149, %1143 : vector<2x256xf32>
    %1151 = arith.addf %1132, %1150 : vector<2x256xf32>
    %c90_313 = arith.constant 90 : index
    %1152 = memref.load %arg7[%c90_313] : memref<144xf32, #tpu.memory_space<smem>>
    %1153 = vector.broadcast %1152 : f32 to vector<2x256xf32>
    %1154 = arith.mulf %1153, %1143 : vector<2x256xf32>
    %1155 = arith.addf %1136, %1154 : vector<2x256xf32>
    %c91_314 = arith.constant 91 : index
    %1156 = memref.load %arg7[%c91_314] : memref<144xf32, #tpu.memory_space<smem>>
    %1157 = vector.broadcast %1156 : f32 to vector<2x256xf32>
    %1158 = arith.mulf %1157, %1143 : vector<2x256xf32>
    %1159 = arith.addf %1140, %1158 : vector<2x256xf32>
    %c3_315 = arith.constant 3 : index
    %c0_316 = arith.constant 0 : index
    %c129_317 = arith.constant 129 : index
    %1160 = vector.load %arg12[%c3_315, %c0_316, %c129_317] : memref<4x2x512xf32, #tpu.memory_space<vmem>>, vector<1x2x256xf32>
    %1161 = vector.shape_cast %1160 : vector<1x2x256xf32> to vector<2x256xf32>
    %1162 = arith.mulf %1161, %1 : vector<2x256xf32>
    %c92_318 = arith.constant 92 : index
    %1163 = memref.load %arg7[%c92_318] : memref<144xf32, #tpu.memory_space<smem>>
    %1164 = vector.broadcast %1163 : f32 to vector<2x256xf32>
    %1165 = arith.mulf %1164, %1162 : vector<2x256xf32>
    %1166 = arith.addf %1147, %1165 : vector<2x256xf32>
    %c93_319 = arith.constant 93 : index
    %1167 = memref.load %arg7[%c93_319] : memref<144xf32, #tpu.memory_space<smem>>
    %1168 = vector.broadcast %1167 : f32 to vector<2x256xf32>
    %1169 = arith.mulf %1168, %1162 : vector<2x256xf32>
    %1170 = arith.addf %1151, %1169 : vector<2x256xf32>
    %c94_320 = arith.constant 94 : index
    %1171 = memref.load %arg7[%c94_320] : memref<144xf32, #tpu.memory_space<smem>>
    %1172 = vector.broadcast %1171 : f32 to vector<2x256xf32>
    %1173 = arith.mulf %1172, %1162 : vector<2x256xf32>
    %1174 = arith.addf %1155, %1173 : vector<2x256xf32>
    %c95_321 = arith.constant 95 : index
    %1175 = memref.load %arg7[%c95_321] : memref<144xf32, #tpu.memory_space<smem>>
    %1176 = vector.broadcast %1175 : f32 to vector<2x256xf32>
    %1177 = arith.mulf %1176, %1162 : vector<2x256xf32>
    %1178 = arith.addf %1159, %1177 : vector<2x256xf32>
    %c0_322 = arith.constant 0 : index
    %c0_323 = arith.constant 0 : index
    %c143_324 = arith.constant 143 : index
    %1179 = vector.load %arg12[%c0_322, %c0_323, %c143_324] : memref<4x2x512xf32, #tpu.memory_space<vmem>>, vector<1x2x256xf32>
    %1180 = vector.shape_cast %1179 : vector<1x2x256xf32> to vector<2x256xf32>
    %1181 = arith.mulf %1180, %0 : vector<2x256xf32>
    %c96_325 = arith.constant 96 : index
    %1182 = memref.load %arg7[%c96_325] : memref<144xf32, #tpu.memory_space<smem>>
    %1183 = vector.broadcast %1182 : f32 to vector<2x256xf32>
    %1184 = arith.mulf %1183, %1181 : vector<2x256xf32>
    %1185 = arith.addf %1166, %1184 : vector<2x256xf32>
    %c97_326 = arith.constant 97 : index
    %1186 = memref.load %arg7[%c97_326] : memref<144xf32, #tpu.memory_space<smem>>
    %1187 = vector.broadcast %1186 : f32 to vector<2x256xf32>
    %1188 = arith.mulf %1187, %1181 : vector<2x256xf32>
    %1189 = arith.addf %1170, %1188 : vector<2x256xf32>
    %c98_327 = arith.constant 98 : index
    %1190 = memref.load %arg7[%c98_327] : memref<144xf32, #tpu.memory_space<smem>>
    %1191 = vector.broadcast %1190 : f32 to vector<2x256xf32>
    %1192 = arith.mulf %1191, %1181 : vector<2x256xf32>
    %1193 = arith.addf %1174, %1192 : vector<2x256xf32>
    %c99_328 = arith.constant 99 : index
    %1194 = memref.load %arg7[%c99_328] : memref<144xf32, #tpu.memory_space<smem>>
    %1195 = vector.broadcast %1194 : f32 to vector<2x256xf32>
    %1196 = arith.mulf %1195, %1181 : vector<2x256xf32>
    %1197 = arith.addf %1178, %1196 : vector<2x256xf32>
    %c1_329 = arith.constant 1 : index
    %c0_330 = arith.constant 0 : index
    %c143_331 = arith.constant 143 : index
    %1198 = vector.load %arg12[%c1_329, %c0_330, %c143_331] : memref<4x2x512xf32, #tpu.memory_space<vmem>>, vector<1x2x256xf32>
    %1199 = vector.shape_cast %1198 : vector<1x2x256xf32> to vector<2x256xf32>
    %1200 = arith.mulf %1199, %0 : vector<2x256xf32>
    %c100_332 = arith.constant 100 : index
    %1201 = memref.load %arg7[%c100_332] : memref<144xf32, #tpu.memory_space<smem>>
    %1202 = vector.broadcast %1201 : f32 to vector<2x256xf32>
    %1203 = arith.mulf %1202, %1200 : vector<2x256xf32>
    %1204 = arith.addf %1185, %1203 : vector<2x256xf32>
    %c101_333 = arith.constant 101 : index
    %1205 = memref.load %arg7[%c101_333] : memref<144xf32, #tpu.memory_space<smem>>
    %1206 = vector.broadcast %1205 : f32 to vector<2x256xf32>
    %1207 = arith.mulf %1206, %1200 : vector<2x256xf32>
    %1208 = arith.addf %1189, %1207 : vector<2x256xf32>
    %c102_334 = arith.constant 102 : index
    %1209 = memref.load %arg7[%c102_334] : memref<144xf32, #tpu.memory_space<smem>>
    %1210 = vector.broadcast %1209 : f32 to vector<2x256xf32>
    %1211 = arith.mulf %1210, %1200 : vector<2x256xf32>
    %1212 = arith.addf %1193, %1211 : vector<2x256xf32>
    %c103_335 = arith.constant 103 : index
    %1213 = memref.load %arg7[%c103_335] : memref<144xf32, #tpu.memory_space<smem>>
    %1214 = vector.broadcast %1213 : f32 to vector<2x256xf32>
    %1215 = arith.mulf %1214, %1200 : vector<2x256xf32>
    %1216 = arith.addf %1197, %1215 : vector<2x256xf32>
    %c2_336 = arith.constant 2 : index
    %c0_337 = arith.constant 0 : index
    %c143_338 = arith.constant 143 : index
    %1217 = vector.load %arg12[%c2_336, %c0_337, %c143_338] : memref<4x2x512xf32, #tpu.memory_space<vmem>>, vector<1x2x256xf32>
    %1218 = vector.shape_cast %1217 : vector<1x2x256xf32> to vector<2x256xf32>
    %1219 = arith.mulf %1218, %0 : vector<2x256xf32>
    %c104_339 = arith.constant 104 : index
    %1220 = memref.load %arg7[%c104_339] : memref<144xf32, #tpu.memory_space<smem>>
    %1221 = vector.broadcast %1220 : f32 to vector<2x256xf32>
    %1222 = arith.mulf %1221, %1219 : vector<2x256xf32>
    %1223 = arith.addf %1204, %1222 : vector<2x256xf32>
    %c105_340 = arith.constant 105 : index
    %1224 = memref.load %arg7[%c105_340] : memref<144xf32, #tpu.memory_space<smem>>
    %1225 = vector.broadcast %1224 : f32 to vector<2x256xf32>
    %1226 = arith.mulf %1225, %1219 : vector<2x256xf32>
    %1227 = arith.addf %1208, %1226 : vector<2x256xf32>
    %c106_341 = arith.constant 106 : index
    %1228 = memref.load %arg7[%c106_341] : memref<144xf32, #tpu.memory_space<smem>>
    %1229 = vector.broadcast %1228 : f32 to vector<2x256xf32>
    %1230 = arith.mulf %1229, %1219 : vector<2x256xf32>
    %1231 = arith.addf %1212, %1230 : vector<2x256xf32>
    %c107_342 = arith.constant 107 : index
    %1232 = memref.load %arg7[%c107_342] : memref<144xf32, #tpu.memory_space<smem>>
    %1233 = vector.broadcast %1232 : f32 to vector<2x256xf32>
    %1234 = arith.mulf %1233, %1219 : vector<2x256xf32>
    %1235 = arith.addf %1216, %1234 : vector<2x256xf32>
    %c3_343 = arith.constant 3 : index
    %c0_344 = arith.constant 0 : index
    %c143_345 = arith.constant 143 : index
    %1236 = vector.load %arg12[%c3_343, %c0_344, %c143_345] : memref<4x2x512xf32, #tpu.memory_space<vmem>>, vector<1x2x256xf32>
    %1237 = vector.shape_cast %1236 : vector<1x2x256xf32> to vector<2x256xf32>
    %1238 = arith.mulf %1237, %0 : vector<2x256xf32>
    %c108_346 = arith.constant 108 : index
    %1239 = memref.load %arg7[%c108_346] : memref<144xf32, #tpu.memory_space<smem>>
    %1240 = vector.broadcast %1239 : f32 to vector<2x256xf32>
    %1241 = arith.mulf %1240, %1238 : vector<2x256xf32>
    %1242 = arith.addf %1223, %1241 : vector<2x256xf32>
    %c109_347 = arith.constant 109 : index
    %1243 = memref.load %arg7[%c109_347] : memref<144xf32, #tpu.memory_space<smem>>
    %1244 = vector.broadcast %1243 : f32 to vector<2x256xf32>
    %1245 = arith.mulf %1244, %1238 : vector<2x256xf32>
    %1246 = arith.addf %1227, %1245 : vector<2x256xf32>
    %c110_348 = arith.constant 110 : index
    %1247 = memref.load %arg7[%c110_348] : memref<144xf32, #tpu.memory_space<smem>>
    %1248 = vector.broadcast %1247 : f32 to vector<2x256xf32>
    %1249 = arith.mulf %1248, %1238 : vector<2x256xf32>
    %1250 = arith.addf %1231, %1249 : vector<2x256xf32>
    %c111_349 = arith.constant 111 : index
    %1251 = memref.load %arg7[%c111_349] : memref<144xf32, #tpu.memory_space<smem>>
    %1252 = vector.broadcast %1251 : f32 to vector<2x256xf32>
    %1253 = arith.mulf %1252, %1238 : vector<2x256xf32>
    %1254 = arith.addf %1235, %1253 : vector<2x256xf32>
    %c0_350 = arith.constant 0 : index
    %c0_351 = arith.constant 0 : index
    %c144_352 = arith.constant 144 : index
    %1255 = vector.load %arg12[%c0_350, %c0_351, %c144_352] : memref<4x2x512xf32, #tpu.memory_space<vmem>>, vector<1x2x256xf32>
    %1256 = vector.shape_cast %1255 : vector<1x2x256xf32> to vector<2x256xf32>
    %c112_353 = arith.constant 112 : index
    %1257 = memref.load %arg7[%c112_353] : memref<144xf32, #tpu.memory_space<smem>>
    %1258 = vector.broadcast %1257 : f32 to vector<2x256xf32>
    %1259 = arith.mulf %1258, %1256 : vector<2x256xf32>
    %1260 = arith.addf %1242, %1259 : vector<2x256xf32>
    %c113_354 = arith.constant 113 : index
    %1261 = memref.load %arg7[%c113_354] : memref<144xf32, #tpu.memory_space<smem>>
    %1262 = vector.broadcast %1261 : f32 to vector<2x256xf32>
    %1263 = arith.mulf %1262, %1256 : vector<2x256xf32>
    %1264 = arith.addf %1246, %1263 : vector<2x256xf32>
    %c114_355 = arith.constant 114 : index
    %1265 = memref.load %arg7[%c114_355] : memref<144xf32, #tpu.memory_space<smem>>
    %1266 = vector.broadcast %1265 : f32 to vector<2x256xf32>
    %1267 = arith.mulf %1266, %1256 : vector<2x256xf32>
    %1268 = arith.addf %1250, %1267 : vector<2x256xf32>
    %c115_356 = arith.constant 115 : index
    %1269 = memref.load %arg7[%c115_356] : memref<144xf32, #tpu.memory_space<smem>>
    %1270 = vector.broadcast %1269 : f32 to vector<2x256xf32>
    %1271 = arith.mulf %1270, %1256 : vector<2x256xf32>
    %1272 = arith.addf %1254, %1271 : vector<2x256xf32>
    %c1_357 = arith.constant 1 : index
    %c0_358 = arith.constant 0 : index
    %c144_359 = arith.constant 144 : index
    %1273 = vector.load %arg12[%c1_357, %c0_358, %c144_359] : memref<4x2x512xf32, #tpu.memory_space<vmem>>, vector<1x2x256xf32>
    %1274 = vector.shape_cast %1273 : vector<1x2x256xf32> to vector<2x256xf32>
    %c116_360 = arith.constant 116 : index
    %1275 = memref.load %arg7[%c116_360] : memref<144xf32, #tpu.memory_space<smem>>
    %1276 = vector.broadcast %1275 : f32 to vector<2x256xf32>
    %1277 = arith.mulf %1276, %1274 : vector<2x256xf32>
    %1278 = arith.addf %1260, %1277 : vector<2x256xf32>
    %c117_361 = arith.constant 117 : index
    %1279 = memref.load %arg7[%c117_361] : memref<144xf32, #tpu.memory_space<smem>>
    %1280 = vector.broadcast %1279 : f32 to vector<2x256xf32>
    %1281 = arith.mulf %1280, %1274 : vector<2x256xf32>
    %1282 = arith.addf %1264, %1281 : vector<2x256xf32>
    %c118_362 = arith.constant 118 : index
    %1283 = memref.load %arg7[%c118_362] : memref<144xf32, #tpu.memory_space<smem>>
    %1284 = vector.broadcast %1283 : f32 to vector<2x256xf32>
    %1285 = arith.mulf %1284, %1274 : vector<2x256xf32>
    %1286 = arith.addf %1268, %1285 : vector<2x256xf32>
    %c119_363 = arith.constant 119 : index
    %1287 = memref.load %arg7[%c119_363] : memref<144xf32, #tpu.memory_space<smem>>
    %1288 = vector.broadcast %1287 : f32 to vector<2x256xf32>
    %1289 = arith.mulf %1288, %1274 : vector<2x256xf32>
    %1290 = arith.addf %1272, %1289 : vector<2x256xf32>
    %c2_364 = arith.constant 2 : index
    %c0_365 = arith.constant 0 : index
    %c144_366 = arith.constant 144 : index
    %1291 = vector.load %arg12[%c2_364, %c0_365, %c144_366] : memref<4x2x512xf32, #tpu.memory_space<vmem>>, vector<1x2x256xf32>
    %1292 = vector.shape_cast %1291 : vector<1x2x256xf32> to vector<2x256xf32>
    %c120_367 = arith.constant 120 : index
    %1293 = memref.load %arg7[%c120_367] : memref<144xf32, #tpu.memory_space<smem>>
    %1294 = vector.broadcast %1293 : f32 to vector<2x256xf32>
    %1295 = arith.mulf %1294, %1292 : vector<2x256xf32>
    %1296 = arith.addf %1278, %1295 : vector<2x256xf32>
    %c121_368 = arith.constant 121 : index
    %1297 = memref.load %arg7[%c121_368] : memref<144xf32, #tpu.memory_space<smem>>
    %1298 = vector.broadcast %1297 : f32 to vector<2x256xf32>
    %1299 = arith.mulf %1298, %1292 : vector<2x256xf32>
    %1300 = arith.addf %1282, %1299 : vector<2x256xf32>
    %c122_369 = arith.constant 122 : index
    %1301 = memref.load %arg7[%c122_369] : memref<144xf32, #tpu.memory_space<smem>>
    %1302 = vector.broadcast %1301 : f32 to vector<2x256xf32>
    %1303 = arith.mulf %1302, %1292 : vector<2x256xf32>
    %1304 = arith.addf %1286, %1303 : vector<2x256xf32>
    %c123_370 = arith.constant 123 : index
    %1305 = memref.load %arg7[%c123_370] : memref<144xf32, #tpu.memory_space<smem>>
    %1306 = vector.broadcast %1305 : f32 to vector<2x256xf32>
    %1307 = arith.mulf %1306, %1292 : vector<2x256xf32>
    %1308 = arith.addf %1290, %1307 : vector<2x256xf32>
    %c3_371 = arith.constant 3 : index
    %c0_372 = arith.constant 0 : index
    %c144_373 = arith.constant 144 : index
    %1309 = vector.load %arg12[%c3_371, %c0_372, %c144_373] : memref<4x2x512xf32, #tpu.memory_space<vmem>>, vector<1x2x256xf32>
    %1310 = vector.shape_cast %1309 : vector<1x2x256xf32> to vector<2x256xf32>
    %c124_374 = arith.constant 124 : index
    %1311 = memref.load %arg7[%c124_374] : memref<144xf32, #tpu.memory_space<smem>>
    %1312 = vector.broadcast %1311 : f32 to vector<2x256xf32>
    %1313 = arith.mulf %1312, %1310 : vector<2x256xf32>
    %1314 = arith.addf %1296, %1313 : vector<2x256xf32>
    %c125_375 = arith.constant 125 : index
    %1315 = memref.load %arg7[%c125_375] : memref<144xf32, #tpu.memory_space<smem>>
    %1316 = vector.broadcast %1315 : f32 to vector<2x256xf32>
    %1317 = arith.mulf %1316, %1310 : vector<2x256xf32>
    %1318 = arith.addf %1300, %1317 : vector<2x256xf32>
    %c126_376 = arith.constant 126 : index
    %1319 = memref.load %arg7[%c126_376] : memref<144xf32, #tpu.memory_space<smem>>
    %1320 = vector.broadcast %1319 : f32 to vector<2x256xf32>
    %1321 = arith.mulf %1320, %1310 : vector<2x256xf32>
    %1322 = arith.addf %1304, %1321 : vector<2x256xf32>
    %c127_377 = arith.constant 127 : index
    %1323 = memref.load %arg7[%c127_377] : memref<144xf32, #tpu.memory_space<smem>>
    %1324 = vector.broadcast %1323 : f32 to vector<2x256xf32>
    %1325 = arith.mulf %1324, %1310 : vector<2x256xf32>
    %1326 = arith.addf %1308, %1325 : vector<2x256xf32>
    %c0_378 = arith.constant 0 : index
    %c0_379 = arith.constant 0 : index
    %c145_380 = arith.constant 145 : index
    %1327 = vector.load %arg12[%c0_378, %c0_379, %c145_380] : memref<4x2x512xf32, #tpu.memory_space<vmem>>, vector<1x2x256xf32>
    %1328 = vector.shape_cast %1327 : vector<1x2x256xf32> to vector<2x256xf32>
    %1329 = arith.mulf %1328, %1 : vector<2x256xf32>
    %c128_381 = arith.constant 128 : index
    %1330 = memref.load %arg7[%c128_381] : memref<144xf32, #tpu.memory_space<smem>>
    %1331 = vector.broadcast %1330 : f32 to vector<2x256xf32>
    %1332 = arith.mulf %1331, %1329 : vector<2x256xf32>
    %1333 = arith.addf %1314, %1332 : vector<2x256xf32>
    %c129_382 = arith.constant 129 : index
    %1334 = memref.load %arg7[%c129_382] : memref<144xf32, #tpu.memory_space<smem>>
    %1335 = vector.broadcast %1334 : f32 to vector<2x256xf32>
    %1336 = arith.mulf %1335, %1329 : vector<2x256xf32>
    %1337 = arith.addf %1318, %1336 : vector<2x256xf32>
    %c130_383 = arith.constant 130 : index
    %1338 = memref.load %arg7[%c130_383] : memref<144xf32, #tpu.memory_space<smem>>
    %1339 = vector.broadcast %1338 : f32 to vector<2x256xf32>
    %1340 = arith.mulf %1339, %1329 : vector<2x256xf32>
    %1341 = arith.addf %1322, %1340 : vector<2x256xf32>
    %c131_384 = arith.constant 131 : index
    %1342 = memref.load %arg7[%c131_384] : memref<144xf32, #tpu.memory_space<smem>>
    %1343 = vector.broadcast %1342 : f32 to vector<2x256xf32>
    %1344 = arith.mulf %1343, %1329 : vector<2x256xf32>
    %1345 = arith.addf %1326, %1344 : vector<2x256xf32>
    %c1_385 = arith.constant 1 : index
    %c0_386 = arith.constant 0 : index
    %c145_387 = arith.constant 145 : index
    %1346 = vector.load %arg12[%c1_385, %c0_386, %c145_387] : memref<4x2x512xf32, #tpu.memory_space<vmem>>, vector<1x2x256xf32>
    %1347 = vector.shape_cast %1346 : vector<1x2x256xf32> to vector<2x256xf32>
    %1348 = arith.mulf %1347, %1 : vector<2x256xf32>
    %c132_388 = arith.constant 132 : index
    %1349 = memref.load %arg7[%c132_388] : memref<144xf32, #tpu.memory_space<smem>>
    %1350 = vector.broadcast %1349 : f32 to vector<2x256xf32>
    %1351 = arith.mulf %1350, %1348 : vector<2x256xf32>
    %1352 = arith.addf %1333, %1351 : vector<2x256xf32>
    %c133_389 = arith.constant 133 : index
    %1353 = memref.load %arg7[%c133_389] : memref<144xf32, #tpu.memory_space<smem>>
    %1354 = vector.broadcast %1353 : f32 to vector<2x256xf32>
    %1355 = arith.mulf %1354, %1348 : vector<2x256xf32>
    %1356 = arith.addf %1337, %1355 : vector<2x256xf32>
    %c134_390 = arith.constant 134 : index
    %1357 = memref.load %arg7[%c134_390] : memref<144xf32, #tpu.memory_space<smem>>
    %1358 = vector.broadcast %1357 : f32 to vector<2x256xf32>
    %1359 = arith.mulf %1358, %1348 : vector<2x256xf32>
    %1360 = arith.addf %1341, %1359 : vector<2x256xf32>
    %c135_391 = arith.constant 135 : index
    %1361 = memref.load %arg7[%c135_391] : memref<144xf32, #tpu.memory_space<smem>>
    %1362 = vector.broadcast %1361 : f32 to vector<2x256xf32>
    %1363 = arith.mulf %1362, %1348 : vector<2x256xf32>
    %1364 = arith.addf %1345, %1363 : vector<2x256xf32>
    %c2_392 = arith.constant 2 : index
    %c0_393 = arith.constant 0 : index
    %c145_394 = arith.constant 145 : index
    %1365 = vector.load %arg12[%c2_392, %c0_393, %c145_394] : memref<4x2x512xf32, #tpu.memory_space<vmem>>, vector<1x2x256xf32>
    %1366 = vector.shape_cast %1365 : vector<1x2x256xf32> to vector<2x256xf32>
    %1367 = arith.mulf %1366, %1 : vector<2x256xf32>
    %c136_395 = arith.constant 136 : index
    %1368 = memref.load %arg7[%c136_395] : memref<144xf32, #tpu.memory_space<smem>>
    %1369 = vector.broadcast %1368 : f32 to vector<2x256xf32>
    %1370 = arith.mulf %1369, %1367 : vector<2x256xf32>
    %1371 = arith.addf %1352, %1370 : vector<2x256xf32>
    %c137_396 = arith.constant 137 : index
    %1372 = memref.load %arg7[%c137_396] : memref<144xf32, #tpu.memory_space<smem>>
    %1373 = vector.broadcast %1372 : f32 to vector<2x256xf32>
    %1374 = arith.mulf %1373, %1367 : vector<2x256xf32>
    %1375 = arith.addf %1356, %1374 : vector<2x256xf32>
    %c138_397 = arith.constant 138 : index
    %1376 = memref.load %arg7[%c138_397] : memref<144xf32, #tpu.memory_space<smem>>
    %1377 = vector.broadcast %1376 : f32 to vector<2x256xf32>
    %1378 = arith.mulf %1377, %1367 : vector<2x256xf32>
    %1379 = arith.addf %1360, %1378 : vector<2x256xf32>
    %c139_398 = arith.constant 139 : index
    %1380 = memref.load %arg7[%c139_398] : memref<144xf32, #tpu.memory_space<smem>>
    %1381 = vector.broadcast %1380 : f32 to vector<2x256xf32>
    %1382 = arith.mulf %1381, %1367 : vector<2x256xf32>
    %1383 = arith.addf %1364, %1382 : vector<2x256xf32>
    %c3_399 = arith.constant 3 : index
    %c0_400 = arith.constant 0 : index
    %c145_401 = arith.constant 145 : index
    %1384 = vector.load %arg12[%c3_399, %c0_400, %c145_401] : memref<4x2x512xf32, #tpu.memory_space<vmem>>, vector<1x2x256xf32>
    %1385 = vector.shape_cast %1384 : vector<1x2x256xf32> to vector<2x256xf32>
    %1386 = arith.mulf %1385, %1 : vector<2x256xf32>
    %c140_402 = arith.constant 140 : index
    %1387 = memref.load %arg7[%c140_402] : memref<144xf32, #tpu.memory_space<smem>>
    %1388 = vector.broadcast %1387 : f32 to vector<2x256xf32>
    %1389 = arith.mulf %1388, %1386 : vector<2x256xf32>
    %1390 = arith.addf %1371, %1389 : vector<2x256xf32>
    %c141_403 = arith.constant 141 : index
    %1391 = memref.load %arg7[%c141_403] : memref<144xf32, #tpu.memory_space<smem>>
    %1392 = vector.broadcast %1391 : f32 to vector<2x256xf32>
    %1393 = arith.mulf %1392, %1386 : vector<2x256xf32>
    %1394 = arith.addf %1375, %1393 : vector<2x256xf32>
    %c142_404 = arith.constant 142 : index
    %1395 = memref.load %arg7[%c142_404] : memref<144xf32, #tpu.memory_space<smem>>
    %1396 = vector.broadcast %1395 : f32 to vector<2x256xf32>
    %1397 = arith.mulf %1396, %1386 : vector<2x256xf32>
    %1398 = arith.addf %1379, %1397 : vector<2x256xf32>
    %c143_405 = arith.constant 143 : index
    %1399 = memref.load %arg7[%c143_405] : memref<144xf32, #tpu.memory_space<smem>>
    %1400 = vector.broadcast %1399 : f32 to vector<2x256xf32>
    %1401 = arith.mulf %1400, %1386 : vector<2x256xf32>
    %1402 = arith.addf %1383, %1401 : vector<2x256xf32>
    %c0_406 = arith.constant 0 : index
    %c0_407 = arith.constant 0 : index
    %c128_408 = arith.constant 128 : index
    %1403 = vector.load %arg11[%c0_406, %c0_407, %c128_408] : memref<4x2x512xf32, #tpu.memory_space<vmem>>, vector<1x2x256xf32>
    %1404 = vector.shape_cast %1403 : vector<1x2x256xf32> to vector<2x256xf32>
    %c0_409 = arith.constant 0 : index
    %1405 = memref.load %arg8[%c0_409] : memref<4xf32, #tpu.memory_space<smem>>
    %1406 = vector.broadcast %1405 : f32 to vector<2x256xf32>
    %1407 = arith.mulf %1390, %1406 : vector<2x256xf32>
    %c0_410 = arith.constant 0 : index
    %1408 = memref.load %arg9[%c0_410] : memref<4xf32, #tpu.memory_space<smem>>
    %1409 = vector.broadcast %1408 : f32 to vector<2x256xf32>
    %1410 = arith.addf %1407, %1409 : vector<2x256xf32>
    %1411 = arith.addf %1410, %1404 : vector<2x256xf32>
    %cst_411 = arith.constant 0.000000e+00 : f32
    %1412 = vector.broadcast %cst_411 : f32 to vector<2x256xf32>
    %1413 = arith.maximumf %1411, %1412 : vector<2x256xf32>
    %c0_412 = arith.constant 0 : index
    %c0_413 = arith.constant 0 : index
    %c0_414 = arith.constant 0 : index
    %1414 = vector.load %arg10[%c0_412, %c0_413, %c0_414] : memref<4x2x256xf32, #tpu.memory_space<vmem>>, vector<1x2x256xf32>
    %1415 = vector.shape_cast %1414 : vector<1x2x256xf32> to vector<2x256xf32>
    %1416 = vector.shape_cast %1413 : vector<2x256xf32> to vector<1x2x256xf32>
    tpu.vector_store %arg10[%c0_412, %c0_413, %c0_414], %1416 {strides = array<i32>} : memref<4x2x256xf32, #tpu.memory_space<vmem>>, vector<1x2x256xf32>,
    %c1_415 = arith.constant 1 : index
    %c0_416 = arith.constant 0 : index
    %c128_417 = arith.constant 128 : index
    %1417 = vector.load %arg11[%c1_415, %c0_416, %c128_417] : memref<4x2x512xf32, #tpu.memory_space<vmem>>, vector<1x2x256xf32>
    %1418 = vector.shape_cast %1417 : vector<1x2x256xf32> to vector<2x256xf32>
    %c1_418 = arith.constant 1 : index
    %1419 = memref.load %arg8[%c1_418] : memref<4xf32, #tpu.memory_space<smem>>
    %1420 = vector.broadcast %1419 : f32 to vector<2x256xf32>
    %1421 = arith.mulf %1394, %1420 : vector<2x256xf32>
    %c1_419 = arith.constant 1 : index
    %1422 = memref.load %arg9[%c1_419] : memref<4xf32, #tpu.memory_space<smem>>
    %1423 = vector.broadcast %1422 : f32 to vector<2x256xf32>
    %1424 = arith.addf %1421, %1423 : vector<2x256xf32>
    %1425 = arith.addf %1424, %1418 : vector<2x256xf32>
    %cst_420 = arith.constant 0.000000e+00 : f32
    %1426 = vector.broadcast %cst_420 : f32 to vector<2x256xf32>
    %1427 = arith.maximumf %1425, %1426 : vector<2x256xf32>
    %c1_421 = arith.constant 1 : index
    %c0_422 = arith.constant 0 : index
    %c0_423 = arith.constant 0 : index
    %1428 = vector.load %arg10[%c1_421, %c0_422, %c0_423] : memref<4x2x256xf32, #tpu.memory_space<vmem>>, vector<1x2x256xf32>
    %1429 = vector.shape_cast %1428 : vector<1x2x256xf32> to vector<2x256xf32>
    %1430 = vector.shape_cast %1427 : vector<2x256xf32> to vector<1x2x256xf32>
    tpu.vector_store %arg10[%c1_421, %c0_422, %c0_423], %1430 {strides = array<i32>} : memref<4x2x256xf32, #tpu.memory_space<vmem>>, vector<1x2x256xf32>,
    %c2_424 = arith.constant 2 : index
    %c0_425 = arith.constant 0 : index
    %c128_426 = arith.constant 128 : index
    %1431 = vector.load %arg11[%c2_424, %c0_425, %c128_426] : memref<4x2x512xf32, #tpu.memory_space<vmem>>, vector<1x2x256xf32>
    %1432 = vector.shape_cast %1431 : vector<1x2x256xf32> to vector<2x256xf32>
    %c2_427 = arith.constant 2 : index
    %1433 = memref.load %arg8[%c2_427] : memref<4xf32, #tpu.memory_space<smem>>
    %1434 = vector.broadcast %1433 : f32 to vector<2x256xf32>
    %1435 = arith.mulf %1398, %1434 : vector<2x256xf32>
    %c2_428 = arith.constant 2 : index
    %1436 = memref.load %arg9[%c2_428] : memref<4xf32, #tpu.memory_space<smem>>
    %1437 = vector.broadcast %1436 : f32 to vector<2x256xf32>
    %1438 = arith.addf %1435, %1437 : vector<2x256xf32>
    %1439 = arith.addf %1438, %1432 : vector<2x256xf32>
    %cst_429 = arith.constant 0.000000e+00 : f32
    %1440 = vector.broadcast %cst_429 : f32 to vector<2x256xf32>
    %1441 = arith.maximumf %1439, %1440 : vector<2x256xf32>
    %c2_430 = arith.constant 2 : index
    %c0_431 = arith.constant 0 : index
    %c0_432 = arith.constant 0 : index
    %1442 = vector.load %arg10[%c2_430, %c0_431, %c0_432] : memref<4x2x256xf32, #tpu.memory_space<vmem>>, vector<1x2x256xf32>
    %1443 = vector.shape_cast %1442 : vector<1x2x256xf32> to vector<2x256xf32>
    %1444 = vector.shape_cast %1441 : vector<2x256xf32> to vector<1x2x256xf32>
    tpu.vector_store %arg10[%c2_430, %c0_431, %c0_432], %1444 {strides = array<i32>} : memref<4x2x256xf32, #tpu.memory_space<vmem>>, vector<1x2x256xf32>,
    %c3_433 = arith.constant 3 : index
    %c0_434 = arith.constant 0 : index
    %c128_435 = arith.constant 128 : index
    %1445 = vector.load %arg11[%c3_433, %c0_434, %c128_435] : memref<4x2x512xf32, #tpu.memory_space<vmem>>, vector<1x2x256xf32>
    %1446 = vector.shape_cast %1445 : vector<1x2x256xf32> to vector<2x256xf32>
    %c3_436 = arith.constant 3 : index
    %1447 = memref.load %arg8[%c3_436] : memref<4xf32, #tpu.memory_space<smem>>
    %1448 = vector.broadcast %1447 : f32 to vector<2x256xf32>
    %1449 = arith.mulf %1402, %1448 : vector<2x256xf32>
    %c3_437 = arith.constant 3 : index
    %1450 = memref.load %arg9[%c3_437] : memref<4xf32, #tpu.memory_space<smem>>
    %1451 = vector.broadcast %1450 : f32 to vector<2x256xf32>
    %1452 = arith.addf %1449, %1451 : vector<2x256xf32>
    %1453 = arith.addf %1452, %1446 : vector<2x256xf32>
    %cst_438 = arith.constant 0.000000e+00 : f32
    %1454 = vector.broadcast %cst_438 : f32 to vector<2x256xf32>
    %1455 = arith.maximumf %1453, %1454 : vector<2x256xf32>
    %c3_439 = arith.constant 3 : index
    %c0_440 = arith.constant 0 : index
    %c0_441 = arith.constant 0 : index
    %1456 = vector.load %arg10[%c3_439, %c0_440, %c0_441] : memref<4x2x256xf32, #tpu.memory_space<vmem>>, vector<1x2x256xf32>
    %1457 = vector.shape_cast %1456 : vector<1x2x256xf32> to vector<2x256xf32>
    %1458 = vector.shape_cast %1455 : vector<2x256xf32> to vector<1x2x256xf32>
    tpu.vector_store %arg10[%c3_439, %c0_440, %c0_441], %1458 {strides = array<i32>} : memref<4x2x256xf32, #tpu.memory_space<vmem>>, vector<1x2x256xf32>,
    return
  }
  func.func @transform_0(%arg0: i32) -> (i32, i32, i32) {
    %c0_i32 = arith.constant 0 : i32
    %c0_i32_0 = arith.constant 0 : i32
    %c0_i32_1 = arith.constant 0 : i32
    %c0_i32_2 = arith.constant 0 : i32
    return %c0_i32, %c0_i32_0, %c0_i32_1 : i32, i32, i32
  }
  func.func @transform_1(%arg0: i32) -> (i32, i32) {
    %c0_i32 = arith.constant 0 : i32
    %c0_i32_0 = arith.constant 0 : i32
    %c0_i32_1 = arith.constant 0 : i32
    return %c0_i32, %c0_i32_0 : i32, i32
  }
  func.func @transform_2(%arg0: i32) -> (i32, i32) {
    %c0_i32 = arith.constant 0 : i32
    %c0_i32_0 = arith.constant 0 : i32
    %c0_i32_1 = arith.constant 0 : i32
    return %c0_i32, %c0_i32_0 : i32, i32
  }
  func.func @transform_3(%arg0: i32) -> i32 {
    %c0_i32 = arith.constant 0 : i32
    %c0_i32_0 = arith.constant 0 : i32
    return %c0_i32 : i32
  }
  func.func @transform_4(%arg0: i32) -> i32 {
    %c0_i32 = arith.constant 0 : i32
    %c0_i32_0 = arith.constant 0 : i32
    return %c0_i32 : i32
  }
  func.func @transform_5(%arg0: i32) -> i32 {
    %c0_i32 = arith.constant 0 : i32
    %c0_i32_0 = arith.constant 0 : i32
    return %c0_i32 : i32
  }
  func.func @transform_6(%arg0: i32) -> i32 {
    %c0_i32 = arith.constant 0 : i32
    %c0_i32_0 = arith.constant 0 : i32
    return %c0_i32 : i32
  }
  func.func @transform_7(%arg0: i32) -> i32 {
    %c0_i32 = arith.constant 0 : i32
    %c0_i32_0 = arith.constant 0 : i32
    return %c0_i32 : i32
  }
  func.func @transform_8(%arg0: i32) -> i32 {
    %c0_i32 = arith.constant 0 : i32
    %c0_i32_0 = arith.constant 0 : i32
    return %c0_i32 : i32
  }
  func.func @transform_9(%arg0: i32) -> (i32, i32, i32) {
    %c0_i32 = arith.constant 0 : i32
    %c0_i32_0 = arith.constant 0 : i32
    %c0_i32_1 = arith.constant 0 : i32
    %c0_i32_2 = arith.constant 0 : i32
    return %c0_i32, %c0_i32_0, %c0_i32_1 : i32, i32, i32
  }
}

</mosaic_0001>

<llo_original>
// kernel: basic_block_mtl_forward.1
$region0: #{basic_block_mtl_forward.1}
  #allocation0 [shape = 'u32[]', space=smem, size = 0x4, offset = 0x4, fixed_abs, tag = 'smem constant byte address 0x4 - core index']
  #allocation1 [shape = 'u32[144,128]{1,0:T(1,128)}', space=vmem, size = 0x12000, scoped, tag = 'internal scratch']
  #allocation2 [shape = 'f32[4,2,512]{2,1,0:T(2,128)}', space=vmem, size = 0x4000, scoped, tag = 'scratch operand']
  #allocation3 [shape = 'f32[4,2,512]{2,1,0:T(2,128)}', space=vmem, size = 0x4000, scoped, tag = 'scratch operand']
  %s0 = inlined_call_operand.vmem [shape: f32[4,2,256], index: 0, kind: input, shape index: {}]
  %s1 = inlined_call_operand.vmem [shape: f32[2,256], index: 1, kind: input, shape index: {}]
  %s2 = inlined_call_operand.vmem [shape: f32[2,256], index: 2, kind: input, shape index: {}]
  %s3 = inlined_call_operand.vmem [shape: f32[144], index: 3, kind: input, shape index: {}]
  %s4 = inlined_call_operand.vmem [shape: f32[4], index: 4, kind: input, shape index: {}]
  %s5 = inlined_call_operand.vmem [shape: f32[4], index: 5, kind: input, shape index: {}]
  %s6 = inlined_call_operand.vmem [shape: f32[144], index: 6, kind: input, shape index: {}]
  %s7 = inlined_call_operand.vmem [shape: f32[4], index: 7, kind: input, shape index: {}]
  %s8 = inlined_call_operand.vmem [shape: f32[4], index: 8, kind: input, shape index: {}]
  %s9 = inlined_call_operand.vmem [shape: f32[4,2,256], index: 9, kind: output, shape index: {}]
  %s10 = sld [smem:[#allocation0]]
  $region70: #{basic_block_mtl_forward.1} parent=0
    _
  %s12 = ssub.s32 1, %s10
  %s13 = scalar_select 0, %s12, %s10
  $region1: #{basic_block_mtl_forward.1} parent=0
    #allocation4 [shape = 'u8[1024]{0}', space=smem, size = 0x400, scoped, tag = 'input window, operand 3, single buffered']
    #allocation5 [shape = 's32[1]{0}', space=sflag, size = 0x4, scoped, tag = 'scoped memory for basic_block_mtl_forward.1']
    #allocation6 [shape = 'u8[512]{0}', space=smem, size = 0x200, scoped, tag = 'input window, operand 4, single buffered']
    #allocation7 [shape = 's32[1]{0}', space=sflag, size = 0x4, scoped, tag = 'scoped memory for basic_block_mtl_forward.1']
    #allocation8 [shape = 'u8[512]{0}', space=smem, size = 0x200, scoped, tag = 'input window, operand 5, single buffered']
    #allocation9 [shape = 'u8[1024]{0}', space=smem, size = 0x400, scoped, tag = 'input window, operand 6, single buffered']
    #allocation10 [shape = 's32[1]{0}', space=sflag, size = 0x4, scoped, tag = 'scoped memory for basic_block_mtl_forward.1']
    #allocation11 [shape = 'u8[512]{0}', space=smem, size = 0x200, scoped, tag = 'input window, operand 7, single buffered']
    #allocation12 [shape = 'u8[512]{0}', space=smem, size = 0x200, scoped, tag = 'input window, operand 8, single buffered']
    #allocation13 [shape = 's32[1]{0}', space=sflag, size = 0x4, scoped, tag = 'scoped memory for basic_block_mtl_forward.1']
    %14 = vsyncpa [#allocation5], 0
    %15 = vsyncpa [#allocation7], 0
    %16 = vsyncpa [#allocation10], 0
    %17 = vsyncpa [#allocation13], 0
    // Predicated region
    $region2: #{basic_block_mtl_forward.1} parent=1 // pred_check
      _
    $region3: #{basic_block_mtl_forward.1} parent=1 // pred_check_branch
      %19 = sbr.rel (0) target = $region5
    $region4: #{basic_block_mtl_forward.1} parent=1 // pred_region
      _
    $region5: #{basic_block_mtl_forward.1} parent=1 // pred_fallthru
      _
    // Predicated region
    $region6: #{basic_block_mtl_forward.1} parent=1 // pred_check
      _
    $region7: #{basic_block_mtl_forward.1} parent=1 // pred_check_branch
      %21 = sbr.rel (0) target = $region9
    $region8: #{basic_block_mtl_forward.1} parent=1 // pred_region
      _
    $region9: #{basic_block_mtl_forward.1} parent=1 // pred_fallthru
      _
    // Predicated region
    $region10: #{basic_block_mtl_forward.1} parent=1 // pred_check
      _
    $region11: #{basic_block_mtl_forward.1} parent=1 // pred_check_branch
      %23 = sbr.rel (0) target = $region13
    $region12: #{basic_block_mtl_forward.1} parent=1 // pred_region
      _
    $region13: #{basic_block_mtl_forward.1} parent=1 // pred_fallthru
      _
    // Predicated region
    $region14: #{basic_block_mtl_forward.1} parent=1 // pred_check
      _
    $region15: #{basic_block_mtl_forward.1} parent=1 // pred_check_branch
      %25 = sbr.rel (0) target = $region17
    $region16: #{basic_block_mtl_forward.1} parent=1 // pred_region
      %s27 = ssub.s32 32, 32
      %28 = vsyncadd [#allocation5], %s27
      %s30 = sshll.u32 %s3, 4
      %s31 = int_to_ptr.vmem [resolvable:$true] %s30
      %33 = dma.vmem_to_smem %s31, 32, [#allocation4], [#allocation5]
    $region17: #{basic_block_mtl_forward.1} parent=1 // pred_fallthru
      _
    // Predicated region
    $region18: #{basic_block_mtl_forward.1} parent=1 // pred_check
      _
    $region19: #{basic_block_mtl_forward.1} parent=1 // pred_check_branch
      %35 = sbr.rel (0) target = $region21
    $region20: #{basic_block_mtl_forward.1} parent=1 // pred_region
      %s37 = ssub.s32 16, 16
      %38 = vsyncadd [#allocation7], %s37
      %s40 = sshll.u32 %s4, 4
      %s41 = int_to_ptr.vmem [resolvable:$true] %s40
      %43 = dma.vmem_to_smem %s41, 16, [#allocation6], [#allocation7]
    $region21: #{basic_block_mtl_forward.1} parent=1 // pred_fallthru
      _
    // Predicated region
    $region22: #{basic_block_mtl_forward.1} parent=1 // pred_check
      _
    $region23: #{basic_block_mtl_forward.1} parent=1 // pred_check_branch
      %45 = sbr.rel (0) target = $region25
    $region24: #{basic_block_mtl_forward.1} parent=1 // pred_region
      %s47 = ssub.s32 16, 16
      %48 = vsyncadd [#allocation7], %s47
      %s50 = sshll.u32 %s5, 4
      %s51 = int_to_ptr.vmem [resolvable:$true] %s50
      %53 = dma.vmem_to_smem %s51, 16, [#allocation8], [#allocation7]
    $region25: #{basic_block_mtl_forward.1} parent=1 // pred_fallthru
      _
    // Predicated region
    $region26: #{basic_block_mtl_forward.1} parent=1 // pred_check
      _
    $region27: #{basic_block_mtl_forward.1} parent=1 // pred_check_branch
      %55 = sbr.rel (0) target = $region29
    $region28: #{basic_block_mtl_forward.1} parent=1 // pred_region
      %s57 = ssub.s32 32, 32
      %58 = vsyncadd [#allocation10], %s57
      %s60 = sshll.u32 %s6, 4
      %s61 = int_to_ptr.vmem [resolvable:$true] %s60
      %63 = dma.vmem_to_smem %s61, 32, [#allocation9], [#allocation10]
    $region29: #{basic_block_mtl_forward.1} parent=1 // pred_fallthru
      _
    // Predicated region
    $region30: #{basic_block_mtl_forward.1} parent=1 // pred_check
      _
    $region31: #{basic_block_mtl_forward.1} parent=1 // pred_check_branch
      %65 = sbr.rel (0) target = $region33
    $region32: #{basic_block_mtl_forward.1} parent=1 // pred_region
      %s67 = ssub.s32 16, 16
      %68 = vsyncadd [#allocation10], %s67
      %s70 = sshll.u32 %s7, 4
      %s71 = int_to_ptr.vmem [resolvable:$true] %s70
      %73 = dma.vmem_to_smem %s71, 16, [#allocation11], [#allocation10]
    $region33: #{basic_block_mtl_forward.1} parent=1 // pred_fallthru
      _
    // Predicated region
    $region34: #{basic_block_mtl_forward.1} parent=1 // pred_check
      _
    $region35: #{basic_block_mtl_forward.1} parent=1 // pred_check_branch
      %75 = sbr.rel (0) target = $region37
    $region36: #{basic_block_mtl_forward.1} parent=1 // pred_region
      %s77 = ssub.s32 16, 16
      %78 = vsyncadd [#allocation13], %s77
      %s80 = sshll.u32 %s8, 4
      %s81 = int_to_ptr.vmem [resolvable:$true] %s80
      %83 = dma.vmem_to_smem %s81, 16, [#allocation12], [#allocation13]
    $region37: #{basic_block_mtl_forward.1} parent=1 // pred_fallthru
      _
    // Predicated region
    $region38: #{basic_block_mtl_forward.1} parent=1 // pred_check
      _
    $region39: #{basic_block_mtl_forward.1} parent=1 // pred_check_branch
      %85 = sbr.rel (0) target = $region41
    $region40: #{basic_block_mtl_forward.1} parent=1 // pred_region
      %86 = dma.done [#allocation5], 32
    $region41: #{basic_block_mtl_forward.1} parent=1 // pred_fallthru
      _
    // Predicated region
    $region42: #{basic_block_mtl_forward.1} parent=1 // pred_check
      _
    $region43: #{basic_block_mtl_forward.1} parent=1 // pred_check_branch
      %88 = sbr.rel (0) target = $region45
    $region44: #{basic_block_mtl_forward.1} parent=1 // pred_region
      %89 = dma.done [#allocation7], 16
    $region45: #{basic_block_mtl_forward.1} parent=1 // pred_fallthru
      _
    // Predicated region
    $region46: #{basic_block_mtl_forward.1} parent=1 // pred_check
      _
    $region47: #{basic_block_mtl_forward.1} parent=1 // pred_check_branch
      %91 = sbr.rel (0) target = $region49
    $region48: #{basic_block_mtl_forward.1} parent=1 // pred_region
      %92 = dma.done [#allocation7], 16
    $region49: #{basic_block_mtl_forward.1} parent=1 // pred_fallthru
      _
    // Predicated region
    $region50: #{basic_block_mtl_forward.1} parent=1 // pred_check
      _
    $region51: #{basic_block_mtl_forward.1} parent=1 // pred_check_branch
      %94 = sbr.rel (0) target = $region53
    $region52: #{basic_block_mtl_forward.1} parent=1 // pred_region
      %95 = dma.done [#allocation10], 32
    $region53: #{basic_block_mtl_forward.1} parent=1 // pred_fallthru
      _
    // Predicated region
    $region54: #{basic_block_mtl_forward.1} parent=1 // pred_check
      _
    $region55: #{basic_block_mtl_forward.1} parent=1 // pred_check_branch
      %97 = sbr.rel (0) target = $region57
    $region56: #{basic_block_mtl_forward.1} parent=1 // pred_region
      %98 = dma.done [#allocation10], 16
    $region57: #{basic_block_mtl_forward.1} parent=1 // pred_fallthru
      _
    // Predicated region
    $region58: #{basic_block_mtl_forward.1} parent=1 // pred_check
      _
    $region59: #{basic_block_mtl_forward.1} parent=1 // pred_check_branch
      %100 = sbr.rel (0) target = $region61
    $region60: #{basic_block_mtl_forward.1} parent=1 // pred_region
      %101 = dma.done [#allocation13], 16
    $region61: #{basic_block_mtl_forward.1} parent=1 // pred_fallthru
      _
    %102 = sfence
    %v103 = vld [vmem:[%s1] sm:$0xf]
    %v104 = vld [vmem:[%s2] sm:$0xf]
    %105 = vst [vmem:[#allocation2] sm:$0xff] 0.0
    %106 = vst [vmem:[#allocation2 + $0x8] sm:$0xff] 0.0
    %107 = vst [vmem:[#allocation2 + $0x10] sm:$0xff] 0.0
    %108 = vst [vmem:[#allocation2 + $0x18] sm:$0xff] 0.0
    %109 = vst [vmem:[#allocation3] sm:$0xff] 0.0
    %110 = vst [vmem:[#allocation3 + $0x8] sm:$0xff] 0.0
    %111 = vst [vmem:[#allocation3 + $0x10] sm:$0xff] 0.0
    %112 = vst [vmem:[#allocation3 + $0x18] sm:$0xff] 0.0
    %v113 = vld [vmem:[%s0] sm:$0xf]
    %v114 = vld [vmem:[%s0 + $0x4] sm:$0xf]
    %v115 = vld [vmem:[%s0 + $0x8] sm:$0xf]
    %v116 = vld [vmem:[%s0 + $0xc] sm:$0xf]
    %117 = vst [vmem:[#allocation2 + $0x2] sm:$0xf] %v113
    %118 = vst [vmem:[#allocation2 + $0xa] sm:$0xf] %v114
    %119 = vst [vmem:[#allocation2 + $0x12] sm:$0xf] %v115
    %120 = vst [vmem:[#allocation2 + $0x1a] sm:$0xf] %v116
    %v121 = vld [vmem:[#allocation2] sm:$0x3f]
    %123 = vrot.lane.b32.xlu0 %v103, 111
    %v124 = vpop.permute.xlu0 %123
    %v125 = vrot.slane %v124, 6
    %vm126 = vcmask 908288
    %v127 = vsel %vm126, %v125, %v124
    %v129 = vmul.f32 %v121, %v127
    %s130 = sld [smem:[#allocation4]]
    %v131 = vstv %s130
    %v132 = vmul.f32 %v131, %v129
    %v133 = vadd.f32 %v132, 0.0
    %s134 = sld [smem:[#allocation4 + $0x1]]
    %v135 = vstv %s134
    %v136 = vmul.f32 %v135, %v129
    %v137 = vadd.f32 %v136, 0.0
    %s138 = sld [smem:[#allocation4 + $0x2]]
    %v139 = vstv %s138
    %v140 = vmul.f32 %v139, %v129
    %v141 = vadd.f32 %v140, 0.0
    %s142 = sld [smem:[#allocation4 + $0x3]]
    %v143 = vstv %s142
    %v144 = vmul.f32 %v143, %v129
    %v145 = vadd.f32 %v144, 0.0
    %s146 = scalar_lea.vmem [#allocation2], 8
    %v147 = vld [vmem:[%s146] sm:$0x3f]
    %v148 = vmul.f32 %v147, %v127
    %s149 = sld [smem:[#allocation4 + $0x4]]
    %v150 = vstv %s149
    %v151 = vmul.f32 %v150, %v148
    %v152 = vadd.f32 %v133, %v151
    %s153 = sld [smem:[#allocation4 + $0x5]]
    %v154 = vstv %s153
    %v155 = vmul.f32 %v154, %v148
    %v156 = vadd.f32 %v137, %v155
    %s157 = sld [smem:[#allocation4 + $0x6]]
    %v158 = vstv %s157
    %v159 = vmul.f32 %v158, %v148
    %v160 = vadd.f32 %v141, %v159
    %s161 = sld [smem:[#allocation4 + $0x7]]
    %v162 = vstv %s161
    %v163 = vmul.f32 %v162, %v148
    %v164 = vadd.f32 %v145, %v163
    %s165 = scalar_lea.vmem [#allocation2], 16
    %v166 = vld [vmem:[%s165] sm:$0x3f]
    %v167 = vmul.f32 %v166, %v127
    %s168 = sld [smem:[#allocation4 + $0x8]]
    %v169 = vstv %s168
    %v170 = vmul.f32 %v169, %v167
    %v171 = vadd.f32 %v152, %v170
    %s172 = sld [smem:[#allocation4 + $0x9]]
    %v173 = vstv %s172
    %v174 = vmul.f32 %v173, %v167
    %v175 = vadd.f32 %v156, %v174
    %s176 = sld [smem:[#allocation4 + $0xa]]
    %v177 = vstv %s176
    %v178 = vmul.f32 %v177, %v167
    %v179 = vadd.f32 %v160, %v178
    %s180 = sld [smem:[#allocation4 + $0xb]]
    %v181 = vstv %s180
    %v182 = vmul.f32 %v181, %v167
    %v183 = vadd.f32 %v164, %v182
    %s184 = scalar_lea.vmem [#allocation2], 24
    %v185 = vld [vmem:[%s184] sm:$0x3f]
    %v186 = vmul.f32 %v185, %v127
    %s187 = sld [smem:[#allocation4 + $0xc]]
    %v188 = vstv %s187
    %v189 = vmul.f32 %v188, %v186
    %v190 = vadd.f32 %v171, %v189
    %s191 = sld [smem:[#allocation4 + $0xd]]
    %v192 = vstv %s191
    %v193 = vmul.f32 %v192, %v186
    %v194 = vadd.f32 %v175, %v193
    %s195 = sld [smem:[#allocation4 + $0xe]]
    %v196 = vstv %s195
    %v197 = vmul.f32 %v196, %v186
    %v198 = vadd.f32 %v179, %v197
    %s199 = sld [smem:[#allocation4 + $0xf]]
    %v200 = vstv %s199
    %v201 = vmul.f32 %v200, %v186
    %v202 = vadd.f32 %v183, %v201
    %s203 = sld [smem:[#allocation4 + $0x10]]
    %v204 = vstv %s203
    %v205 = vmul.f32 %v204, %v121
    %207 = vrot.lane.b32.xlu0 %v205, 127
    %v208 = vpop.permute.xlu0 %207
    %v209 = vrot.slane %v208, 2
    %vm210 = vcmask 1039360
    %v211 = vsel %vm210, %v208, %v209
    %v213 = vadd.f32 %v190, %v211
    %s214 = sld [smem:[#allocation4 + $0x11]]
    %v215 = vstv %s214
    %v216 = vmul.f32 %v215, %v121
    %218 = vrot.lane.b32.xlu0 %v216, 127
    %v219 = vpop.permute.xlu0 %218
    %v220 = vrot.slane %v219, 2
    %v221 = vsel %vm210, %v219, %v220
    %v223 = vadd.f32 %v194, %v221
    %s224 = sld [smem:[#allocation4 + $0x12]]
    %v225 = vstv %s224
    %v226 = vmul.f32 %v225, %v121
    %228 = vrot.lane.b32.xlu0 %v226, 127
    %v229 = vpop.permute.xlu0 %228
    %v230 = vrot.slane %v229, 2
    %v231 = vsel %vm210, %v229, %v230
    %v233 = vadd.f32 %v198, %v231
    %s234 = sld [smem:[#allocation4 + $0x13]]
    %v235 = vstv %s234
    %v236 = vmul.f32 %v235, %v121
    %238 = vrot.lane.b32.xlu0 %v236, 127
    %v239 = vpop.permute.xlu0 %238
    %v240 = vrot.slane %v239, 2
    %v241 = vsel %vm210, %v239, %v240
    %v243 = vadd.f32 %v202, %v241
    %s244 = sld [smem:[#allocation4 + $0x14]]
    %v245 = vstv %s244
    %v246 = vmul.f32 %v245, %v147
    %248 = vrot.lane.b32.xlu0 %v246, 127
    %v249 = vpop.permute.xlu0 %248
    %v250 = vrot.slane %v249, 2
    %v251 = vsel %vm210, %v249, %v250
    %v253 = vadd.f32 %v213, %v251
    %s254 = sld [smem:[#allocation4 + $0x15]]
    %v255 = vstv %s254
    %v256 = vmul.f32 %v255, %v147
    %258 = vrot.lane.b32.xlu0 %v256, 127
    %v259 = vpop.permute.xlu0 %258
    %v260 = vrot.slane %v259, 2
    %v261 = vsel %vm210, %v259, %v260
    %v263 = vadd.f32 %v223, %v261
    %s264 = sld [smem:[#allocation4 + $0x16]]
    %v265 = vstv %s264
    %v266 = vmul.f32 %v265, %v147
    %268 = vrot.lane.b32.xlu0 %v266, 127
    %v269 = vpop.permute.xlu0 %268
    %v270 = vrot.slane %v269, 2
    %v271 = vsel %vm210, %v269, %v270
    %v273 = vadd.f32 %v233, %v271
    %s274 = sld [smem:[#allocation4 + $0x17]]
    %v275 = vstv %s274
    %v276 = vmul.f32 %v275, %v147
    %278 = vrot.lane.b32.xlu0 %v276, 127
    %v279 = vpop.permute.xlu0 %278
    %v280 = vrot.slane %v279, 2
    %v281 = vsel %vm210, %v279, %v280
    %v283 = vadd.f32 %v243, %v281
    %s284 = sld [smem:[#allocation4 + $0x18]]
    %v285 = vstv %s284
    %v286 = vmul.f32 %v285, %v166
    %288 = vrot.lane.b32.xlu0 %v286, 127
    %v289 = vpop.permute.xlu0 %288
    %v290 = vrot.slane %v289, 2
    %v291 = vsel %vm210, %v289, %v290
    %v293 = vadd.f32 %v253, %v291
    %s294 = sld [smem:[#allocation4 + $0x19]]
    %v295 = vstv %s294
    %v296 = vmul.f32 %v295, %v166
    %298 = vrot.lane.b32.xlu0 %v296, 127
    %v299 = vpop.permute.xlu0 %298
    %v300 = vrot.slane %v299, 2
    %v301 = vsel %vm210, %v299, %v300
    %v303 = vadd.f32 %v263, %v301
    %s304 = sld [smem:[#allocation4 + $0x1a]]
    %v305 = vstv %s304
    %v306 = vmul.f32 %v305, %v166
    %308 = vrot.lane.b32.xlu0 %v306, 127
    %v309 = vpop.permute.xlu0 %308
    %v310 = vrot.slane %v309, 2
    %v311 = vsel %vm210, %v309, %v310
    %v313 = vadd.f32 %v273, %v311
    %s314 = sld [smem:[#allocation4 + $0x1b]]
    %v315 = vstv %s314
    %v316 = vmul.f32 %v315, %v166
    %318 = vrot.lane.b32.xlu0 %v316, 127
    %v319 = vpop.permute.xlu0 %318
    %v320 = vrot.slane %v319, 2
    %v321 = vsel %vm210, %v319, %v320
    %v323 = vadd.f32 %v283, %v321
    %s324 = sld [smem:[#allocation4 + $0x1c]]
    %v325 = vstv %s324
    %v326 = vmul.f32 %v325, %v185
    %328 = vrot.lane.b32.xlu0 %v326, 127
    %v329 = vpop.permute.xlu0 %328
    %v330 = vrot.slane %v329, 2
    %v331 = vsel %vm210, %v329, %v330
    %v333 = vadd.f32 %v293, %v331
    %s334 = sld [smem:[#allocation4 + $0x1d]]
    %v335 = vstv %s334
    %v336 = vmul.f32 %v335, %v185
    %338 = vrot.lane.b32.xlu0 %v336, 127
    %v339 = vpop.permute.xlu0 %338
    %v340 = vrot.slane %v339, 2
    %v341 = vsel %vm210, %v339, %v340
    %v343 = vadd.f32 %v303, %v341
    %s344 = sld [smem:[#allocation4 + $0x1e]]
    %v345 = vstv %s344
    %v346 = vmul.f32 %v345, %v185
    %348 = vrot.lane.b32.xlu0 %v346, 127
    %v349 = vpop.permute.xlu0 %348
    %v350 = vrot.slane %v349, 2
    %v351 = vsel %vm210, %v349, %v350
    %v353 = vadd.f32 %v313, %v351
    %s354 = sld [smem:[#allocation4 + $0x1f]]
    %v355 = vstv %s354
    %v356 = vmul.f32 %v355, %v185
    %358 = vrot.lane.b32.xlu0 %v356, 127
    %v359 = vpop.permute.xlu0 %358
    %v360 = vrot.slane %v359, 2
    %v361 = vsel %vm210, %v359, %v360
    %v363 = vadd.f32 %v323, %v361
    %365 = vrot.lane.b32.xlu0 %v104, 113
    %v366 = vpop.permute.xlu0 %365
    %v367 = vrot.slane %v366, 6
    %vm368 = vcmask 924672
    %v369 = vsel %vm368, %v367, %v366
    %v371 = vmul.f32 %v121, %v369
    %s372 = sld [smem:[#allocation4 + $0x20]]
    %v373 = vstv %s372
    %v374 = vmul.f32 %v373, %v371
    %376 = vrot.lane.b32.xlu0 %v374, 126
    %v377 = vpop.permute.xlu0 %376
    %v378 = vrot.slane %v377, 2
    %vm379 = vcmask 1031168
    %v380 = vsel %vm379, %v377, %v378
    %v382 = vadd.f32 %v333, %v380
    %s383 = sld [smem:[#allocation4 + $0x21]]
    %v384 = vstv %s383
    %v385 = vmul.f32 %v384, %v371
    %387 = vrot.lane.b32.xlu0 %v385, 126
    %v388 = vpop.permute.xlu0 %387
    %v389 = vrot.slane %v388, 2
    %v390 = vsel %vm379, %v388, %v389
    %v392 = vadd.f32 %v343, %v390
    %s393 = sld [smem:[#allocation4 + $0x22]]
    %v394 = vstv %s393
    %v395 = vmul.f32 %v394, %v371
    %397 = vrot.lane.b32.xlu0 %v395, 126
    %v398 = vpop.permute.xlu0 %397
    %v399 = vrot.slane %v398, 2
    %v400 = vsel %vm379, %v398, %v399
    %v402 = vadd.f32 %v353, %v400
    %s403 = sld [smem:[#allocation4 + $0x23]]
    %v404 = vstv %s403
    %v405 = vmul.f32 %v404, %v371
    %407 = vrot.lane.b32.xlu0 %v405, 126
    %v408 = vpop.permute.xlu0 %407
    %v409 = vrot.slane %v408, 2
    %v410 = vsel %vm379, %v408, %v409
    %v412 = vadd.f32 %v363, %v410
    %v413 = vmul.f32 %v147, %v369
    %s414 = sld [smem:[#allocation4 + $0x24]]
    %v415 = vstv %s414
    %v416 = vmul.f32 %v415, %v413
    %418 = vrot.lane.b32.xlu0 %v416, 126
    %v419 = vpop.permute.xlu0 %418
    %v420 = vrot.slane %v419, 2
    %v421 = vsel %vm379, %v419, %v420
    %v423 = vadd.f32 %v382, %v421
    %s424 = sld [smem:[#allocation4 + $0x25]]
    %v425 = vstv %s424
    %v426 = vmul.f32 %v425, %v413
    %428 = vrot.lane.b32.xlu0 %v426, 126
    %v429 = vpop.permute.xlu0 %428
    %v430 = vrot.slane %v429, 2
    %v431 = vsel %vm379, %v429, %v430
    %v433 = vadd.f32 %v392, %v431
    %s434 = sld [smem:[#allocation4 + $0x26]]
    %v435 = vstv %s434
    %v436 = vmul.f32 %v435, %v413
    %438 = vrot.lane.b32.xlu0 %v436, 126
    %v439 = vpop.permute.xlu0 %438
    %v440 = vrot.slane %v439, 2
    %v441 = vsel %vm379, %v439, %v440
    %v443 = vadd.f32 %v402, %v441
    %s444 = sld [smem:[#allocation4 + $0x27]]
    %v445 = vstv %s444
    %v446 = vmul.f32 %v445, %v413
    %448 = vrot.lane.b32.xlu0 %v446, 126
    %v449 = vpop.permute.xlu0 %448
    %v450 = vrot.slane %v449, 2
    %v451 = vsel %vm379, %v449, %v450
    %v453 = vadd.f32 %v412, %v451
    %v454 = vmul.f32 %v166, %v369
    %s455 = sld [smem:[#allocation4 + $0x28]]
    %v456 = vstv %s455
    %v457 = vmul.f32 %v456, %v454
    %459 = vrot.lane.b32.xlu0 %v457, 126
    %v460 = vpop.permute.xlu0 %459
    %v461 = vrot.slane %v460, 2
    %v462 = vsel %vm379, %v460, %v461
    %v464 = vadd.f32 %v423, %v462
    %s465 = sld [smem:[#allocation4 + $0x29]]
    %v466 = vstv %s465
    %v467 = vmul.f32 %v466, %v454
    %469 = vrot.lane.b32.xlu0 %v467, 126
    %v470 = vpop.permute.xlu0 %469
    %v471 = vrot.slane %v470, 2
    %v472 = vsel %vm379, %v470, %v471
    %v474 = vadd.f32 %v433, %v472
    %s475 = sld [smem:[#allocation4 + $0x2a]]
    %v476 = vstv %s475
    %v477 = vmul.f32 %v476, %v454
    %479 = vrot.lane.b32.xlu0 %v477, 126
    %v480 = vpop.permute.xlu0 %479
    %v481 = vrot.slane %v480, 2
    %v482 = vsel %vm379, %v480, %v481
    %v484 = vadd.f32 %v443, %v482
    %s485 = sld [smem:[#allocation4 + $0x2b]]
    %v486 = vstv %s485
    %v487 = vmul.f32 %v486, %v454
    %489 = vrot.lane.b32.xlu0 %v487, 126
    %v490 = vpop.permute.xlu0 %489
    %v491 = vrot.slane %v490, 2
    %v492 = vsel %vm379, %v490, %v491
    %v494 = vadd.f32 %v453, %v492
    %v495 = vmul.f32 %v185, %v369
    %s496 = sld [smem:[#allocation4 + $0x2c]]
    %v497 = vstv %s496
    %v498 = vmul.f32 %v497, %v495
    %500 = vrot.lane.b32.xlu0 %v498, 126
    %v501 = vpop.permute.xlu0 %500
    %v502 = vrot.slane %v501, 2
    %v503 = vsel %vm379, %v501, %v502
    %v505 = vadd.f32 %v464, %v503
    %s506 = sld [smem:[#allocation4 + $0x2d]]
    %v507 = vstv %s506
    %v508 = vmul.f32 %v507, %v495
    %510 = vrot.lane.b32.xlu0 %v508, 126
    %v511 = vpop.permute.xlu0 %510
    %v512 = vrot.slane %v511, 2
    %v513 = vsel %vm379, %v511, %v512
    %v515 = vadd.f32 %v474, %v513
    %s516 = sld [smem:[#allocation4 + $0x2e]]
    %v517 = vstv %s516
    %v518 = vmul.f32 %v517, %v495
    %520 = vrot.lane.b32.xlu0 %v518, 126
    %v521 = vpop.permute.xlu0 %520
    %v522 = vrot.slane %v521, 2
    %v523 = vsel %vm379, %v521, %v522
    %v525 = vadd.f32 %v484, %v523
    %s526 = sld [smem:[#allocation4 + $0x2f]]
    %v527 = vstv %s526
    %v528 = vmul.f32 %v527, %v495
    %530 = vrot.lane.b32.xlu0 %v528, 126
    %v531 = vpop.permute.xlu0 %530
    %v532 = vrot.slane %v531, 2
    %v533 = vsel %vm379, %v531, %v532
    %v535 = vadd.f32 %v494, %v533
    %536 = vrot.lane.b32.xlu0 %v103, 127
    %v537 = vpop.permute.xlu0 %536
    %v538 = vrot.slane %v537, 6
    %v539 = vsel %vm210, %v538, %v537
    %v541 = vmul.f32 %v121, %v539
    %s542 = sld [smem:[#allocation4 + $0x30]]
    %v543 = vstv %s542
    %v544 = vmul.f32 %v543, %v541
    %546 = vrot.lane.b32.xlu0 %v544, 112
    %v547 = vpop.permute.xlu0 %546
    %v548 = vrot.slane %v547, 2
    %vm549 = vcmask 916480
    %v550 = vsel %vm549, %v547, %v548
    %v552 = vadd.f32 %v505, %v550
    %s553 = sld [smem:[#allocation4 + $0x31]]
    %v554 = vstv %s553
    %v555 = vmul.f32 %v554, %v541
    %557 = vrot.lane.b32.xlu0 %v555, 112
    %v558 = vpop.permute.xlu0 %557
    %v559 = vrot.slane %v558, 2
    %v560 = vsel %vm549, %v558, %v559
    %v562 = vadd.f32 %v515, %v560
    %s563 = sld [smem:[#allocation4 + $0x32]]
    %v564 = vstv %s563
    %v565 = vmul.f32 %v564, %v541
    %567 = vrot.lane.b32.xlu0 %v565, 112
    %v568 = vpop.permute.xlu0 %567
    %v569 = vrot.slane %v568, 2
    %v570 = vsel %vm549, %v568, %v569
    %v572 = vadd.f32 %v525, %v570
    %s573 = sld [smem:[#allocation4 + $0x33]]
    %v574 = vstv %s573
    %v575 = vmul.f32 %v574, %v541
    %577 = vrot.lane.b32.xlu0 %v575, 112
    %v578 = vpop.permute.xlu0 %577
    %v579 = vrot.slane %v578, 2
    %v580 = vsel %vm549, %v578, %v579
    %v582 = vadd.f32 %v535, %v580
    %v583 = vmul.f32 %v147, %v539
    %s584 = sld [smem:[#allocation4 + $0x34]]
    %v585 = vstv %s584
    %v586 = vmul.f32 %v585, %v583
    %588 = vrot.lane.b32.xlu0 %v586, 112
    %v589 = vpop.permute.xlu0 %588
    %v590 = vrot.slane %v589, 2
    %v591 = vsel %vm549, %v589, %v590
    %v593 = vadd.f32 %v552, %v591
    %s594 = sld [smem:[#allocation4 + $0x35]]
    %v595 = vstv %s594
    %v596 = vmul.f32 %v595, %v583
    %598 = vrot.lane.b32.xlu0 %v596, 112
    %v599 = vpop.permute.xlu0 %598
    %v600 = vrot.slane %v599, 2
    %v601 = vsel %vm549, %v599, %v600
    %v603 = vadd.f32 %v562, %v601
    %s604 = sld [smem:[#allocation4 + $0x36]]
    %v605 = vstv %s604
    %v606 = vmul.f32 %v605, %v583
    %608 = vrot.lane.b32.xlu0 %v606, 112
    %v609 = vpop.permute.xlu0 %608
    %v610 = vrot.slane %v609, 2
    %v611 = vsel %vm549, %v609, %v610
    %v613 = vadd.f32 %v572, %v611
    %s614 = sld [smem:[#allocation4 + $0x37]]
    %v615 = vstv %s614
    %v616 = vmul.f32 %v615, %v583
    %618 = vrot.lane.b32.xlu0 %v616, 112
    %v619 = vpop.permute.xlu0 %618
    %v620 = vrot.slane %v619, 2
    %v621 = vsel %vm549, %v619, %v620
    %v623 = vadd.f32 %v582, %v621
    %v624 = vmul.f32 %v166, %v539
    %s625 = sld [smem:[#allocation4 + $0x38]]
    %v626 = vstv %s625
    %v627 = vmul.f32 %v626, %v624
    %629 = vrot.lane.b32.xlu0 %v627, 112
    %v630 = vpop.permute.xlu0 %629
    %v631 = vrot.slane %v630, 2
    %v632 = vsel %vm549, %v630, %v631
    %v634 = vadd.f32 %v593, %v632
    %s635 = sld [smem:[#allocation4 + $0x39]]
    %v636 = vstv %s635
    %v637 = vmul.f32 %v636, %v624
    %639 = vrot.lane.b32.xlu0 %v637, 112
    %v640 = vpop.permute.xlu0 %639
    %v641 = vrot.slane %v640, 2
    %v642 = vsel %vm549, %v640, %v641
    %v644 = vadd.f32 %v603, %v642
    %s645 = sld [smem:[#allocation4 + $0x3a]]
    %v646 = vstv %s645
    %v647 = vmul.f32 %v646, %v624
    %649 = vrot.lane.b32.xlu0 %v647, 112
    %v650 = vpop.permute.xlu0 %649
    %v651 = vrot.slane %v650, 2
    %v652 = vsel %vm549, %v650, %v651
    %v654 = vadd.f32 %v613, %v652
    %s655 = sld [smem:[#allocation4 + $0x3b]]
    %v656 = vstv %s655
    %v657 = vmul.f32 %v656, %v624
    %659 = vrot.lane.b32.xlu0 %v657, 112
    %v660 = vpop.permute.xlu0 %659
    %v661 = vrot.slane %v660, 2
    %v662 = vsel %vm549, %v660, %v661
    %v664 = vadd.f32 %v623, %v662
    %v665 = vmul.f32 %v185, %v539
    %s666 = sld [smem:[#allocation4 + $0x3c]]
    %v667 = vstv %s666
    %v668 = vmul.f32 %v667, %v665
    %670 = vrot.lane.b32.xlu0 %v668, 112
    %v671 = vpop.permute.xlu0 %670
    %v672 = vrot.slane %v671, 2
    %v673 = vsel %vm549, %v671, %v672
    %v675 = vadd.f32 %v634, %v673
    %s676 = sld [smem:[#allocation4 + $0x3d]]
    %v677 = vstv %s676
    %v678 = vmul.f32 %v677, %v665
    %680 = vrot.lane.b32.xlu0 %v678, 112
    %v681 = vpop.permute.xlu0 %680
    %v682 = vrot.slane %v681, 2
    %v683 = vsel %vm549, %v681, %v682
    %v685 = vadd.f32 %v644, %v683
    %s686 = sld [smem:[#allocation4 + $0x3e]]
    %v687 = vstv %s686
    %v688 = vmul.f32 %v687, %v665
    %690 = vrot.lane.b32.xlu0 %v688, 112
    %v691 = vpop.permute.xlu0 %690
    %v692 = vrot.slane %v691, 2
    %v693 = vsel %vm549, %v691, %v692
    %v695 = vadd.f32 %v654, %v693
    %s696 = sld [smem:[#allocation4 + $0x3f]]
    %v697 = vstv %s696
    %v698 = vmul.f32 %v697, %v665
    %700 = vrot.lane.b32.xlu0 %v698, 112
    %v701 = vpop.permute.xlu0 %700
    %v702 = vrot.slane %v701, 2
    %v703 = vsel %vm549, %v701, %v702
    %v705 = vadd.f32 %v664, %v703
    %v706 = vld [vmem:[#allocation2 + $0x2] sm:$0xf]
    %s707 = sld [smem:[#allocation4 + $0x40]]
    %v708 = vstv %s707
    %v709 = vmul.f32 %v708, %v706
    %711 = vrot.lane.b32.xlu0 %v709, 111
    %v712 = vpop.permute.xlu0 %711
    %v713 = vrot.slane %v712, 6
    %v714 = vsel %vm126, %v713, %v712
    %v716 = vadd.f32 %v675, %v714
    %s717 = sld [smem:[#allocation4 + $0x41]]
    %v718 = vstv %s717
    %v719 = vmul.f32 %v718, %v706
    %721 = vrot.lane.b32.xlu0 %v719, 111
    %v722 = vpop.permute.xlu0 %721
    %v723 = vrot.slane %v722, 6
    %v724 = vsel %vm126, %v723, %v722
    %v726 = vadd.f32 %v685, %v724
    %s727 = sld [smem:[#allocation4 + $0x42]]
    %v728 = vstv %s727
    %v729 = vmul.f32 %v728, %v706
    %731 = vrot.lane.b32.xlu0 %v729, 111
    %v732 = vpop.permute.xlu0 %731
    %v733 = vrot.slane %v732, 6
    %v734 = vsel %vm126, %v733, %v732
    %v736 = vadd.f32 %v695, %v734
    %s737 = sld [smem:[#allocation4 + $0x43]]
    %v738 = vstv %s737
    %v739 = vmul.f32 %v738, %v706
    %741 = vrot.lane.b32.xlu0 %v739, 111
    %v742 = vpop.permute.xlu0 %741
    %v743 = vrot.slane %v742, 6
    %v744 = vsel %vm126, %v743, %v742
    %v746 = vadd.f32 %v705, %v744
    %v747 = vld [vmem:[%s146 + $0x2] sm:$0xf]
    %s748 = sld [smem:[#allocation4 + $0x44]]
    %v749 = vstv %s748
    %v750 = vmul.f32 %v749, %v747
    %752 = vrot.lane.b32.xlu0 %v750, 111
    %v753 = vpop.permute.xlu0 %752
    %v754 = vrot.slane %v753, 6
    %v755 = vsel %vm126, %v754, %v753
    %v757 = vadd.f32 %v716, %v755
    %s758 = sld [smem:[#allocation4 + $0x45]]
    %v759 = vstv %s758
    %v760 = vmul.f32 %v759, %v747
    %762 = vrot.lane.b32.xlu0 %v760, 111
    %v763 = vpop.permute.xlu0 %762
    %v764 = vrot.slane %v763, 6
    %v765 = vsel %vm126, %v764, %v763
    %v767 = vadd.f32 %v726, %v765
    %s768 = sld [smem:[#allocation4 + $0x46]]
    %v769 = vstv %s768
    %v770 = vmul.f32 %v769, %v747
    %772 = vrot.lane.b32.xlu0 %v770, 111
    %v773 = vpop.permute.xlu0 %772
    %v774 = vrot.slane %v773, 6
    %v775 = vsel %vm126, %v774, %v773
    %v777 = vadd.f32 %v736, %v775
    %s778 = sld [smem:[#allocation4 + $0x47]]
    %v779 = vstv %s778
    %v780 = vmul.f32 %v779, %v747
    %782 = vrot.lane.b32.xlu0 %v780, 111
    %v783 = vpop.permute.xlu0 %782
    %v784 = vrot.slane %v783, 6
    %v785 = vsel %vm126, %v784, %v783
    %v787 = vadd.f32 %v746, %v785
    %v788 = vld [vmem:[%s165 + $0x2] sm:$0xf]
    %s789 = sld [smem:[#allocation4 + $0x48]]
    %v790 = vstv %s789
    %v791 = vmul.f32 %v790, %v788
    %793 = vrot.lane.b32.xlu0 %v791, 111
    %v794 = vpop.permute.xlu0 %793
    %v795 = vrot.slane %v794, 6
    %v796 = vsel %vm126, %v795, %v794
    %v798 = vadd.f32 %v757, %v796
    %s799 = sld [smem:[#allocation4 + $0x49]]
    %v800 = vstv %s799
    %v801 = vmul.f32 %v800, %v788
    %803 = vrot.lane.b32.xlu0 %v801, 111
    %v804 = vpop.permute.xlu0 %803
    %v805 = vrot.slane %v804, 6
    %v806 = vsel %vm126, %v805, %v804
    %v808 = vadd.f32 %v767, %v806
    %s809 = sld [smem:[#allocation4 + $0x4a]]
    %v810 = vstv %s809
    %v811 = vmul.f32 %v810, %v788
    %813 = vrot.lane.b32.xlu0 %v811, 111
    %v814 = vpop.permute.xlu0 %813
    %v815 = vrot.slane %v814, 6
    %v816 = vsel %vm126, %v815, %v814
    %v818 = vadd.f32 %v777, %v816
    %s819 = sld [smem:[#allocation4 + $0x4b]]
    %v820 = vstv %s819
    %v821 = vmul.f32 %v820, %v788
    %823 = vrot.lane.b32.xlu0 %v821, 111
    %v824 = vpop.permute.xlu0 %823
    %v825 = vrot.slane %v824, 6
    %v826 = vsel %vm126, %v825, %v824
    %v828 = vadd.f32 %v787, %v826
    %v829 = vld [vmem:[%s184 + $0x2] sm:$0xf]
    %s830 = sld [smem:[#allocation4 + $0x4c]]
    %v831 = vstv %s830
    %v832 = vmul.f32 %v831, %v829
    %834 = vrot.lane.b32.xlu0 %v832, 111
    %v835 = vpop.permute.xlu0 %834
    %v836 = vrot.slane %v835, 6
    %v837 = vsel %vm126, %v836, %v835
    %v839 = vadd.f32 %v798, %v837
    %s840 = sld [smem:[#allocation4 + $0x4d]]
    %v841 = vstv %s840
    %v842 = vmul.f32 %v841, %v829
    %844 = vrot.lane.b32.xlu0 %v842, 111
    %v845 = vpop.permute.xlu0 %844
    %v846 = vrot.slane %v845, 6
    %v847 = vsel %vm126, %v846, %v845
    %v849 = vadd.f32 %v808, %v847
    %s850 = sld [smem:[#allocation4 + $0x4e]]
    %v851 = vstv %s850
    %v852 = vmul.f32 %v851, %v829
    %854 = vrot.lane.b32.xlu0 %v852, 111
    %v855 = vpop.permute.xlu0 %854
    %v856 = vrot.slane %v855, 6
    %v857 = vsel %vm126, %v856, %v855
    %v859 = vadd.f32 %v818, %v857
    %s860 = sld [smem:[#allocation4 + $0x4f]]
    %v861 = vstv %s860
    %v862 = vmul.f32 %v861, %v829
    %864 = vrot.lane.b32.xlu0 %v862, 111
    %v865 = vpop.permute.xlu0 %864
    %v866 = vrot.slane %v865, 6
    %v867 = vsel %vm126, %v866, %v865
    %v869 = vadd.f32 %v828, %v867
    %v870 = vld [vmem:[#allocation2 + $0x2] sm:$0x3f]
    %871 = vrot.lane.b32.xlu0 %v104, 1
    %v872 = vpop.permute.xlu0 %871
    %v873 = vrot.slane %v872, 6
    %vm874 = vcmask 7168
    %v875 = vsel %vm874, %v873, %v872
    %v877 = vmul.f32 %v870, %v875
    %s878 = sld [smem:[#allocation4 + $0x50]]
    %v879 = vstv %s878
    %v880 = vmul.f32 %v879, %v877
    %882 = vrot.lane.b32.xlu0 %v880, 110
    %v883 = vpop.permute.xlu0 %882
    %v884 = vrot.slane %v883, 6
    %vm885 = vcmask 900096
    %v886 = vsel %vm885, %v884, %v883
    %v888 = vadd.f32 %v839, %v886
    %s889 = sld [smem:[#allocation4 + $0x51]]
    %v890 = vstv %s889
    %v891 = vmul.f32 %v890, %v877
    %893 = vrot.lane.b32.xlu0 %v891, 110
    %v894 = vpop.permute.xlu0 %893
    %v895 = vrot.slane %v894, 6
    %v896 = vsel %vm885, %v895, %v894
    %v898 = vadd.f32 %v849, %v896
    %s899 = sld [smem:[#allocation4 + $0x52]]
    %v900 = vstv %s899
    %v901 = vmul.f32 %v900, %v877
    %903 = vrot.lane.b32.xlu0 %v901, 110
    %v904 = vpop.permute.xlu0 %903
    %v905 = vrot.slane %v904, 6
    %v906 = vsel %vm885, %v905, %v904
    %v908 = vadd.f32 %v859, %v906
    %s909 = sld [smem:[#allocation4 + $0x53]]
    %v910 = vstv %s909
    %v911 = vmul.f32 %v910, %v877
    %913 = vrot.lane.b32.xlu0 %v911, 110
    %v914 = vpop.permute.xlu0 %913
    %v915 = vrot.slane %v914, 6
    %v916 = vsel %vm885, %v915, %v914
    %v918 = vadd.f32 %v869, %v916
    %v919 = vld [vmem:[%s146 + $0x2] sm:$0x3f]
    %v920 = vmul.f32 %v919, %v875
    %s921 = sld [smem:[#allocation4 + $0x54]]
    %v922 = vstv %s921
    %v923 = vmul.f32 %v922, %v920
    %925 = vrot.lane.b32.xlu0 %v923, 110
    %v926 = vpop.permute.xlu0 %925
    %v927 = vrot.slane %v926, 6
    %v928 = vsel %vm885, %v927, %v926
    %v930 = vadd.f32 %v888, %v928
    %s931 = sld [smem:[#allocation4 + $0x55]]
    %v932 = vstv %s931
    %v933 = vmul.f32 %v932, %v920
    %935 = vrot.lane.b32.xlu0 %v933, 110
    %v936 = vpop.permute.xlu0 %935
    %v937 = vrot.slane %v936, 6
    %v938 = vsel %vm885, %v937, %v936
    %v940 = vadd.f32 %v898, %v938
    %s941 = sld [smem:[#allocation4 + $0x56]]
    %v942 = vstv %s941
    %v943 = vmul.f32 %v942, %v920
    %945 = vrot.lane.b32.xlu0 %v943, 110
    %v946 = vpop.permute.xlu0 %945
    %v947 = vrot.slane %v946, 6
    %v948 = vsel %vm885, %v947, %v946
    %v950 = vadd.f32 %v908, %v948
    %s951 = sld [smem:[#allocation4 + $0x57]]
    %v952 = vstv %s951
    %v953 = vmul.f32 %v952, %v920
    %955 = vrot.lane.b32.xlu0 %v953, 110
    %v956 = vpop.permute.xlu0 %955
    %v957 = vrot.slane %v956, 6
    %v958 = vsel %vm885, %v957, %v956
    %v960 = vadd.f32 %v918, %v958
    %v961 = vld [vmem:[%s165 + $0x2] sm:$0x3f]
    %v962 = vmul.f32 %v961, %v875
    %s963 = sld [smem:[#allocation4 + $0x58]]
    %v964 = vstv %s963
    %v965 = vmul.f32 %v964, %v962
    %967 = vrot.lane.b32.xlu0 %v965, 110
    %v968 = vpop.permute.xlu0 %967
    %v969 = vrot.slane %v968, 6
    %v970 = vsel %vm885, %v969, %v968
    %v972 = vadd.f32 %v930, %v970
    %s973 = sld [smem:[#allocation4 + $0x59]]
    %v974 = vstv %s973
    %v975 = vmul.f32 %v974, %v962
    %977 = vrot.lane.b32.xlu0 %v975, 110
    %v978 = vpop.permute.xlu0 %977
    %v979 = vrot.slane %v978, 6
    %v980 = vsel %vm885, %v979, %v978
    %v982 = vadd.f32 %v940, %v980
    %s983 = sld [smem:[#allocation4 + $0x5a]]
    %v984 = vstv %s983
    %v985 = vmul.f32 %v984, %v962
    %987 = vrot.lane.b32.xlu0 %v985, 110
    %v988 = vpop.permute.xlu0 %987
    %v989 = vrot.slane %v988, 6
    %v990 = vsel %vm885, %v989, %v988
    %v992 = vadd.f32 %v950, %v990
    %s993 = sld [smem:[#allocation4 + $0x5b]]
    %v994 = vstv %s993
    %v995 = vmul.f32 %v994, %v962
    %997 = vrot.lane.b32.xlu0 %v995, 110
    %v998 = vpop.permute.xlu0 %997
    %v999 = vrot.slane %v998, 6
    %v1000 = vsel %vm885, %v999, %v998
    %v1002 = vadd.f32 %v960, %v1000
    %v1003 = vld [vmem:[%s184 + $0x2] sm:$0x3f]
    %v1004 = vmul.f32 %v1003, %v875
    %s1005 = sld [smem:[#allocation4 + $0x5c]]
    %v1006 = vstv %s1005
    %v1007 = vmul.f32 %v1006, %v1004
    %1009 = vrot.lane.b32.xlu0 %v1007, 110
    %v1010 = vpop.permute.xlu0 %1009
    %v1011 = vrot.slane %v1010, 6
    %v1012 = vsel %vm885, %v1011, %v1010
    %v1014 = vadd.f32 %v972, %v1012
    %s1015 = sld [smem:[#allocation4 + $0x5d]]
    %v1016 = vstv %s1015
    %v1017 = vmul.f32 %v1016, %v1004
    %1019 = vrot.lane.b32.xlu0 %v1017, 110
    %v1020 = vpop.permute.xlu0 %1019
    %v1021 = vrot.slane %v1020, 6
    %v1022 = vsel %vm885, %v1021, %v1020
    %v1024 = vadd.f32 %v982, %v1022
    %s1025 = sld [smem:[#allocation4 + $0x5e]]
    %v1026 = vstv %s1025
    %v1027 = vmul.f32 %v1026, %v1004
    %1029 = vrot.lane.b32.xlu0 %v1027, 110
    %v1030 = vpop.permute.xlu0 %1029
    %v1031 = vrot.slane %v1030, 6
    %v1032 = vsel %vm885, %v1031, %v1030
    %v1034 = vadd.f32 %v992, %v1032
    %s1035 = sld [smem:[#allocation4 + $0x5f]]
    %v1036 = vstv %s1035
    %v1037 = vmul.f32 %v1036, %v1004
    %1039 = vrot.lane.b32.xlu0 %v1037, 110
    %v1040 = vpop.permute.xlu0 %1039
    %v1041 = vrot.slane %v1040, 6
    %v1042 = vsel %vm885, %v1041, %v1040
    %v1044 = vadd.f32 %v1002, %v1042
    %1045 = vrot.lane.b32.xlu0 %v103, 15
    %v1046 = vpop.permute.xlu0 %1045
    %v1047 = vrot.slane %v1046, 6
    %vm1048 = vcmask 121856
    %v1049 = vsel %vm1048, %v1047, %v1046
    %v1051 = vmul.f32 %v870, %v1049
    %s1052 = sld [smem:[#allocation4 + $0x60]]
    %v1053 = vstv %s1052
    %v1054 = vmul.f32 %v1053, %v1051
    %1056 = vrot.lane.b32.xlu0 %v1054, 96
    %v1057 = vpop.permute.xlu0 %1056
    %v1058 = vrot.slane %v1057, 6
    %vm1059 = vcmask 785408
    %v1060 = vsel %vm1059, %v1058, %v1057
    %v1062 = vadd.f32 %v1014, %v1060
    %s1063 = sld [smem:[#allocation4 + $0x61]]
    %v1064 = vstv %s1063
    %v1065 = vmul.f32 %v1064, %v1051
    %1067 = vrot.lane.b32.xlu0 %v1065, 96
    %v1068 = vpop.permute.xlu0 %1067
    %v1069 = vrot.slane %v1068, 6
    %v1070 = vsel %vm1059, %v1069, %v1068
    %v1072 = vadd.f32 %v1024, %v1070
    %s1073 = sld [smem:[#allocation4 + $0x62]]
    %v1074 = vstv %s1073
    %v1075 = vmul.f32 %v1074, %v1051
    %1077 = vrot.lane.b32.xlu0 %v1075, 96
    %v1078 = vpop.permute.xlu0 %1077
    %v1079 = vrot.slane %v1078, 6
    %v1080 = vsel %vm1059, %v1079, %v1078
    %v1082 = vadd.f32 %v1034, %v1080
    %s1083 = sld [smem:[#allocation4 + $0x63]]
    %v1084 = vstv %s1083
    %v1085 = vmul.f32 %v1084, %v1051
    %1087 = vrot.lane.b32.xlu0 %v1085, 96
    %v1088 = vpop.permute.xlu0 %1087
    %v1089 = vrot.slane %v1088, 6
    %v1090 = vsel %vm1059, %v1089, %v1088
    %v1092 = vadd.f32 %v1044, %v1090
    %v1093 = vmul.f32 %v919, %v1049
    %s1094 = sld [smem:[#allocation4 + $0x64]]
    %v1095 = vstv %s1094
    %v1096 = vmul.f32 %v1095, %v1093
    %1098 = vrot.lane.b32.xlu0 %v1096, 96
    %v1099 = vpop.permute.xlu0 %1098
    %v1100 = vrot.slane %v1099, 6
    %v1101 = vsel %vm1059, %v1100, %v1099
    %v1103 = vadd.f32 %v1062, %v1101
    %s1104 = sld [smem:[#allocation4 + $0x65]]
    %v1105 = vstv %s1104
    %v1106 = vmul.f32 %v1105, %v1093
    %1108 = vrot.lane.b32.xlu0 %v1106, 96
    %v1109 = vpop.permute.xlu0 %1108
    %v1110 = vrot.slane %v1109, 6
    %v1111 = vsel %vm1059, %v1110, %v1109
    %v1113 = vadd.f32 %v1072, %v1111
    %s1114 = sld [smem:[#allocation4 + $0x66]]
    %v1115 = vstv %s1114
    %v1116 = vmul.f32 %v1115, %v1093
    %1118 = vrot.lane.b32.xlu0 %v1116, 96
    %v1119 = vpop.permute.xlu0 %1118
    %v1120 = vrot.slane %v1119, 6
    %v1121 = vsel %vm1059, %v1120, %v1119
    %v1123 = vadd.f32 %v1082, %v1121
    %s1124 = sld [smem:[#allocation4 + $0x67]]
    %v1125 = vstv %s1124
    %v1126 = vmul.f32 %v1125, %v1093
    %1128 = vrot.lane.b32.xlu0 %v1126, 96
    %v1129 = vpop.permute.xlu0 %1128
    %v1130 = vrot.slane %v1129, 6
    %v1131 = vsel %vm1059, %v1130, %v1129
    %v1133 = vadd.f32 %v1092, %v1131
    %v1134 = vmul.f32 %v961, %v1049
    %s1135 = sld [smem:[#allocation4 + $0x68]]
    %v1136 = vstv %s1135
    %v1137 = vmul.f32 %v1136, %v1134
    %1139 = vrot.lane.b32.xlu0 %v1137, 96
    %v1140 = vpop.permute.xlu0 %1139
    %v1141 = vrot.slane %v1140, 6
    %v1142 = vsel %vm1059, %v1141, %v1140
    %v1144 = vadd.f32 %v1103, %v1142
    %s1145 = sld [smem:[#allocation4 + $0x69]]
    %v1146 = vstv %s1145
    %v1147 = vmul.f32 %v1146, %v1134
    %1149 = vrot.lane.b32.xlu0 %v1147, 96
    %v1150 = vpop.permute.xlu0 %1149
    %v1151 = vrot.slane %v1150, 6
    %v1152 = vsel %vm1059, %v1151, %v1150
    %v1154 = vadd.f32 %v1113, %v1152
    %s1155 = sld [smem:[#allocation4 + $0x6a]]
    %v1156 = vstv %s1155
    %v1157 = vmul.f32 %v1156, %v1134
    %1159 = vrot.lane.b32.xlu0 %v1157, 96
    %v1160 = vpop.permute.xlu0 %1159
    %v1161 = vrot.slane %v1160, 6
    %v1162 = vsel %vm1059, %v1161, %v1160
    %v1164 = vadd.f32 %v1123, %v1162
    %s1165 = sld [smem:[#allocation4 + $0x6b]]
    %v1166 = vstv %s1165
    %v1167 = vmul.f32 %v1166, %v1134
    %1169 = vrot.lane.b32.xlu0 %v1167, 96
    %v1170 = vpop.permute.xlu0 %1169
    %v1171 = vrot.slane %v1170, 6
    %v1172 = vsel %vm1059, %v1171, %v1170
    %v1174 = vadd.f32 %v1133, %v1172
    %v1175 = vmul.f32 %v1003, %v1049
    %s1176 = sld [smem:[#allocation4 + $0x6c]]
    %v1177 = vstv %s1176
    %v1178 = vmul.f32 %v1177, %v1175
    %1180 = vrot.lane.b32.xlu0 %v1178, 96
    %v1181 = vpop.permute.xlu0 %1180
    %v1182 = vrot.slane %v1181, 6
    %v1183 = vsel %vm1059, %v1182, %v1181
    %v1185 = vadd.f32 %v1144, %v1183
    %s1186 = sld [smem:[#allocation4 + $0x6d]]
    %v1187 = vstv %s1186
    %v1188 = vmul.f32 %v1187, %v1175
    %1190 = vrot.lane.b32.xlu0 %v1188, 96
    %v1191 = vpop.permute.xlu0 %1190
    %v1192 = vrot.slane %v1191, 6
    %v1193 = vsel %vm1059, %v1192, %v1191
    %v1195 = vadd.f32 %v1154, %v1193
    %s1196 = sld [smem:[#allocation4 + $0x6e]]
    %v1197 = vstv %s1196
    %v1198 = vmul.f32 %v1197, %v1175
    %1200 = vrot.lane.b32.xlu0 %v1198, 96
    %v1201 = vpop.permute.xlu0 %1200
    %v1202 = vrot.slane %v1201, 6
    %v1203 = vsel %vm1059, %v1202, %v1201
    %v1205 = vadd.f32 %v1164, %v1203
    %s1206 = sld [smem:[#allocation4 + $0x6f]]
    %v1207 = vstv %s1206
    %v1208 = vmul.f32 %v1207, %v1175
    %1210 = vrot.lane.b32.xlu0 %v1208, 96
    %v1211 = vpop.permute.xlu0 %1210
    %v1212 = vrot.slane %v1211, 6
    %v1213 = vsel %vm1059, %v1212, %v1211
    %v1215 = vadd.f32 %v1174, %v1213
    %s1216 = sld [smem:[#allocation4 + $0x70]]
    %v1217 = vstv %s1216
    %v1218 = vmul.f32 %v1217, %v870
    %1220 = vrot.lane.b32.xlu0 %v1218, 95
    %v1221 = vpop.permute.xlu0 %1220
    %v1222 = vrot.slane %v1221, 6
    %vm1223 = vcmask 777216
    %v1224 = vsel %vm1223, %v1222, %v1221
    %v1226 = vadd.f32 %v1185, %v1224
    %s1227 = sld [smem:[#allocation4 + $0x71]]
    %v1228 = vstv %s1227
    %v1229 = vmul.f32 %v1228, %v870
    %1231 = vrot.lane.b32.xlu0 %v1229, 95
    %v1232 = vpop.permute.xlu0 %1231
    %v1233 = vrot.slane %v1232, 6
    %v1234 = vsel %vm1223, %v1233, %v1232
    %v1236 = vadd.f32 %v1195, %v1234
    %s1237 = sld [smem:[#allocation4 + $0x72]]
    %v1238 = vstv %s1237
    %v1239 = vmul.f32 %v1238, %v870
    %1241 = vrot.lane.b32.xlu0 %v1239, 95
    %v1242 = vpop.permute.xlu0 %1241
    %v1243 = vrot.slane %v1242, 6
    %v1244 = vsel %vm1223, %v1243, %v1242
    %v1246 = vadd.f32 %v1205, %v1244
    %s1247 = sld [smem:[#allocation4 + $0x73]]
    %v1248 = vstv %s1247
    %v1249 = vmul.f32 %v1248, %v870
    %1251 = vrot.lane.b32.xlu0 %v1249, 95
    %v1252 = vpop.permute.xlu0 %1251
    %v1253 = vrot.slane %v1252, 6
    %v1254 = vsel %vm1223, %v1253, %v1252
    %v1256 = vadd.f32 %v1215, %v1254
    %s1257 = sld [smem:[#allocation4 + $0x74]]
    %v1258 = vstv %s1257
    %v1259 = vmul.f32 %v1258, %v919
    %1261 = vrot.lane.b32.xlu0 %v1259, 95
    %v1262 = vpop.permute.xlu0 %1261
    %v1263 = vrot.slane %v1262, 6
    %v1264 = vsel %vm1223, %v1263, %v1262
    %v1266 = vadd.f32 %v1226, %v1264
    %s1267 = sld [smem:[#allocation4 + $0x75]]
    %v1268 = vstv %s1267
    %v1269 = vmul.f32 %v1268, %v919
    %1271 = vrot.lane.b32.xlu0 %v1269, 95
    %v1272 = vpop.permute.xlu0 %1271
    %v1273 = vrot.slane %v1272, 6
    %v1274 = vsel %vm1223, %v1273, %v1272
    %v1276 = vadd.f32 %v1236, %v1274
    %s1277 = sld [smem:[#allocation4 + $0x76]]
    %v1278 = vstv %s1277
    %v1279 = vmul.f32 %v1278, %v919
    %1281 = vrot.lane.b32.xlu0 %v1279, 95
    %v1282 = vpop.permute.xlu0 %1281
    %v1283 = vrot.slane %v1282, 6
    %v1284 = vsel %vm1223, %v1283, %v1282
    %v1286 = vadd.f32 %v1246, %v1284
    %s1287 = sld [smem:[#allocation4 + $0x77]]
    %v1288 = vstv %s1287
    %v1289 = vmul.f32 %v1288, %v919
    %1291 = vrot.lane.b32.xlu0 %v1289, 95
    %v1292 = vpop.permute.xlu0 %1291
    %v1293 = vrot.slane %v1292, 6
    %v1294 = vsel %vm1223, %v1293, %v1292
    %v1296 = vadd.f32 %v1256, %v1294
    %s1297 = sld [smem:[#allocation4 + $0x78]]
    %v1298 = vstv %s1297
    %v1299 = vmul.f32 %v1298, %v961
    %1301 = vrot.lane.b32.xlu0 %v1299, 95
    %v1302 = vpop.permute.xlu0 %1301
    %v1303 = vrot.slane %v1302, 6
    %v1304 = vsel %vm1223, %v1303, %v1302
    %v1306 = vadd.f32 %v1266, %v1304
    %s1307 = sld [smem:[#allocation4 + $0x79]]
    %v1308 = vstv %s1307
    %v1309 = vmul.f32 %v1308, %v961
    %1311 = vrot.lane.b32.xlu0 %v1309, 95
    %v1312 = vpop.permute.xlu0 %1311
    %v1313 = vrot.slane %v1312, 6
    %v1314 = vsel %vm1223, %v1313, %v1312
    %v1316 = vadd.f32 %v1276, %v1314
    %s1317 = sld [smem:[#allocation4 + $0x7a]]
    %v1318 = vstv %s1317
    %v1319 = vmul.f32 %v1318, %v961
    %1321 = vrot.lane.b32.xlu0 %v1319, 95
    %v1322 = vpop.permute.xlu0 %1321
    %v1323 = vrot.slane %v1322, 6
    %v1324 = vsel %vm1223, %v1323, %v1322
    %v1326 = vadd.f32 %v1286, %v1324
    %s1327 = sld [smem:[#allocation4 + $0x7b]]
    %v1328 = vstv %s1327
    %v1329 = vmul.f32 %v1328, %v961
    %1331 = vrot.lane.b32.xlu0 %v1329, 95
    %v1332 = vpop.permute.xlu0 %1331
    %v1333 = vrot.slane %v1332, 6
    %v1334 = vsel %vm1223, %v1333, %v1332
    %v1336 = vadd.f32 %v1296, %v1334
    %s1337 = sld [smem:[#allocation4 + $0x7c]]
    %v1338 = vstv %s1337
    %v1339 = vmul.f32 %v1338, %v1003
    %1341 = vrot.lane.b32.xlu0 %v1339, 95
    %v1342 = vpop.permute.xlu0 %1341
    %v1343 = vrot.slane %v1342, 6
    %v1344 = vsel %vm1223, %v1343, %v1342
    %v1346 = vadd.f32 %v1306, %v1344
    %s1347 = sld [smem:[#allocation4 + $0x7d]]
    %v1348 = vstv %s1347
    %v1349 = vmul.f32 %v1348, %v1003
    %1351 = vrot.lane.b32.xlu0 %v1349, 95
    %v1352 = vpop.permute.xlu0 %1351
    %v1353 = vrot.slane %v1352, 6
    %v1354 = vsel %vm1223, %v1353, %v1352
    %v1356 = vadd.f32 %v1316, %v1354
    %s1357 = sld [smem:[#allocation4 + $0x7e]]
    %v1358 = vstv %s1357
    %v1359 = vmul.f32 %v1358, %v1003
    %1361 = vrot.lane.b32.xlu0 %v1359, 95
    %v1362 = vpop.permute.xlu0 %1361
    %v1363 = vrot.slane %v1362, 6
    %v1364 = vsel %vm1223, %v1363, %v1362
    %v1366 = vadd.f32 %v1326, %v1364
    %s1367 = sld [smem:[#allocation4 + $0x7f]]
    %v1368 = vstv %s1367
    %v1369 = vmul.f32 %v1368, %v1003
    %1371 = vrot.lane.b32.xlu0 %v1369, 95
    %v1372 = vpop.permute.xlu0 %1371
    %v1373 = vrot.slane %v1372, 6
    %v1374 = vsel %vm1223, %v1373, %v1372
    %v1376 = vadd.f32 %v1336, %v1374
    %1377 = vrot.lane.b32.xlu0 %v104, 17
    %v1378 = vpop.permute.xlu0 %1377
    %v1379 = vrot.slane %v1378, 6
    %vm1380 = vcmask 138240
    %v1381 = vsel %vm1380, %v1379, %v1378
    %v1383 = vmul.f32 %v870, %v1381
    %s1384 = sld [smem:[#allocation4 + $0x80]]
    %v1385 = vstv %s1384
    %v1386 = vmul.f32 %v1385, %v1383
    %1388 = vrot.lane.b32.xlu0 %v1386, 94
    %v1389 = vpop.permute.xlu0 %1388
    %v1390 = vrot.slane %v1389, 6
    %vm1391 = vcmask 769024
    %v1392 = vsel %vm1391, %v1390, %v1389
    %v1394 = vadd.f32 %v1346, %v1392
    %s1395 = sld [smem:[#allocation4 + $0x81]]
    %v1396 = vstv %s1395
    %v1397 = vmul.f32 %v1396, %v1383
    %1399 = vrot.lane.b32.xlu0 %v1397, 94
    %v1400 = vpop.permute.xlu0 %1399
    %v1401 = vrot.slane %v1400, 6
    %v1402 = vsel %vm1391, %v1401, %v1400
    %v1404 = vadd.f32 %v1356, %v1402
    %s1405 = sld [smem:[#allocation4 + $0x82]]
    %v1406 = vstv %s1405
    %v1407 = vmul.f32 %v1406, %v1383
    %1409 = vrot.lane.b32.xlu0 %v1407, 94
    %v1410 = vpop.permute.xlu0 %1409
    %v1411 = vrot.slane %v1410, 6
    %v1412 = vsel %vm1391, %v1411, %v1410
    %v1414 = vadd.f32 %v1366, %v1412
    %s1415 = sld [smem:[#allocation4 + $0x83]]
    %v1416 = vstv %s1415
    %v1417 = vmul.f32 %v1416, %v1383
    %1419 = vrot.lane.b32.xlu0 %v1417, 94
    %v1420 = vpop.permute.xlu0 %1419
    %v1421 = vrot.slane %v1420, 6
    %v1422 = vsel %vm1391, %v1421, %v1420
    %v1424 = vadd.f32 %v1376, %v1422
    %v1425 = vmul.f32 %v919, %v1381
    %s1426 = sld [smem:[#allocation4 + $0x84]]
    %v1427 = vstv %s1426
    %v1428 = vmul.f32 %v1427, %v1425
    %1430 = vrot.lane.b32.xlu0 %v1428, 94
    %v1431 = vpop.permute.xlu0 %1430
    %v1432 = vrot.slane %v1431, 6
    %v1433 = vsel %vm1391, %v1432, %v1431
    %v1435 = vadd.f32 %v1394, %v1433
    %s1436 = sld [smem:[#allocation4 + $0x85]]
    %v1437 = vstv %s1436
    %v1438 = vmul.f32 %v1437, %v1425
    %1440 = vrot.lane.b32.xlu0 %v1438, 94
    %v1441 = vpop.permute.xlu0 %1440
    %v1442 = vrot.slane %v1441, 6
    %v1443 = vsel %vm1391, %v1442, %v1441
    %v1445 = vadd.f32 %v1404, %v1443
    %s1446 = sld [smem:[#allocation4 + $0x86]]
    %v1447 = vstv %s1446
    %v1448 = vmul.f32 %v1447, %v1425
    %1450 = vrot.lane.b32.xlu0 %v1448, 94
    %v1451 = vpop.permute.xlu0 %1450
    %v1452 = vrot.slane %v1451, 6
    %v1453 = vsel %vm1391, %v1452, %v1451
    %v1455 = vadd.f32 %v1414, %v1453
    %s1456 = sld [smem:[#allocation4 + $0x87]]
    %v1457 = vstv %s1456
    %v1458 = vmul.f32 %v1457, %v1425
    %1460 = vrot.lane.b32.xlu0 %v1458, 94
    %v1461 = vpop.permute.xlu0 %1460
    %v1462 = vrot.slane %v1461, 6
    %v1463 = vsel %vm1391, %v1462, %v1461
    %v1465 = vadd.f32 %v1424, %v1463
    %v1466 = vmul.f32 %v961, %v1381
    %s1467 = sld [smem:[#allocation4 + $0x88]]
    %v1468 = vstv %s1467
    %v1469 = vmul.f32 %v1468, %v1466
    %1471 = vrot.lane.b32.xlu0 %v1469, 94
    %v1472 = vpop.permute.xlu0 %1471
    %v1473 = vrot.slane %v1472, 6
    %v1474 = vsel %vm1391, %v1473, %v1472
    %v1476 = vadd.f32 %v1435, %v1474
    %s1477 = sld [smem:[#allocation4 + $0x89]]
    %v1478 = vstv %s1477
    %v1479 = vmul.f32 %v1478, %v1466
    %1481 = vrot.lane.b32.xlu0 %v1479, 94
    %v1482 = vpop.permute.xlu0 %1481
    %v1483 = vrot.slane %v1482, 6
    %v1484 = vsel %vm1391, %v1483, %v1482
    %v1486 = vadd.f32 %v1445, %v1484
    %s1487 = sld [smem:[#allocation4 + $0x8a]]
    %v1488 = vstv %s1487
    %v1489 = vmul.f32 %v1488, %v1466
    %1491 = vrot.lane.b32.xlu0 %v1489, 94
    %v1492 = vpop.permute.xlu0 %1491
    %v1493 = vrot.slane %v1492, 6
    %v1494 = vsel %vm1391, %v1493, %v1492
    %v1496 = vadd.f32 %v1455, %v1494
    %s1497 = sld [smem:[#allocation4 + $0x8b]]
    %v1498 = vstv %s1497
    %v1499 = vmul.f32 %v1498, %v1466
    %1501 = vrot.lane.b32.xlu0 %v1499, 94
    %v1502 = vpop.permute.xlu0 %1501
    %v1503 = vrot.slane %v1502, 6
    %v1504 = vsel %vm1391, %v1503, %v1502
    %v1506 = vadd.f32 %v1465, %v1504
    %v1507 = vmul.f32 %v1003, %v1381
    %s1508 = sld [smem:[#allocation4 + $0x8c]]
    %v1509 = vstv %s1508
    %v1510 = vmul.f32 %v1509, %v1507
    %1512 = vrot.lane.b32.xlu0 %v1510, 94
    %v1513 = vpop.permute.xlu0 %1512
    %v1514 = vrot.slane %v1513, 6
    %v1515 = vsel %vm1391, %v1514, %v1513
    %v1517 = vadd.f32 %v1476, %v1515
    %s1518 = sld [smem:[#allocation4 + $0x8d]]
    %v1519 = vstv %s1518
    %v1520 = vmul.f32 %v1519, %v1507
    %1522 = vrot.lane.b32.xlu0 %v1520, 94
    %v1523 = vpop.permute.xlu0 %1522
    %v1524 = vrot.slane %v1523, 6
    %v1525 = vsel %vm1391, %v1524, %v1523
    %v1527 = vadd.f32 %v1486, %v1525
    %s1528 = sld [smem:[#allocation4 + $0x8e]]
    %v1529 = vstv %s1528
    %v1530 = vmul.f32 %v1529, %v1507
    %1532 = vrot.lane.b32.xlu0 %v1530, 94
    %v1533 = vpop.permute.xlu0 %1532
    %v1534 = vrot.slane %v1533, 6
    %v1535 = vsel %vm1391, %v1534, %v1533
    %v1537 = vadd.f32 %v1496, %v1535
    %s1538 = sld [smem:[#allocation4 + $0x8f]]
    %v1539 = vstv %s1538
    %v1540 = vmul.f32 %v1539, %v1507
    %1542 = vrot.lane.b32.xlu0 %v1540, 94
    %v1543 = vpop.permute.xlu0 %1542
    %v1544 = vrot.slane %v1543, 6
    %v1545 = vsel %vm1391, %v1544, %v1543
    %v1547 = vadd.f32 %v1506, %v1545
    %s1548 = sld [smem:[#allocation6]]
    %v1549 = vstv %s1548
    %v1550 = vmul.f32 %v1517, %v1549
    %s1551 = sld [smem:[#allocation8]]
    %v1552 = vstv %s1551
    %v1553 = vadd.f32 %v1550, %v1552
    %v1554 = vmax.f32 %v1553, 0.0
    %1556 = vrot.lane.b32.xlu0 %v1554, 17
    %v1557 = vpop.permute.xlu0 %1556
    %v1558 = vrot.slane %v1557, 2
    %v1559 = vsel %vm1380, %v1557, %v1558
    %1561 = vst [vmem:[#allocation3 + $0x2] sm:$0xf] %v1559
    %s1562 = sld [smem:[#allocation6 + $0x1]]
    %v1563 = vstv %s1562
    %v1564 = vmul.f32 %v1527, %v1563
    %s1565 = sld [smem:[#allocation8 + $0x1]]
    %v1566 = vstv %s1565
    %v1567 = vadd.f32 %v1564, %v1566
    %v1568 = vmax.f32 %v1567, 0.0
    %1570 = vrot.lane.b32.xlu0 %v1568, 17
    %v1571 = vpop.permute.xlu0 %1570
    %v1572 = vrot.slane %v1571, 2
    %v1573 = vsel %vm1380, %v1571, %v1572
    %s1575 = scalar_lea.vmem [#allocation3], 8
    %1576 = vst [vmem:[%s1575 + $0x2] sm:$0xf] %v1573
    %s1577 = sld [smem:[#allocation6 + $0x2]]
    %v1578 = vstv %s1577
    %v1579 = vmul.f32 %v1537, %v1578
    %s1580 = sld [smem:[#allocation8 + $0x2]]
    %v1581 = vstv %s1580
    %v1582 = vadd.f32 %v1579, %v1581
    %v1583 = vmax.f32 %v1582, 0.0
    %1585 = vrot.lane.b32.xlu0 %v1583, 17
    %v1586 = vpop.permute.xlu0 %1585
    %v1587 = vrot.slane %v1586, 2
    %v1588 = vsel %vm1380, %v1586, %v1587
    %s1590 = scalar_lea.vmem [#allocation3], 16
    %1591 = vst [vmem:[%s1590 + $0x2] sm:$0xf] %v1588
    %s1592 = sld [smem:[#allocation6 + $0x3]]
    %v1593 = vstv %s1592
    %v1594 = vmul.f32 %v1547, %v1593
    %s1595 = sld [smem:[#allocation8 + $0x3]]
    %v1596 = vstv %s1595
    %v1597 = vadd.f32 %v1594, %v1596
    %v1598 = vmax.f32 %v1597, 0.0
    %1600 = vrot.lane.b32.xlu0 %v1598, 17
    %v1601 = vpop.permute.xlu0 %1600
    %v1602 = vrot.slane %v1601, 2
    %v1603 = vsel %vm1380, %v1601, %v1602
    %s1605 = scalar_lea.vmem [#allocation3], 24
    %1606 = vst [vmem:[%s1605 + $0x2] sm:$0xf] %v1603
    %v1607 = vld [vmem:[#allocation3] sm:$0x3f]
    %v1608 = vmul.f32 %v1607, %v127
    %s1609 = sld [smem:[#allocation9]]
    %v1610 = vstv %s1609
    %v1611 = vmul.f32 %v1610, %v1608
    %v1612 = vadd.f32 %v1611, 0.0
    %s1613 = sld [smem:[#allocation9 + $0x1]]
    %v1614 = vstv %s1613
    %v1615 = vmul.f32 %v1614, %v1608
    %v1616 = vadd.f32 %v1615, 0.0
    %s1617 = sld [smem:[#allocation9 + $0x2]]
    %v1618 = vstv %s1617
    %v1619 = vmul.f32 %v1618, %v1608
    %v1620 = vadd.f32 %v1619, 0.0
    %s1621 = sld [smem:[#allocation9 + $0x3]]
    %v1622 = vstv %s1621
    %v1623 = vmul.f32 %v1622, %v1608
    %v1624 = vadd.f32 %v1623, 0.0
    %v1625 = vld [vmem:[%s1575] sm:$0x3f]
    %v1626 = vmul.f32 %v1625, %v127
    %s1627 = sld [smem:[#allocation9 + $0x4]]
    %v1628 = vstv %s1627
    %v1629 = vmul.f32 %v1628, %v1626
    %v1630 = vadd.f32 %v1612, %v1629
    %s1631 = sld [smem:[#allocation9 + $0x5]]
    %v1632 = vstv %s1631
    %v1633 = vmul.f32 %v1632, %v1626
    %v1634 = vadd.f32 %v1616, %v1633
    %s1635 = sld [smem:[#allocation9 + $0x6]]
    %v1636 = vstv %s1635
    %v1637 = vmul.f32 %v1636, %v1626
    %v1638 = vadd.f32 %v1620, %v1637
    %s1639 = sld [smem:[#allocation9 + $0x7]]
    %v1640 = vstv %s1639
    %v1641 = vmul.f32 %v1640, %v1626
    %v1642 = vadd.f32 %v1624, %v1641
    %v1643 = vld [vmem:[%s1590] sm:$0x3f]
    %v1644 = vmul.f32 %v1643, %v127
    %s1645 = sld [smem:[#allocation9 + $0x8]]
    %v1646 = vstv %s1645
    %v1647 = vmul.f32 %v1646, %v1644
    %v1648 = vadd.f32 %v1630, %v1647
    %s1649 = sld [smem:[#allocation9 + $0x9]]
    %v1650 = vstv %s1649
    %v1651 = vmul.f32 %v1650, %v1644
    %v1652 = vadd.f32 %v1634, %v1651
    %s1653 = sld [smem:[#allocation9 + $0xa]]
    %v1654 = vstv %s1653
    %v1655 = vmul.f32 %v1654, %v1644
    %v1656 = vadd.f32 %v1638, %v1655
    %s1657 = sld [smem:[#allocation9 + $0xb]]
    %v1658 = vstv %s1657
    %v1659 = vmul.f32 %v1658, %v1644
    %v1660 = vadd.f32 %v1642, %v1659
    %v1661 = vld [vmem:[%s1605] sm:$0x3f]
    %v1662 = vmul.f32 %v1661, %v127
    %s1663 = sld [smem:[#allocation9 + $0xc]]
    %v1664 = vstv %s1663
    %v1665 = vmul.f32 %v1664, %v1662
    %v1666 = vadd.f32 %v1648, %v1665
    %s1667 = sld [smem:[#allocation9 + $0xd]]
    %v1668 = vstv %s1667
    %v1669 = vmul.f32 %v1668, %v1662
    %v1670 = vadd.f32 %v1652, %v1669
    %s1671 = sld [smem:[#allocation9 + $0xe]]
    %v1672 = vstv %s1671
    %v1673 = vmul.f32 %v1672, %v1662
    %v1674 = vadd.f32 %v1656, %v1673
    %s1675 = sld [smem:[#allocation9 + $0xf]]
    %v1676 = vstv %s1675
    %v1677 = vmul.f32 %v1676, %v1662
    %v1678 = vadd.f32 %v1660, %v1677
    %s1679 = sld [smem:[#allocation9 + $0x10]]
    %v1680 = vstv %s1679
    %v1681 = vmul.f32 %v1680, %v1607
    %1683 = vrot.lane.b32.xlu0 %v1681, 127
    %v1684 = vpop.permute.xlu0 %1683
    %v1685 = vrot.slane %v1684, 2
    %v1686 = vsel %vm210, %v1684, %v1685
    %v1688 = vadd.f32 %v1666, %v1686
    %s1689 = sld [smem:[#allocation9 + $0x11]]
    %v1690 = vstv %s1689
    %v1691 = vmul.f32 %v1690, %v1607
    %1693 = vrot.lane.b32.xlu0 %v1691, 127
    %v1694 = vpop.permute.xlu0 %1693
    %v1695 = vrot.slane %v1694, 2
    %v1696 = vsel %vm210, %v1694, %v1695
    %v1698 = vadd.f32 %v1670, %v1696
    %s1699 = sld [smem:[#allocation9 + $0x12]]
    %v1700 = vstv %s1699
    %v1701 = vmul.f32 %v1700, %v1607
    %1703 = vrot.lane.b32.xlu0 %v1701, 127
    %v1704 = vpop.permute.xlu0 %1703
    %v1705 = vrot.slane %v1704, 2
    %v1706 = vsel %vm210, %v1704, %v1705
    %v1708 = vadd.f32 %v1674, %v1706
    %s1709 = sld [smem:[#allocation9 + $0x13]]
    %v1710 = vstv %s1709
    %v1711 = vmul.f32 %v1710, %v1607
    %1713 = vrot.lane.b32.xlu0 %v1711, 127
    %v1714 = vpop.permute.xlu0 %1713
    %v1715 = vrot.slane %v1714, 2
    %v1716 = vsel %vm210, %v1714, %v1715
    %v1718 = vadd.f32 %v1678, %v1716
    %s1719 = sld [smem:[#allocation9 + $0x14]]
    %v1720 = vstv %s1719
    %v1721 = vmul.f32 %v1720, %v1625
    %1723 = vrot.lane.b32.xlu0 %v1721, 127
    %v1724 = vpop.permute.xlu0 %1723
    %v1725 = vrot.slane %v1724, 2
    %v1726 = vsel %vm210, %v1724, %v1725
    %v1728 = vadd.f32 %v1688, %v1726
    %s1729 = sld [smem:[#allocation9 + $0x15]]
    %v1730 = vstv %s1729
    %v1731 = vmul.f32 %v1730, %v1625
    %1733 = vrot.lane.b32.xlu0 %v1731, 127
    %v1734 = vpop.permute.xlu0 %1733
    %v1735 = vrot.slane %v1734, 2
    %v1736 = vsel %vm210, %v1734, %v1735
    %v1738 = vadd.f32 %v1698, %v1736
    %s1739 = sld [smem:[#allocation9 + $0x16]]
    %v1740 = vstv %s1739
    %v1741 = vmul.f32 %v1740, %v1625
    %1743 = vrot.lane.b32.xlu0 %v1741, 127
    %v1744 = vpop.permute.xlu0 %1743
    %v1745 = vrot.slane %v1744, 2
    %v1746 = vsel %vm210, %v1744, %v1745
    %v1748 = vadd.f32 %v1708, %v1746
    %s1749 = sld [smem:[#allocation9 + $0x17]]
    %v1750 = vstv %s1749
    %v1751 = vmul.f32 %v1750, %v1625
    %1753 = vrot.lane.b32.xlu0 %v1751, 127
    %v1754 = vpop.permute.xlu0 %1753
    %v1755 = vrot.slane %v1754, 2
    %v1756 = vsel %vm210, %v1754, %v1755
    %v1758 = vadd.f32 %v1718, %v1756
    %s1759 = sld [smem:[#allocation9 + $0x18]]
    %v1760 = vstv %s1759
    %v1761 = vmul.f32 %v1760, %v1643
    %1763 = vrot.lane.b32.xlu0 %v1761, 127
    %v1764 = vpop.permute.xlu0 %1763
    %v1765 = vrot.slane %v1764, 2
    %v1766 = vsel %vm210, %v1764, %v1765
    %v1768 = vadd.f32 %v1728, %v1766
    %s1769 = sld [smem:[#allocation9 + $0x19]]
    %v1770 = vstv %s1769
    %v1771 = vmul.f32 %v1770, %v1643
    %1773 = vrot.lane.b32.xlu0 %v1771, 127
    %v1774 = vpop.permute.xlu0 %1773
    %v1775 = vrot.slane %v1774, 2
    %v1776 = vsel %vm210, %v1774, %v1775
    %v1778 = vadd.f32 %v1738, %v1776
    %s1779 = sld [smem:[#allocation9 + $0x1a]]
    %v1780 = vstv %s1779
    %v1781 = vmul.f32 %v1780, %v1643
    %1783 = vrot.lane.b32.xlu0 %v1781, 127
    %v1784 = vpop.permute.xlu0 %1783
    %v1785 = vrot.slane %v1784, 2
    %v1786 = vsel %vm210, %v1784, %v1785
    %v1788 = vadd.f32 %v1748, %v1786
    %s1789 = sld [smem:[#allocation9 + $0x1b]]
    %v1790 = vstv %s1789
    %v1791 = vmul.f32 %v1790, %v1643
    %1793 = vrot.lane.b32.xlu0 %v1791, 127
    %v1794 = vpop.permute.xlu0 %1793
    %v1795 = vrot.slane %v1794, 2
    %v1796 = vsel %vm210, %v1794, %v1795
    %v1798 = vadd.f32 %v1758, %v1796
    %s1799 = sld [smem:[#allocation9 + $0x1c]]
    %v1800 = vstv %s1799
    %v1801 = vmul.f32 %v1800, %v1661
    %1803 = vrot.lane.b32.xlu0 %v1801, 127
    %v1804 = vpop.permute.xlu0 %1803
    %v1805 = vrot.slane %v1804, 2
    %v1806 = vsel %vm210, %v1804, %v1805
    %v1808 = vadd.f32 %v1768, %v1806
    %s1809 = sld [smem:[#allocation9 + $0x1d]]
    %v1810 = vstv %s1809
    %v1811 = vmul.f32 %v1810, %v1661
    %1813 = vrot.lane.b32.xlu0 %v1811, 127
    %v1814 = vpop.permute.xlu0 %1813
    %v1815 = vrot.slane %v1814, 2
    %v1816 = vsel %vm210, %v1814, %v1815
    %v1818 = vadd.f32 %v1778, %v1816
    %s1819 = sld [smem:[#allocation9 + $0x1e]]
    %v1820 = vstv %s1819
    %v1821 = vmul.f32 %v1820, %v1661
    %1823 = vrot.lane.b32.xlu0 %v1821, 127
    %v1824 = vpop.permute.xlu0 %1823
    %v1825 = vrot.slane %v1824, 2
    %v1826 = vsel %vm210, %v1824, %v1825
    %v1828 = vadd.f32 %v1788, %v1826
    %s1829 = sld [smem:[#allocation9 + $0x1f]]
    %v1830 = vstv %s1829
    %v1831 = vmul.f32 %v1830, %v1661
    %1833 = vrot.lane.b32.xlu0 %v1831, 127
    %v1834 = vpop.permute.xlu0 %1833
    %v1835 = vrot.slane %v1834, 2
    %v1836 = vsel %vm210, %v1834, %v1835
    %v1838 = vadd.f32 %v1798, %v1836
    %v1839 = vmul.f32 %v1607, %v369
    %s1840 = sld [smem:[#allocation9 + $0x20]]
    %v1841 = vstv %s1840
    %v1842 = vmul.f32 %v1841, %v1839
    %1844 = vrot.lane.b32.xlu0 %v1842, 126
    %v1845 = vpop.permute.xlu0 %1844
    %v1846 = vrot.slane %v1845, 2
    %v1847 = vsel %vm379, %v1845, %v1846
    %v1849 = vadd.f32 %v1808, %v1847
    %s1850 = sld [smem:[#allocation9 + $0x21]]
    %v1851 = vstv %s1850
    %v1852 = vmul.f32 %v1851, %v1839
    %1854 = vrot.lane.b32.xlu0 %v1852, 126
    %v1855 = vpop.permute.xlu0 %1854
    %v1856 = vrot.slane %v1855, 2
    %v1857 = vsel %vm379, %v1855, %v1856
    %v1859 = vadd.f32 %v1818, %v1857
    %s1860 = sld [smem:[#allocation9 + $0x22]]
    %v1861 = vstv %s1860
    %v1862 = vmul.f32 %v1861, %v1839
    %1864 = vrot.lane.b32.xlu0 %v1862, 126
    %v1865 = vpop.permute.xlu0 %1864
    %v1866 = vrot.slane %v1865, 2
    %v1867 = vsel %vm379, %v1865, %v1866
    %v1869 = vadd.f32 %v1828, %v1867
    %s1870 = sld [smem:[#allocation9 + $0x23]]
    %v1871 = vstv %s1870
    %v1872 = vmul.f32 %v1871, %v1839
    %1874 = vrot.lane.b32.xlu0 %v1872, 126
    %v1875 = vpop.permute.xlu0 %1874
    %v1876 = vrot.slane %v1875, 2
    %v1877 = vsel %vm379, %v1875, %v1876
    %v1879 = vadd.f32 %v1838, %v1877
    %v1880 = vmul.f32 %v1625, %v369
    %s1881 = sld [smem:[#allocation9 + $0x24]]
    %v1882 = vstv %s1881
    %v1883 = vmul.f32 %v1882, %v1880
    %1885 = vrot.lane.b32.xlu0 %v1883, 126
    %v1886 = vpop.permute.xlu0 %1885
    %v1887 = vrot.slane %v1886, 2
    %v1888 = vsel %vm379, %v1886, %v1887
    %v1890 = vadd.f32 %v1849, %v1888
    %s1891 = sld [smem:[#allocation9 + $0x25]]
    %v1892 = vstv %s1891
    %v1893 = vmul.f32 %v1892, %v1880
    %1895 = vrot.lane.b32.xlu0 %v1893, 126
    %v1896 = vpop.permute.xlu0 %1895
    %v1897 = vrot.slane %v1896, 2
    %v1898 = vsel %vm379, %v1896, %v1897
    %v1900 = vadd.f32 %v1859, %v1898
    %s1901 = sld [smem:[#allocation9 + $0x26]]
    %v1902 = vstv %s1901
    %v1903 = vmul.f32 %v1902, %v1880
    %1905 = vrot.lane.b32.xlu0 %v1903, 126
    %v1906 = vpop.permute.xlu0 %1905
    %v1907 = vrot.slane %v1906, 2
    %v1908 = vsel %vm379, %v1906, %v1907
    %v1910 = vadd.f32 %v1869, %v1908
    %s1911 = sld [smem:[#allocation9 + $0x27]]
    %v1912 = vstv %s1911
    %v1913 = vmul.f32 %v1912, %v1880
    %1915 = vrot.lane.b32.xlu0 %v1913, 126
    %v1916 = vpop.permute.xlu0 %1915
    %v1917 = vrot.slane %v1916, 2
    %v1918 = vsel %vm379, %v1916, %v1917
    %v1920 = vadd.f32 %v1879, %v1918
    %v1921 = vmul.f32 %v1643, %v369
    %s1922 = sld [smem:[#allocation9 + $0x28]]
    %v1923 = vstv %s1922
    %v1924 = vmul.f32 %v1923, %v1921
    %1926 = vrot.lane.b32.xlu0 %v1924, 126
    %v1927 = vpop.permute.xlu0 %1926
    %v1928 = vrot.slane %v1927, 2
    %v1929 = vsel %vm379, %v1927, %v1928
    %v1931 = vadd.f32 %v1890, %v1929
    %s1932 = sld [smem:[#allocation9 + $0x29]]
    %v1933 = vstv %s1932
    %v1934 = vmul.f32 %v1933, %v1921
    %1936 = vrot.lane.b32.xlu0 %v1934, 126
    %v1937 = vpop.permute.xlu0 %1936
    %v1938 = vrot.slane %v1937, 2
    %v1939 = vsel %vm379, %v1937, %v1938
    %v1941 = vadd.f32 %v1900, %v1939
    %s1942 = sld [smem:[#allocation9 + $0x2a]]
    %v1943 = vstv %s1942
    %v1944 = vmul.f32 %v1943, %v1921
    %1946 = vrot.lane.b32.xlu0 %v1944, 126
    %v1947 = vpop.permute.xlu0 %1946
    %v1948 = vrot.slane %v1947, 2
    %v1949 = vsel %vm379, %v1947, %v1948
    %v1951 = vadd.f32 %v1910, %v1949
    %s1952 = sld [smem:[#allocation9 + $0x2b]]
    %v1953 = vstv %s1952
    %v1954 = vmul.f32 %v1953, %v1921
    %1956 = vrot.lane.b32.xlu0 %v1954, 126
    %v1957 = vpop.permute.xlu0 %1956
    %v1958 = vrot.slane %v1957, 2
    %v1959 = vsel %vm379, %v1957, %v1958
    %v1961 = vadd.f32 %v1920, %v1959
    %v1962 = vmul.f32 %v1661, %v369
    %s1963 = sld [smem:[#allocation9 + $0x2c]]
    %v1964 = vstv %s1963
    %v1965 = vmul.f32 %v1964, %v1962
    %1967 = vrot.lane.b32.xlu0 %v1965, 126
    %v1968 = vpop.permute.xlu0 %1967
    %v1969 = vrot.slane %v1968, 2
    %v1970 = vsel %vm379, %v1968, %v1969
    %v1972 = vadd.f32 %v1931, %v1970
    %s1973 = sld [smem:[#allocation9 + $0x2d]]
    %v1974 = vstv %s1973
    %v1975 = vmul.f32 %v1974, %v1962
    %1977 = vrot.lane.b32.xlu0 %v1975, 126
    %v1978 = vpop.permute.xlu0 %1977
    %v1979 = vrot.slane %v1978, 2
    %v1980 = vsel %vm379, %v1978, %v1979
    %v1982 = vadd.f32 %v1941, %v1980
    %s1983 = sld [smem:[#allocation9 + $0x2e]]
    %v1984 = vstv %s1983
    %v1985 = vmul.f32 %v1984, %v1962
    %1987 = vrot.lane.b32.xlu0 %v1985, 126
    %v1988 = vpop.permute.xlu0 %1987
    %v1989 = vrot.slane %v1988, 2
    %v1990 = vsel %vm379, %v1988, %v1989
    %v1992 = vadd.f32 %v1951, %v1990
    %s1993 = sld [smem:[#allocation9 + $0x2f]]
    %v1994 = vstv %s1993
    %v1995 = vmul.f32 %v1994, %v1962
    %1997 = vrot.lane.b32.xlu0 %v1995, 126
    %v1998 = vpop.permute.xlu0 %1997
    %v1999 = vrot.slane %v1998, 2
    %v2000 = vsel %vm379, %v1998, %v1999
    %v2002 = vadd.f32 %v1961, %v2000
    %v2003 = vmul.f32 %v1607, %v539
    %s2004 = sld [smem:[#allocation9 + $0x30]]
    %v2005 = vstv %s2004
    %v2006 = vmul.f32 %v2005, %v2003
    %2008 = vrot.lane.b32.xlu0 %v2006, 112
    %v2009 = vpop.permute.xlu0 %2008
    %v2010 = vrot.slane %v2009, 2
    %v2011 = vsel %vm549, %v2009, %v2010
    %v2013 = vadd.f32 %v1972, %v2011
    %s2014 = sld [smem:[#allocation9 + $0x31]]
    %v2015 = vstv %s2014
    %v2016 = vmul.f32 %v2015, %v2003
    %2018 = vrot.lane.b32.xlu0 %v2016, 112
    %v2019 = vpop.permute.xlu0 %2018
    %v2020 = vrot.slane %v2019, 2
    %v2021 = vsel %vm549, %v2019, %v2020
    %v2023 = vadd.f32 %v1982, %v2021
    %s2024 = sld [smem:[#allocation9 + $0x32]]
    %v2025 = vstv %s2024
    %v2026 = vmul.f32 %v2025, %v2003
    %2028 = vrot.lane.b32.xlu0 %v2026, 112
    %v2029 = vpop.permute.xlu0 %2028
    %v2030 = vrot.slane %v2029, 2
    %v2031 = vsel %vm549, %v2029, %v2030
    %v2033 = vadd.f32 %v1992, %v2031
    %s2034 = sld [smem:[#allocation9 + $0x33]]
    %v2035 = vstv %s2034
    %v2036 = vmul.f32 %v2035, %v2003
    %2038 = vrot.lane.b32.xlu0 %v2036, 112
    %v2039 = vpop.permute.xlu0 %2038
    %v2040 = vrot.slane %v2039, 2
    %v2041 = vsel %vm549, %v2039, %v2040
    %v2043 = vadd.f32 %v2002, %v2041
    %v2044 = vmul.f32 %v1625, %v539
    %s2045 = sld [smem:[#allocation9 + $0x34]]
    %v2046 = vstv %s2045
    %v2047 = vmul.f32 %v2046, %v2044
    %2049 = vrot.lane.b32.xlu0 %v2047, 112
    %v2050 = vpop.permute.xlu0 %2049
    %v2051 = vrot.slane %v2050, 2
    %v2052 = vsel %vm549, %v2050, %v2051
    %v2054 = vadd.f32 %v2013, %v2052
    %s2055 = sld [smem:[#allocation9 + $0x35]]
    %v2056 = vstv %s2055
    %v2057 = vmul.f32 %v2056, %v2044
    %2059 = vrot.lane.b32.xlu0 %v2057, 112
    %v2060 = vpop.permute.xlu0 %2059
    %v2061 = vrot.slane %v2060, 2
    %v2062 = vsel %vm549, %v2060, %v2061
    %v2064 = vadd.f32 %v2023, %v2062
    %s2065 = sld [smem:[#allocation9 + $0x36]]
    %v2066 = vstv %s2065
    %v2067 = vmul.f32 %v2066, %v2044
    %2069 = vrot.lane.b32.xlu0 %v2067, 112
    %v2070 = vpop.permute.xlu0 %2069
    %v2071 = vrot.slane %v2070, 2
    %v2072 = vsel %vm549, %v2070, %v2071
    %v2074 = vadd.f32 %v2033, %v2072
    %s2075 = sld [smem:[#allocation9 + $0x37]]
    %v2076 = vstv %s2075
    %v2077 = vmul.f32 %v2076, %v2044
    %2079 = vrot.lane.b32.xlu0 %v2077, 112
    %v2080 = vpop.permute.xlu0 %2079
    %v2081 = vrot.slane %v2080, 2
    %v2082 = vsel %vm549, %v2080, %v2081
    %v2084 = vadd.f32 %v2043, %v2082
    %v2085 = vmul.f32 %v1643, %v539
    %s2086 = sld [smem:[#allocation9 + $0x38]]
    %v2087 = vstv %s2086
    %v2088 = vmul.f32 %v2087, %v2085
    %2090 = vrot.lane.b32.xlu0 %v2088, 112
    %v2091 = vpop.permute.xlu0 %2090
    %v2092 = vrot.slane %v2091, 2
    %v2093 = vsel %vm549, %v2091, %v2092
    %v2095 = vadd.f32 %v2054, %v2093
    %s2096 = sld [smem:[#allocation9 + $0x39]]
    %v2097 = vstv %s2096
    %v2098 = vmul.f32 %v2097, %v2085
    %2100 = vrot.lane.b32.xlu0 %v2098, 112
    %v2101 = vpop.permute.xlu0 %2100
    %v2102 = vrot.slane %v2101, 2
    %v2103 = vsel %vm549, %v2101, %v2102
    %v2105 = vadd.f32 %v2064, %v2103
    %s2106 = sld [smem:[#allocation9 + $0x3a]]
    %v2107 = vstv %s2106
    %v2108 = vmul.f32 %v2107, %v2085
    %2110 = vrot.lane.b32.xlu0 %v2108, 112
    %v2111 = vpop.permute.xlu0 %2110
    %v2112 = vrot.slane %v2111, 2
    %v2113 = vsel %vm549, %v2111, %v2112
    %v2115 = vadd.f32 %v2074, %v2113
    %s2116 = sld [smem:[#allocation9 + $0x3b]]
    %v2117 = vstv %s2116
    %v2118 = vmul.f32 %v2117, %v2085
    %2120 = vrot.lane.b32.xlu0 %v2118, 112
    %v2121 = vpop.permute.xlu0 %2120
    %v2122 = vrot.slane %v2121, 2
    %v2123 = vsel %vm549, %v2121, %v2122
    %v2125 = vadd.f32 %v2084, %v2123
    %v2126 = vmul.f32 %v1661, %v539
    %s2127 = sld [smem:[#allocation9 + $0x3c]]
    %v2128 = vstv %s2127
    %v2129 = vmul.f32 %v2128, %v2126
    %2131 = vrot.lane.b32.xlu0 %v2129, 112
    %v2132 = vpop.permute.xlu0 %2131
    %v2133 = vrot.slane %v2132, 2
    %v2134 = vsel %vm549, %v2132, %v2133
    %v2136 = vadd.f32 %v2095, %v2134
    %s2137 = sld [smem:[#allocation9 + $0x3d]]
    %v2138 = vstv %s2137
    %v2139 = vmul.f32 %v2138, %v2126
    %2141 = vrot.lane.b32.xlu0 %v2139, 112
    %v2142 = vpop.permute.xlu0 %2141
    %v2143 = vrot.slane %v2142, 2
    %v2144 = vsel %vm549, %v2142, %v2143
    %v2146 = vadd.f32 %v2105, %v2144
    %s2147 = sld [smem:[#allocation9 + $0x3e]]
    %v2148 = vstv %s2147
    %v2149 = vmul.f32 %v2148, %v2126
    %2151 = vrot.lane.b32.xlu0 %v2149, 112
    %v2152 = vpop.permute.xlu0 %2151
    %v2153 = vrot.slane %v2152, 2
    %v2154 = vsel %vm549, %v2152, %v2153
    %v2156 = vadd.f32 %v2115, %v2154
    %s2157 = sld [smem:[#allocation9 + $0x3f]]
    %v2158 = vstv %s2157
    %v2159 = vmul.f32 %v2158, %v2126
    %2161 = vrot.lane.b32.xlu0 %v2159, 112
    %v2162 = vpop.permute.xlu0 %2161
    %v2163 = vrot.slane %v2162, 2
    %v2164 = vsel %vm549, %v2162, %v2163
    %v2166 = vadd.f32 %v2125, %v2164
    %v2167 = vld [vmem:[#allocation3 + $0x2] sm:$0xf]
    %s2168 = sld [smem:[#allocation9 + $0x40]]
    %v2169 = vstv %s2168
    %v2170 = vmul.f32 %v2169, %v2167
    %2172 = vrot.lane.b32.xlu0 %v2170, 111
    %v2173 = vpop.permute.xlu0 %2172
    %v2174 = vrot.slane %v2173, 6
    %v2175 = vsel %vm126, %v2174, %v2173
    %v2177 = vadd.f32 %v2136, %v2175
    %s2178 = sld [smem:[#allocation9 + $0x41]]
    %v2179 = vstv %s2178
    %v2180 = vmul.f32 %v2179, %v2167
    %2182 = vrot.lane.b32.xlu0 %v2180, 111
    %v2183 = vpop.permute.xlu0 %2182
    %v2184 = vrot.slane %v2183, 6
    %v2185 = vsel %vm126, %v2184, %v2183
    %v2187 = vadd.f32 %v2146, %v2185
    %s2188 = sld [smem:[#allocation9 + $0x42]]
    %v2189 = vstv %s2188
    %v2190 = vmul.f32 %v2189, %v2167
    %2192 = vrot.lane.b32.xlu0 %v2190, 111
    %v2193 = vpop.permute.xlu0 %2192
    %v2194 = vrot.slane %v2193, 6
    %v2195 = vsel %vm126, %v2194, %v2193
    %v2197 = vadd.f32 %v2156, %v2195
    %s2198 = sld [smem:[#allocation9 + $0x43]]
    %v2199 = vstv %s2198
    %v2200 = vmul.f32 %v2199, %v2167
    %2202 = vrot.lane.b32.xlu0 %v2200, 111
    %v2203 = vpop.permute.xlu0 %2202
    %v2204 = vrot.slane %v2203, 6
    %v2205 = vsel %vm126, %v2204, %v2203
    %v2207 = vadd.f32 %v2166, %v2205
    %v2208 = vld [vmem:[%s1575 + $0x2] sm:$0xf]
    %s2209 = sld [smem:[#allocation9 + $0x44]]
    %v2210 = vstv %s2209
    %v2211 = vmul.f32 %v2210, %v2208
    %2213 = vrot.lane.b32.xlu0 %v2211, 111
    %v2214 = vpop.permute.xlu0 %2213
    %v2215 = vrot.slane %v2214, 6
    %v2216 = vsel %vm126, %v2215, %v2214
    %v2218 = vadd.f32 %v2177, %v2216
    %s2219 = sld [smem:[#allocation9 + $0x45]]
    %v2220 = vstv %s2219
    %v2221 = vmul.f32 %v2220, %v2208
    %2223 = vrot.lane.b32.xlu0 %v2221, 111
    %v2224 = vpop.permute.xlu0 %2223
    %v2225 = vrot.slane %v2224, 6
    %v2226 = vsel %vm126, %v2225, %v2224
    %v2228 = vadd.f32 %v2187, %v2226
    %s2229 = sld [smem:[#allocation9 + $0x46]]
    %v2230 = vstv %s2229
    %v2231 = vmul.f32 %v2230, %v2208
    %2233 = vrot.lane.b32.xlu0 %v2231, 111
    %v2234 = vpop.permute.xlu0 %2233
    %v2235 = vrot.slane %v2234, 6
    %v2236 = vsel %vm126, %v2235, %v2234
    %v2238 = vadd.f32 %v2197, %v2236
    %s2239 = sld [smem:[#allocation9 + $0x47]]
    %v2240 = vstv %s2239
    %v2241 = vmul.f32 %v2240, %v2208
    %2243 = vrot.lane.b32.xlu0 %v2241, 111
    %v2244 = vpop.permute.xlu0 %2243
    %v2245 = vrot.slane %v2244, 6
    %v2246 = vsel %vm126, %v2245, %v2244
    %v2248 = vadd.f32 %v2207, %v2246
    %v2249 = vld [vmem:[%s1590 + $0x2] sm:$0xf]
    %s2250 = sld [smem:[#allocation9 + $0x48]]
    %v2251 = vstv %s2250
    %v2252 = vmul.f32 %v2251, %v2249
    %2254 = vrot.lane.b32.xlu0 %v2252, 111
    %v2255 = vpop.permute.xlu0 %2254
    %v2256 = vrot.slane %v2255, 6
    %v2257 = vsel %vm126, %v2256, %v2255
    %v2259 = vadd.f32 %v2218, %v2257
    %s2260 = sld [smem:[#allocation9 + $0x49]]
    %v2261 = vstv %s2260
    %v2262 = vmul.f32 %v2261, %v2249
    %2264 = vrot.lane.b32.xlu0 %v2262, 111
    %v2265 = vpop.permute.xlu0 %2264
    %v2266 = vrot.slane %v2265, 6
    %v2267 = vsel %vm126, %v2266, %v2265
    %v2269 = vadd.f32 %v2228, %v2267
    %s2270 = sld [smem:[#allocation9 + $0x4a]]
    %v2271 = vstv %s2270
    %v2272 = vmul.f32 %v2271, %v2249
    %2274 = vrot.lane.b32.xlu0 %v2272, 111
    %v2275 = vpop.permute.xlu0 %2274
    %v2276 = vrot.slane %v2275, 6
    %v2277 = vsel %vm126, %v2276, %v2275
    %v2279 = vadd.f32 %v2238, %v2277
    %s2280 = sld [smem:[#allocation9 + $0x4b]]
    %v2281 = vstv %s2280
    %v2282 = vmul.f32 %v2281, %v2249
    %2284 = vrot.lane.b32.xlu0 %v2282, 111
    %v2285 = vpop.permute.xlu0 %2284
    %v2286 = vrot.slane %v2285, 6
    %v2287 = vsel %vm126, %v2286, %v2285
    %v2289 = vadd.f32 %v2248, %v2287
    %v2290 = vld [vmem:[%s1605 + $0x2] sm:$0xf]
    %s2291 = sld [smem:[#allocation9 + $0x4c]]
    %v2292 = vstv %s2291
    %v2293 = vmul.f32 %v2292, %v2290
    %2295 = vrot.lane.b32.xlu0 %v2293, 111
    %v2296 = vpop.permute.xlu0 %2295
    %v2297 = vrot.slane %v2296, 6
    %v2298 = vsel %vm126, %v2297, %v2296
    %v2300 = vadd.f32 %v2259, %v2298
    %s2301 = sld [smem:[#allocation9 + $0x4d]]
    %v2302 = vstv %s2301
    %v2303 = vmul.f32 %v2302, %v2290
    %2305 = vrot.lane.b32.xlu0 %v2303, 111
    %v2306 = vpop.permute.xlu0 %2305
    %v2307 = vrot.slane %v2306, 6
    %v2308 = vsel %vm126, %v2307, %v2306
    %v2310 = vadd.f32 %v2269, %v2308
    %s2311 = sld [smem:[#allocation9 + $0x4e]]
    %v2312 = vstv %s2311
    %v2313 = vmul.f32 %v2312, %v2290
    %2315 = vrot.lane.b32.xlu0 %v2313, 111
    %v2316 = vpop.permute.xlu0 %2315
    %v2317 = vrot.slane %v2316, 6
    %v2318 = vsel %vm126, %v2317, %v2316
    %v2320 = vadd.f32 %v2279, %v2318
    %s2321 = sld [smem:[#allocation9 + $0x4f]]
    %v2322 = vstv %s2321
    %v2323 = vmul.f32 %v2322, %v2290
    %2325 = vrot.lane.b32.xlu0 %v2323, 111
    %v2326 = vpop.permute.xlu0 %2325
    %v2327 = vrot.slane %v2326, 6
    %v2328 = vsel %vm126, %v2327, %v2326
    %v2330 = vadd.f32 %v2289, %v2328
    %v2331 = vld [vmem:[#allocation3 + $0x2] sm:$0x3f]
    %v2332 = vmul.f32 %v2331, %v875
    %s2333 = sld [smem:[#allocation9 + $0x50]]
    %v2334 = vstv %s2333
    %v2335 = vmul.f32 %v2334, %v2332
    %2337 = vrot.lane.b32.xlu0 %v2335, 110
    %v2338 = vpop.permute.xlu0 %2337
    %v2339 = vrot.slane %v2338, 6
    %v2340 = vsel %vm885, %v2339, %v2338
    %v2342 = vadd.f32 %v2300, %v2340
    %s2343 = sld [smem:[#allocation9 + $0x51]]
    %v2344 = vstv %s2343
    %v2345 = vmul.f32 %v2344, %v2332
    %2347 = vrot.lane.b32.xlu0 %v2345, 110
    %v2348 = vpop.permute.xlu0 %2347
    %v2349 = vrot.slane %v2348, 6
    %v2350 = vsel %vm885, %v2349, %v2348
    %v2352 = vadd.f32 %v2310, %v2350
    %s2353 = sld [smem:[#allocation9 + $0x52]]
    %v2354 = vstv %s2353
    %v2355 = vmul.f32 %v2354, %v2332
    %2357 = vrot.lane.b32.xlu0 %v2355, 110
    %v2358 = vpop.permute.xlu0 %2357
    %v2359 = vrot.slane %v2358, 6
    %v2360 = vsel %vm885, %v2359, %v2358
    %v2362 = vadd.f32 %v2320, %v2360
    %s2363 = sld [smem:[#allocation9 + $0x53]]
    %v2364 = vstv %s2363
    %v2365 = vmul.f32 %v2364, %v2332
    %2367 = vrot.lane.b32.xlu0 %v2365, 110
    %v2368 = vpop.permute.xlu0 %2367
    %v2369 = vrot.slane %v2368, 6
    %v2370 = vsel %vm885, %v2369, %v2368
    %v2372 = vadd.f32 %v2330, %v2370
    %v2373 = vld [vmem:[%s1575 + $0x2] sm:$0x3f]
    %v2374 = vmul.f32 %v2373, %v875
    %s2375 = sld [smem:[#allocation9 + $0x54]]
    %v2376 = vstv %s2375
    %v2377 = vmul.f32 %v2376, %v2374
    %2379 = vrot.lane.b32.xlu0 %v2377, 110
    %v2380 = vpop.permute.xlu0 %2379
    %v2381 = vrot.slane %v2380, 6
    %v2382 = vsel %vm885, %v2381, %v2380
    %v2384 = vadd.f32 %v2342, %v2382
    %s2385 = sld [smem:[#allocation9 + $0x55]]
    %v2386 = vstv %s2385
    %v2387 = vmul.f32 %v2386, %v2374
    %2389 = vrot.lane.b32.xlu0 %v2387, 110
    %v2390 = vpop.permute.xlu0 %2389
    %v2391 = vrot.slane %v2390, 6
    %v2392 = vsel %vm885, %v2391, %v2390
    %v2394 = vadd.f32 %v2352, %v2392
    %s2395 = sld [smem:[#allocation9 + $0x56]]
    %v2396 = vstv %s2395
    %v2397 = vmul.f32 %v2396, %v2374
    %2399 = vrot.lane.b32.xlu0 %v2397, 110
    %v2400 = vpop.permute.xlu0 %2399
    %v2401 = vrot.slane %v2400, 6
    %v2402 = vsel %vm885, %v2401, %v2400
    %v2404 = vadd.f32 %v2362, %v2402
    %s2405 = sld [smem:[#allocation9 + $0x57]]
    %v2406 = vstv %s2405
    %v2407 = vmul.f32 %v2406, %v2374
    %2409 = vrot.lane.b32.xlu0 %v2407, 110
    %v2410 = vpop.permute.xlu0 %2409
    %v2411 = vrot.slane %v2410, 6
    %v2412 = vsel %vm885, %v2411, %v2410
    %v2414 = vadd.f32 %v2372, %v2412
    %v2415 = vld [vmem:[%s1590 + $0x2] sm:$0x3f]
    %v2416 = vmul.f32 %v2415, %v875
    %s2417 = sld [smem:[#allocation9 + $0x58]]
    %v2418 = vstv %s2417
    %v2419 = vmul.f32 %v2418, %v2416
    %2421 = vrot.lane.b32.xlu0 %v2419, 110
    %v2422 = vpop.permute.xlu0 %2421
    %v2423 = vrot.slane %v2422, 6
    %v2424 = vsel %vm885, %v2423, %v2422
    %v2426 = vadd.f32 %v2384, %v2424
    %s2427 = sld [smem:[#allocation9 + $0x59]]
    %v2428 = vstv %s2427
    %v2429 = vmul.f32 %v2428, %v2416
    %2431 = vrot.lane.b32.xlu0 %v2429, 110
    %v2432 = vpop.permute.xlu0 %2431
    %v2433 = vrot.slane %v2432, 6
    %v2434 = vsel %vm885, %v2433, %v2432
    %v2436 = vadd.f32 %v2394, %v2434
    %s2437 = sld [smem:[#allocation9 + $0x5a]]
    %v2438 = vstv %s2437
    %v2439 = vmul.f32 %v2438, %v2416
    %2441 = vrot.lane.b32.xlu0 %v2439, 110
    %v2442 = vpop.permute.xlu0 %2441
    %v2443 = vrot.slane %v2442, 6
    %v2444 = vsel %vm885, %v2443, %v2442
    %v2446 = vadd.f32 %v2404, %v2444
    %s2447 = sld [smem:[#allocation9 + $0x5b]]
    %v2448 = vstv %s2447
    %v2449 = vmul.f32 %v2448, %v2416
    %2451 = vrot.lane.b32.xlu0 %v2449, 110
    %v2452 = vpop.permute.xlu0 %2451
    %v2453 = vrot.slane %v2452, 6
    %v2454 = vsel %vm885, %v2453, %v2452
    %v2456 = vadd.f32 %v2414, %v2454
    %v2457 = vld [vmem:[%s1605 + $0x2] sm:$0x3f]
    %v2458 = vmul.f32 %v2457, %v875
    %s2459 = sld [smem:[#allocation9 + $0x5c]]
    %v2460 = vstv %s2459
    %v2461 = vmul.f32 %v2460, %v2458
    %2463 = vrot.lane.b32.xlu0 %v2461, 110
    %v2464 = vpop.permute.xlu0 %2463
    %v2465 = vrot.slane %v2464, 6
    %v2466 = vsel %vm885, %v2465, %v2464
    %v2468 = vadd.f32 %v2426, %v2466
    %s2469 = sld [smem:[#allocation9 + $0x5d]]
    %v2470 = vstv %s2469
    %v2471 = vmul.f32 %v2470, %v2458
    %2473 = vrot.lane.b32.xlu0 %v2471, 110
    %v2474 = vpop.permute.xlu0 %2473
    %v2475 = vrot.slane %v2474, 6
    %v2476 = vsel %vm885, %v2475, %v2474
    %v2478 = vadd.f32 %v2436, %v2476
    %s2479 = sld [smem:[#allocation9 + $0x5e]]
    %v2480 = vstv %s2479
    %v2481 = vmul.f32 %v2480, %v2458
    %2483 = vrot.lane.b32.xlu0 %v2481, 110
    %v2484 = vpop.permute.xlu0 %2483
    %v2485 = vrot.slane %v2484, 6
    %v2486 = vsel %vm885, %v2485, %v2484
    %v2488 = vadd.f32 %v2446, %v2486
    %s2489 = sld [smem:[#allocation9 + $0x5f]]
    %v2490 = vstv %s2489
    %v2491 = vmul.f32 %v2490, %v2458
    %2493 = vrot.lane.b32.xlu0 %v2491, 110
    %v2494 = vpop.permute.xlu0 %2493
    %v2495 = vrot.slane %v2494, 6
    %v2496 = vsel %vm885, %v2495, %v2494
    %v2498 = vadd.f32 %v2456, %v2496
    %v2499 = vmul.f32 %v2331, %v1049
    %s2500 = sld [smem:[#allocation9 + $0x60]]
    %v2501 = vstv %s2500
    %v2502 = vmul.f32 %v2501, %v2499
    %2504 = vrot.lane.b32.xlu0 %v2502, 96
    %v2505 = vpop.permute.xlu0 %2504
    %v2506 = vrot.slane %v2505, 6
    %v2507 = vsel %vm1059, %v2506, %v2505
    %v2509 = vadd.f32 %v2468, %v2507
    %s2510 = sld [smem:[#allocation9 + $0x61]]
    %v2511 = vstv %s2510
    %v2512 = vmul.f32 %v2511, %v2499
    %2514 = vrot.lane.b32.xlu0 %v2512, 96
    %v2515 = vpop.permute.xlu0 %2514
    %v2516 = vrot.slane %v2515, 6
    %v2517 = vsel %vm1059, %v2516, %v2515
    %v2519 = vadd.f32 %v2478, %v2517
    %s2520 = sld [smem:[#allocation9 + $0x62]]
    %v2521 = vstv %s2520
    %v2522 = vmul.f32 %v2521, %v2499
    %2524 = vrot.lane.b32.xlu0 %v2522, 96
    %v2525 = vpop.permute.xlu0 %2524
    %v2526 = vrot.slane %v2525, 6
    %v2527 = vsel %vm1059, %v2526, %v2525
    %v2529 = vadd.f32 %v2488, %v2527
    %s2530 = sld [smem:[#allocation9 + $0x63]]
    %v2531 = vstv %s2530
    %v2532 = vmul.f32 %v2531, %v2499
    %2534 = vrot.lane.b32.xlu0 %v2532, 96
    %v2535 = vpop.permute.xlu0 %2534
    %v2536 = vrot.slane %v2535, 6
    %v2537 = vsel %vm1059, %v2536, %v2535
    %v2539 = vadd.f32 %v2498, %v2537
    %v2540 = vmul.f32 %v2373, %v1049
    %s2541 = sld [smem:[#allocation9 + $0x64]]
    %v2542 = vstv %s2541
    %v2543 = vmul.f32 %v2542, %v2540
    %2545 = vrot.lane.b32.xlu0 %v2543, 96
    %v2546 = vpop.permute.xlu0 %2545
    %v2547 = vrot.slane %v2546, 6
    %v2548 = vsel %vm1059, %v2547, %v2546
    %v2550 = vadd.f32 %v2509, %v2548
    %s2551 = sld [smem:[#allocation9 + $0x65]]
    %v2552 = vstv %s2551
    %v2553 = vmul.f32 %v2552, %v2540
    %2555 = vrot.lane.b32.xlu0 %v2553, 96
    %v2556 = vpop.permute.xlu0 %2555
    %v2557 = vrot.slane %v2556, 6
    %v2558 = vsel %vm1059, %v2557, %v2556
    %v2560 = vadd.f32 %v2519, %v2558
    %s2561 = sld [smem:[#allocation9 + $0x66]]
    %v2562 = vstv %s2561
    %v2563 = vmul.f32 %v2562, %v2540
    %2565 = vrot.lane.b32.xlu0 %v2563, 96
    %v2566 = vpop.permute.xlu0 %2565
    %v2567 = vrot.slane %v2566, 6
    %v2568 = vsel %vm1059, %v2567, %v2566
    %v2570 = vadd.f32 %v2529, %v2568
    %s2571 = sld [smem:[#allocation9 + $0x67]]
    %v2572 = vstv %s2571
    %v2573 = vmul.f32 %v2572, %v2540
    %2575 = vrot.lane.b32.xlu0 %v2573, 96
    %v2576 = vpop.permute.xlu0 %2575
    %v2577 = vrot.slane %v2576, 6
    %v2578 = vsel %vm1059, %v2577, %v2576
    %v2580 = vadd.f32 %v2539, %v2578
    %v2581 = vmul.f32 %v2415, %v1049
    %s2582 = sld [smem:[#allocation9 + $0x68]]
    %v2583 = vstv %s2582
    %v2584 = vmul.f32 %v2583, %v2581
    %2586 = vrot.lane.b32.xlu0 %v2584, 96
    %v2587 = vpop.permute.xlu0 %2586
    %v2588 = vrot.slane %v2587, 6
    %v2589 = vsel %vm1059, %v2588, %v2587
    %v2591 = vadd.f32 %v2550, %v2589
    %s2592 = sld [smem:[#allocation9 + $0x69]]
    %v2593 = vstv %s2592
    %v2594 = vmul.f32 %v2593, %v2581
    %2596 = vrot.lane.b32.xlu0 %v2594, 96
    %v2597 = vpop.permute.xlu0 %2596
    %v2598 = vrot.slane %v2597, 6
    %v2599 = vsel %vm1059, %v2598, %v2597
    %v2601 = vadd.f32 %v2560, %v2599
    %s2602 = sld [smem:[#allocation9 + $0x6a]]
    %v2603 = vstv %s2602
    %v2604 = vmul.f32 %v2603, %v2581
    %2606 = vrot.lane.b32.xlu0 %v2604, 96
    %v2607 = vpop.permute.xlu0 %2606
    %v2608 = vrot.slane %v2607, 6
    %v2609 = vsel %vm1059, %v2608, %v2607
    %v2611 = vadd.f32 %v2570, %v2609
    %s2612 = sld [smem:[#allocation9 + $0x6b]]
    %v2613 = vstv %s2612
    %v2614 = vmul.f32 %v2613, %v2581
    %2616 = vrot.lane.b32.xlu0 %v2614, 96
    %v2617 = vpop.permute.xlu0 %2616
    %v2618 = vrot.slane %v2617, 6
    %v2619 = vsel %vm1059, %v2618, %v2617
    %v2621 = vadd.f32 %v2580, %v2619
    %v2622 = vmul.f32 %v2457, %v1049
    %s2623 = sld [smem:[#allocation9 + $0x6c]]
    %v2624 = vstv %s2623
    %v2625 = vmul.f32 %v2624, %v2622
    %2627 = vrot.lane.b32.xlu0 %v2625, 96
    %v2628 = vpop.permute.xlu0 %2627
    %v2629 = vrot.slane %v2628, 6
    %v2630 = vsel %vm1059, %v2629, %v2628
    %v2632 = vadd.f32 %v2591, %v2630
    %s2633 = sld [smem:[#allocation9 + $0x6d]]
    %v2634 = vstv %s2633
    %v2635 = vmul.f32 %v2634, %v2622
    %2637 = vrot.lane.b32.xlu0 %v2635, 96
    %v2638 = vpop.permute.xlu0 %2637
    %v2639 = vrot.slane %v2638, 6
    %v2640 = vsel %vm1059, %v2639, %v2638
    %v2642 = vadd.f32 %v2601, %v2640
    %s2643 = sld [smem:[#allocation9 + $0x6e]]
    %v2644 = vstv %s2643
    %v2645 = vmul.f32 %v2644, %v2622
    %2647 = vrot.lane.b32.xlu0 %v2645, 96
    %v2648 = vpop.permute.xlu0 %2647
    %v2649 = vrot.slane %v2648, 6
    %v2650 = vsel %vm1059, %v2649, %v2648
    %v2652 = vadd.f32 %v2611, %v2650
    %s2653 = sld [smem:[#allocation9 + $0x6f]]
    %v2654 = vstv %s2653
    %v2655 = vmul.f32 %v2654, %v2622
    %2657 = vrot.lane.b32.xlu0 %v2655, 96
    %v2658 = vpop.permute.xlu0 %2657
    %v2659 = vrot.slane %v2658, 6
    %v2660 = vsel %vm1059, %v2659, %v2658
    %v2662 = vadd.f32 %v2621, %v2660
    %s2663 = sld [smem:[#allocation9 + $0x70]]
    %v2664 = vstv %s2663
    %v2665 = vmul.f32 %v2664, %v2331
    %2667 = vrot.lane.b32.xlu0 %v2665, 95
    %v2668 = vpop.permute.xlu0 %2667
    %v2669 = vrot.slane %v2668, 6
    %v2670 = vsel %vm1223, %v2669, %v2668
    %v2672 = vadd.f32 %v2632, %v2670
    %s2673 = sld [smem:[#allocation9 + $0x71]]
    %v2674 = vstv %s2673
    %v2675 = vmul.f32 %v2674, %v2331
    %2677 = vrot.lane.b32.xlu0 %v2675, 95
    %v2678 = vpop.permute.xlu0 %2677
    %v2679 = vrot.slane %v2678, 6
    %v2680 = vsel %vm1223, %v2679, %v2678
    %v2682 = vadd.f32 %v2642, %v2680
    %s2683 = sld [smem:[#allocation9 + $0x72]]
    %v2684 = vstv %s2683
    %v2685 = vmul.f32 %v2684, %v2331
    %2687 = vrot.lane.b32.xlu0 %v2685, 95
    %v2688 = vpop.permute.xlu0 %2687
    %v2689 = vrot.slane %v2688, 6
    %v2690 = vsel %vm1223, %v2689, %v2688
    %v2692 = vadd.f32 %v2652, %v2690
    %s2693 = sld [smem:[#allocation9 + $0x73]]
    %v2694 = vstv %s2693
    %v2695 = vmul.f32 %v2694, %v2331
    %2697 = vrot.lane.b32.xlu0 %v2695, 95
    %v2698 = vpop.permute.xlu0 %2697
    %v2699 = vrot.slane %v2698, 6
    %v2700 = vsel %vm1223, %v2699, %v2698
    %v2702 = vadd.f32 %v2662, %v2700
    %s2703 = sld [smem:[#allocation9 + $0x74]]
    %v2704 = vstv %s2703
    %v2705 = vmul.f32 %v2704, %v2373
    %2707 = vrot.lane.b32.xlu0 %v2705, 95
    %v2708 = vpop.permute.xlu0 %2707
    %v2709 = vrot.slane %v2708, 6
    %v2710 = vsel %vm1223, %v2709, %v2708
    %v2712 = vadd.f32 %v2672, %v2710
    %s2713 = sld [smem:[#allocation9 + $0x75]]
    %v2714 = vstv %s2713
    %v2715 = vmul.f32 %v2714, %v2373
    %2717 = vrot.lane.b32.xlu0 %v2715, 95
    %v2718 = vpop.permute.xlu0 %2717
    %v2719 = vrot.slane %v2718, 6
    %v2720 = vsel %vm1223, %v2719, %v2718
    %v2722 = vadd.f32 %v2682, %v2720
    %s2723 = sld [smem:[#allocation9 + $0x76]]
    %v2724 = vstv %s2723
    %v2725 = vmul.f32 %v2724, %v2373
    %2727 = vrot.lane.b32.xlu0 %v2725, 95
    %v2728 = vpop.permute.xlu0 %2727
    %v2729 = vrot.slane %v2728, 6
    %v2730 = vsel %vm1223, %v2729, %v2728
    %v2732 = vadd.f32 %v2692, %v2730
    %s2733 = sld [smem:[#allocation9 + $0x77]]
    %v2734 = vstv %s2733
    %v2735 = vmul.f32 %v2734, %v2373
    %2737 = vrot.lane.b32.xlu0 %v2735, 95
    %v2738 = vpop.permute.xlu0 %2737
    %v2739 = vrot.slane %v2738, 6
    %v2740 = vsel %vm1223, %v2739, %v2738
    %v2742 = vadd.f32 %v2702, %v2740
    %s2743 = sld [smem:[#allocation9 + $0x78]]
    %v2744 = vstv %s2743
    %v2745 = vmul.f32 %v2744, %v2415
    %2747 = vrot.lane.b32.xlu0 %v2745, 95
    %v2748 = vpop.permute.xlu0 %2747
    %v2749 = vrot.slane %v2748, 6
    %v2750 = vsel %vm1223, %v2749, %v2748
    %v2752 = vadd.f32 %v2712, %v2750
    %s2753 = sld [smem:[#allocation9 + $0x79]]
    %v2754 = vstv %s2753
    %v2755 = vmul.f32 %v2754, %v2415
    %2757 = vrot.lane.b32.xlu0 %v2755, 95
    %v2758 = vpop.permute.xlu0 %2757
    %v2759 = vrot.slane %v2758, 6
    %v2760 = vsel %vm1223, %v2759, %v2758
    %v2762 = vadd.f32 %v2722, %v2760
    %s2763 = sld [smem:[#allocation9 + $0x7a]]
    %v2764 = vstv %s2763
    %v2765 = vmul.f32 %v2764, %v2415
    %2767 = vrot.lane.b32.xlu0 %v2765, 95
    %v2768 = vpop.permute.xlu0 %2767
    %v2769 = vrot.slane %v2768, 6
    %v2770 = vsel %vm1223, %v2769, %v2768
    %v2772 = vadd.f32 %v2732, %v2770
    %s2773 = sld [smem:[#allocation9 + $0x7b]]
    %v2774 = vstv %s2773
    %v2775 = vmul.f32 %v2774, %v2415
    %2777 = vrot.lane.b32.xlu0 %v2775, 95
    %v2778 = vpop.permute.xlu0 %2777
    %v2779 = vrot.slane %v2778, 6
    %v2780 = vsel %vm1223, %v2779, %v2778
    %v2782 = vadd.f32 %v2742, %v2780
    %s2783 = sld [smem:[#allocation9 + $0x7c]]
    %v2784 = vstv %s2783
    %v2785 = vmul.f32 %v2784, %v2457
    %2787 = vrot.lane.b32.xlu0 %v2785, 95
    %v2788 = vpop.permute.xlu0 %2787
    %v2789 = vrot.slane %v2788, 6
    %v2790 = vsel %vm1223, %v2789, %v2788
    %v2792 = vadd.f32 %v2752, %v2790
    %s2793 = sld [smem:[#allocation9 + $0x7d]]
    %v2794 = vstv %s2793
    %v2795 = vmul.f32 %v2794, %v2457
    %2797 = vrot.lane.b32.xlu0 %v2795, 95
    %v2798 = vpop.permute.xlu0 %2797
    %v2799 = vrot.slane %v2798, 6
    %v2800 = vsel %vm1223, %v2799, %v2798
    %v2802 = vadd.f32 %v2762, %v2800
    %s2803 = sld [smem:[#allocation9 + $0x7e]]
    %v2804 = vstv %s2803
    %v2805 = vmul.f32 %v2804, %v2457
    %2807 = vrot.lane.b32.xlu0 %v2805, 95
    %v2808 = vpop.permute.xlu0 %2807
    %v2809 = vrot.slane %v2808, 6
    %v2810 = vsel %vm1223, %v2809, %v2808
    %v2812 = vadd.f32 %v2772, %v2810
    %s2813 = sld [smem:[#allocation9 + $0x7f]]
    %v2814 = vstv %s2813
    %v2815 = vmul.f32 %v2814, %v2457
    %2817 = vrot.lane.b32.xlu0 %v2815, 95
    %v2818 = vpop.permute.xlu0 %2817
    %v2819 = vrot.slane %v2818, 6
    %v2820 = vsel %vm1223, %v2819, %v2818
    %v2822 = vadd.f32 %v2782, %v2820
    %v2823 = vmul.f32 %v2331, %v1381
    %s2824 = sld [smem:[#allocation9 + $0x80]]
    %v2825 = vstv %s2824
    %v2826 = vmul.f32 %v2825, %v2823
    %2828 = vrot.lane.b32.xlu0 %v2826, 94
    %v2829 = vpop.permute.xlu0 %2828
    %v2830 = vrot.slane %v2829, 6
    %v2831 = vsel %vm1391, %v2830, %v2829
    %v2833 = vadd.f32 %v2792, %v2831
    %s2834 = sld [smem:[#allocation9 + $0x81]]
    %v2835 = vstv %s2834
    %v2836 = vmul.f32 %v2835, %v2823
    %2838 = vrot.lane.b32.xlu0 %v2836, 94
    %v2839 = vpop.permute.xlu0 %2838
    %v2840 = vrot.slane %v2839, 6
    %v2841 = vsel %vm1391, %v2840, %v2839
    %v2843 = vadd.f32 %v2802, %v2841
    %s2844 = sld [smem:[#allocation9 + $0x82]]
    %v2845 = vstv %s2844
    %v2846 = vmul.f32 %v2845, %v2823
    %2848 = vrot.lane.b32.xlu0 %v2846, 94
    %v2849 = vpop.permute.xlu0 %2848
    %v2850 = vrot.slane %v2849, 6
    %v2851 = vsel %vm1391, %v2850, %v2849
    %v2853 = vadd.f32 %v2812, %v2851
    %s2854 = sld [smem:[#allocation9 + $0x83]]
    %v2855 = vstv %s2854
    %v2856 = vmul.f32 %v2855, %v2823
    %2858 = vrot.lane.b32.xlu0 %v2856, 94
    %v2859 = vpop.permute.xlu0 %2858
    %v2860 = vrot.slane %v2859, 6
    %v2861 = vsel %vm1391, %v2860, %v2859
    %v2863 = vadd.f32 %v2822, %v2861
    %v2864 = vmul.f32 %v2373, %v1381
    %s2865 = sld [smem:[#allocation9 + $0x84]]
    %v2866 = vstv %s2865
    %v2867 = vmul.f32 %v2866, %v2864
    %2869 = vrot.lane.b32.xlu0 %v2867, 94
    %v2870 = vpop.permute.xlu0 %2869
    %v2871 = vrot.slane %v2870, 6
    %v2872 = vsel %vm1391, %v2871, %v2870
    %v2874 = vadd.f32 %v2833, %v2872
    %s2875 = sld [smem:[#allocation9 + $0x85]]
    %v2876 = vstv %s2875
    %v2877 = vmul.f32 %v2876, %v2864
    %2879 = vrot.lane.b32.xlu0 %v2877, 94
    %v2880 = vpop.permute.xlu0 %2879
    %v2881 = vrot.slane %v2880, 6
    %v2882 = vsel %vm1391, %v2881, %v2880
    %v2884 = vadd.f32 %v2843, %v2882
    %s2885 = sld [smem:[#allocation9 + $0x86]]
    %v2886 = vstv %s2885
    %v2887 = vmul.f32 %v2886, %v2864
    %2889 = vrot.lane.b32.xlu0 %v2887, 94
    %v2890 = vpop.permute.xlu0 %2889
    %v2891 = vrot.slane %v2890, 6
    %v2892 = vsel %vm1391, %v2891, %v2890
    %v2894 = vadd.f32 %v2853, %v2892
    %s2895 = sld [smem:[#allocation9 + $0x87]]
    %v2896 = vstv %s2895
    %v2897 = vmul.f32 %v2896, %v2864
    %2899 = vrot.lane.b32.xlu0 %v2897, 94
    %v2900 = vpop.permute.xlu0 %2899
    %v2901 = vrot.slane %v2900, 6
    %v2902 = vsel %vm1391, %v2901, %v2900
    %v2904 = vadd.f32 %v2863, %v2902
    %v2905 = vmul.f32 %v2415, %v1381
    %s2906 = sld [smem:[#allocation9 + $0x88]]
    %v2907 = vstv %s2906
    %v2908 = vmul.f32 %v2907, %v2905
    %2910 = vrot.lane.b32.xlu0 %v2908, 94
    %v2911 = vpop.permute.xlu0 %2910
    %v2912 = vrot.slane %v2911, 6
    %v2913 = vsel %vm1391, %v2912, %v2911
    %v2915 = vadd.f32 %v2874, %v2913
    %s2916 = sld [smem:[#allocation9 + $0x89]]
    %v2917 = vstv %s2916
    %v2918 = vmul.f32 %v2917, %v2905
    %2920 = vrot.lane.b32.xlu0 %v2918, 94
    %v2921 = vpop.permute.xlu0 %2920
    %v2922 = vrot.slane %v2921, 6
    %v2923 = vsel %vm1391, %v2922, %v2921
    %v2925 = vadd.f32 %v2884, %v2923
    %s2926 = sld [smem:[#allocation9 + $0x8a]]
    %v2927 = vstv %s2926
    %v2928 = vmul.f32 %v2927, %v2905
    %2930 = vrot.lane.b32.xlu0 %v2928, 94
    %v2931 = vpop.permute.xlu0 %2930
    %v2932 = vrot.slane %v2931, 6
    %v2933 = vsel %vm1391, %v2932, %v2931
    %v2935 = vadd.f32 %v2894, %v2933
    %s2936 = sld [smem:[#allocation9 + $0x8b]]
    %v2937 = vstv %s2936
    %v2938 = vmul.f32 %v2937, %v2905
    %2940 = vrot.lane.b32.xlu0 %v2938, 94
    %v2941 = vpop.permute.xlu0 %2940
    %v2942 = vrot.slane %v2941, 6
    %v2943 = vsel %vm1391, %v2942, %v2941
    %v2945 = vadd.f32 %v2904, %v2943
    %v2946 = vmul.f32 %v2457, %v1381
    %s2947 = sld [smem:[#allocation9 + $0x8c]]
    %v2948 = vstv %s2947
    %v2949 = vmul.f32 %v2948, %v2946
    %2951 = vrot.lane.b32.xlu0 %v2949, 94
    %v2952 = vpop.permute.xlu0 %2951
    %v2953 = vrot.slane %v2952, 6
    %v2954 = vsel %vm1391, %v2953, %v2952
    %v2956 = vadd.f32 %v2915, %v2954
    %s2957 = sld [smem:[#allocation9 + $0x8d]]
    %v2958 = vstv %s2957
    %v2959 = vmul.f32 %v2958, %v2946
    %2961 = vrot.lane.b32.xlu0 %v2959, 94
    %v2962 = vpop.permute.xlu0 %2961
    %v2963 = vrot.slane %v2962, 6
    %v2964 = vsel %vm1391, %v2963, %v2962
    %v2966 = vadd.f32 %v2925, %v2964
    %s2967 = sld [smem:[#allocation9 + $0x8e]]
    %v2968 = vstv %s2967
    %v2969 = vmul.f32 %v2968, %v2946
    %2971 = vrot.lane.b32.xlu0 %v2969, 94
    %v2972 = vpop.permute.xlu0 %2971
    %v2973 = vrot.slane %v2972, 6
    %v2974 = vsel %vm1391, %v2973, %v2972
    %v2976 = vadd.f32 %v2935, %v2974
    %s2977 = sld [smem:[#allocation9 + $0x8f]]
    %v2978 = vstv %s2977
    %v2979 = vmul.f32 %v2978, %v2946
    %2981 = vrot.lane.b32.xlu0 %v2979, 94
    %v2982 = vpop.permute.xlu0 %2981
    %v2983 = vrot.slane %v2982, 6
    %v2984 = vsel %vm1391, %v2983, %v2982
    %v2986 = vadd.f32 %v2945, %v2984
    %v2987 = vld [vmem:[#allocation2 + $0x2] sm:$0xf]
    %s2988 = sld [smem:[#allocation11]]
    %v2989 = vstv %s2988
    %v2990 = vmul.f32 %v2956, %v2989
    %s2991 = sld [smem:[#allocation12]]
    %v2992 = vstv %s2991
    %v2993 = vadd.f32 %v2990, %v2992
    %2995 = vrot.lane.b32.xlu0 %v2987, 111
    %v2996 = vpop.permute.xlu0 %2995
    %v2997 = vrot.slane %v2996, 6
    %v2998 = vsel %vm126, %v2997, %v2996
    %v3000 = vadd.f32 %v2993, %v2998
    %v3001 = vmax.f32 %v3000, 0.0
    %3003 = vrot.lane.b32.xlu0 %v3001, 17
    %v3004 = vpop.permute.xlu0 %3003
    %v3005 = vrot.slane %v3004, 2
    %v3006 = vsel %vm1380, %v3004, %v3005
    %3008 = vst [vmem:[%s9] sm:$0xf] %v3006
    %v3009 = vld [vmem:[%s146 + $0x2] sm:$0xf]
    %s3010 = sld [smem:[#allocation11 + $0x1]]
    %v3011 = vstv %s3010
    %v3012 = vmul.f32 %v2966, %v3011
    %s3013 = sld [smem:[#allocation12 + $0x1]]
    %v3014 = vstv %s3013
    %v3015 = vadd.f32 %v3012, %v3014
    %3017 = vrot.lane.b32.xlu0 %v3009, 111
    %v3018 = vpop.permute.xlu0 %3017
    %v3019 = vrot.slane %v3018, 6
    %v3020 = vsel %vm126, %v3019, %v3018
    %v3022 = vadd.f32 %v3015, %v3020
    %v3023 = vmax.f32 %v3022, 0.0
    %3025 = vrot.lane.b32.xlu0 %v3023, 17
    %v3026 = vpop.permute.xlu0 %3025
    %v3027 = vrot.slane %v3026, 2
    %v3028 = vsel %vm1380, %v3026, %v3027
    %s3030 = scalar_lea.vmem %s9, 4
    %3031 = vst [vmem:[%s3030] sm:$0xf] %v3028
    %v3032 = vld [vmem:[%s165 + $0x2] sm:$0xf]
    %s3033 = sld [smem:[#allocation11 + $0x2]]
    %v3034 = vstv %s3033
    %v3035 = vmul.f32 %v2976, %v3034
    %s3036 = sld [smem:[#allocation12 + $0x2]]
    %v3037 = vstv %s3036
    %v3038 = vadd.f32 %v3035, %v3037
    %3040 = vrot.lane.b32.xlu0 %v3032, 111
    %v3041 = vpop.permute.xlu0 %3040
    %v3042 = vrot.slane %v3041, 6
    %v3043 = vsel %vm126, %v3042, %v3041
    %v3045 = vadd.f32 %v3038, %v3043
    %v3046 = vmax.f32 %v3045, 0.0
    %3048 = vrot.lane.b32.xlu0 %v3046, 17
    %v3049 = vpop.permute.xlu0 %3048
    %v3050 = vrot.slane %v3049, 2
    %v3051 = vsel %vm1380, %v3049, %v3050
    %s3053 = scalar_lea.vmem %s9, 8
    %3054 = vst [vmem:[%s3053] sm:$0xf] %v3051
    %v3055 = vld [vmem:[%s184 + $0x2] sm:$0xf]
    %s3056 = sld [smem:[#allocation11 + $0x3]]
    %v3057 = vstv %s3056
    %v3058 = vmul.f32 %v2986, %v3057
    %s3059 = sld [smem:[#allocation12 + $0x3]]
    %v3060 = vstv %s3059
    %v3061 = vadd.f32 %v3058, %v3060
    %3063 = vrot.lane.b32.xlu0 %v3055, 111
    %v3064 = vpop.permute.xlu0 %3063
    %v3065 = vrot.slane %v3064, 6
    %v3066 = vsel %vm126, %v3065, %v3064
    %v3068 = vadd.f32 %v3061, %v3066
    %v3069 = vmax.f32 %v3068, 0.0
    %3071 = vrot.lane.b32.xlu0 %v3069, 17
    %v3072 = vpop.permute.xlu0 %3071
    %v3073 = vrot.slane %v3072, 2
    %v3074 = vsel %vm1380, %v3072, %v3073
    %s3076 = scalar_lea.vmem %s9, 12
    %3077 = vst [vmem:[%s3076] sm:$0xf] %v3074
    // Predicated region
    $region62: #{basic_block_mtl_forward.1} parent=1 // pred_check
      _
    $region63: #{basic_block_mtl_forward.1} parent=1 // pred_check_branch
      %3079 = sbr.rel (0) target = $region65
    $region64: #{basic_block_mtl_forward.1} parent=1 // pred_region
      _
    $region65: #{basic_block_mtl_forward.1} parent=1 // pred_fallthru
      _
    // Predicated region
    $region66: #{basic_block_mtl_forward.1} parent=1 // pred_check
      _
    $region67: #{basic_block_mtl_forward.1} parent=1 // pred_check_branch
      %3081 = sbr.rel (0) target = $region69
    $region68: #{basic_block_mtl_forward.1} parent=1 // pred_region
      _
    $region69: #{basic_block_mtl_forward.1} parent=1 // pred_fallthru
      _
    %3082 = vsyncpa [#allocation5], 1
    %3083 = vsyncpa [#allocation7], 1
    %3084 = vsyncpa [#allocation10], 1
    %3085 = vsyncpa [#allocation13], 1

</llo_original>
